<compile_context>
chip_gen: v7x
topology: tpu7x:2x2x1
jax: 0.10.0
libtpu: 0.0.40
codegen_flags: <defaults>
</compile_context>

<pallas_src>
import functools

import jax
import jax.numpy as jnp
from jax.experimental import pallas as pl
from jax.experimental.pallas import tpu as pltpu


# ----------------------------------------------------------------------------
# tiling / VMEM helpers
# ----------------------------------------------------------------------------

def _row_tile(m, target):
    """Largest point-row tile <= target.  Whole array (single grid step) when it fits;
    otherwise a multiple of 128 (lane/sublane aligned) that divides m."""
    if m <= target:
        return m
    t = (target // 128) * 128
    while t >= 128:
        if m % t == 0:
            return t
        t -= 128
    # TODO(synk): pad M to a multiple of 128 (+ remainder mask) instead of one full block
    #             for large, oddly-sized point clouds.
    return m


def _vmem_limit():
    """~75% of physical VMEM: 48 MB on v7x (64 MiB part), 96 MB on v5e/v6e (128 MiB)."""
    try:
        cap = pltpu.get_tpu_info().vmem_capacity_bytes
    except Exception:
        cap = 64 * 1024 * 1024
    return int(min(cap * 3 // 4, 100 * 1024 * 1024))


# ----------------------------------------------------------------------------
# Pallas kernels
# ----------------------------------------------------------------------------

def _kpconv_fused_kernel(rel_ref, feat_ref, kpt_ref, wt_ref, b_ref, o_ref, fp_ref,
                         *, inv_extent, num_kp, relu, mul_dtype):
    """KPConv + bias (BatchNormBlock(use_bn=False)) + LeakyReLU(0.1) on one point tile.

    rel  : [3, K, TM]      relative neighbor coords (points on lanes)
    feat : [K, Cin, TM]    gathered neighbor features, bf16, shadow rows are zero
    kpt  : [Kp, 3]         kernel point positions (SMEM scalars)
    wt   : [Cout, Kp*Cin]  pre-transposed bf16 weights (one fused MXU matmul)
    b    : [Cout, 1]       bias
    o    : [Cout, TM]      lane-dense output block (glue transposes back to [TM, Cout])
    fp   : [Kp*Cin, TM]    f32 VMEM scratch with the stacked weighted sums
    """
    rx = rel_ref[0]                                    # [K, TM], lanes = points (dense)
    ry = rel_ref[1]
    rz = rel_ref[2]
    sq_r = rx * rx + ry * ry + rz * rz                 # |r|^2, hoisted out of the p-loop
    cin = feat_ref.shape[1]

    for p in range(num_kp):                            # static unroll over kernel points
        kx = kpt_ref[p, 0]
        ky = kpt_ref[p, 1]
        kz = kpt_ref[p, 2]
        d2 = sq_r - 2.0 * (rx * kx + ry * ky + rz * kz) + (kx * kx + ky * ky + kz * kz)
        # linear influence: max(0, 1 - dist / KP_extent); clamp d2 >= 0 (fp rounding).
        infl = jnp.maximum(0.0, 1.0 - jnp.sqrt(jnp.maximum(d2, 0.0)) * inv_extent)
        # bf16 multiply (set mul_dtype=f32 on v5e), f32 accumulation over the K neighbors;
        # full-lane sublane-block store into the fp scratch (no lane-slice vst.msk).
        prod = infl.astype(mul_dtype)[:, None, :] * feat_ref[...].astype(mul_dtype)
        fp_ref[p * cin:(p + 1) * cin, :] = jnp.sum(prod, axis=0, dtype=jnp.float32)

    # single [Cout, Kp*Cin] x [Kp*Cin, TM] matmul (bf16 operands, f32 accumulate)
    y = jnp.dot(wt_ref[...], fp_ref[...].astype(jnp.bfloat16),
                preferred_element_type=jnp.float32) + b_ref[...]
    if relu:
        y = jnp.where(y > 0, y, 0.1 * y)
    o_ref[...] = y                                     # lane-dense store


def _unary_kernel(x_ref, w_ref, b_ref, o_ref, *, relu):
    """Linear (bf16 MXU) + bias (BatchNormBlock use_bn=False) + optional LeakyReLU(0.1)."""
    y = jnp.dot(x_ref[...].astype(jnp.bfloat16), w_ref[...],
                preferred_element_type=jnp.float32) + b_ref[...]
    if relu:
        y = jnp.where(y > 0, y, 0.1 * y)
    o_ref[...] = y


def _resnet_tail_kernel(y_ref, w2_ref, b2_ref, sx_ref, wsc_ref, bsc_ref, o_ref, *, pool):
    """Fused resnet tail with shortcut unary:
       (optional max-pool over K) -> shortcut Linear+bias -> unary2 Linear+bias
       -> residual add -> LeakyReLU(0.1).  One HBM round trip instead of three."""
    sx = sx_ref[...]
    if pool:
        sx = jnp.max(sx, axis=1)                       # [TM, K, C] -> [TM, C]
    sc = jnp.dot(sx.astype(jnp.bfloat16), wsc_ref[...],
                 preferred_element_type=jnp.float32) + bsc_ref[...]
    y = jnp.dot(y_ref[...].astype(jnp.bfloat16), w2_ref[...],
                preferred_element_type=jnp.float32) + b2_ref[...] + sc
    o_ref[...] = jnp.where(y > 0, y, 0.1 * y)


def _resnet_tail_nosc_kernel(y_ref, w2_ref, b2_ref, sx_ref, o_ref, *, pool):
    """Fused resnet tail with identity shortcut (optionally max-pooled)."""
    sc = sx_ref[...]
    if pool:
        sc = jnp.max(sc, axis=1)                       # [TM, K, C] -> [TM, C]
    y = jnp.dot(y_ref[...].astype(jnp.bfloat16), w2_ref[...],
                preferred_element_type=jnp.float32) + b2_ref[...] + sc
    o_ref[...] = jnp.where(y > 0, y, 0.1 * y)


# ----------------------------------------------------------------------------
# Pallas wrappers (grid over point-row tiles)
# ----------------------------------------------------------------------------

def kpconv_apply(params, q_pts, s_pts, neighb_inds, x, bias, relu=True,
                 mul_dtype=jnp.bfloat16):
    """KPConv with fused bias + LeakyReLU epilogue.  Use mul_dtype=jnp.float32 on v5e."""
    cin = x.shape[1]
    nk = params['kpts'].shape[0]
    cout, kdim = params['w_t'].shape                   # pre-transposed [Cout, Kp*Cin] bf16
    assert kdim == nk * cin

    # JAX glue: shadow point (index == N_s) sits at 1e6 (zero influence) with a zero
    # feature row, as in KPConv.  Feats gathered in bf16 to halve the HBM stream.
    # Both gathered slabs are laid out with the point axis LAST (lane-dense in-kernel).
    s_pad = jnp.concatenate([s_pts, jnp.full((1, 3), 1e6, s_pts.dtype)], axis=0)
    x_pad = jnp.concatenate([x, jnp.zeros((1, cin), x.dtype)],
                            axis=0).astype(jnp.bfloat16)
    rel = s_pad[neighb_inds] - q_pts[:, None, :]                      # [M, K, 3]
    rel_t = jnp.transpose(rel, (2, 1, 0)).astype(jnp.float32)         # [3, K, M]
    feats_t = jnp.transpose(x_pad[neighb_inds], (1, 2, 0))            # [K, Cin, M] bf16

    M, K = neighb_inds.shape
    tm = _row_tile(M, 256)            # <=256: fits v7x's 64 MiB VMEM at deep-layer widths
    kern = functools.partial(_kpconv_fused_kernel,
                             inv_extent=float(1.0 / params['extent']),
                             num_kp=nk, relu=relu, mul_dtype=mul_dtype)
    out_t = pl.pallas_call(
        kern,
        out_shape=jax.ShapeDtypeStruct((cout, M), jnp.float32),
        grid=(M // tm,),
        in_specs=[
            pl.BlockSpec((3, K, tm), lambda i: (0, 0, i)),
            pl.BlockSpec((K, cin, tm), lambda i: (0, 0, i)),
            pl.BlockSpec(memory_space=pltpu.MemorySpace.SMEM),        # kernel points
            pl.BlockSpec((cout, kdim), lambda i: (0, 0)),
            pl.BlockSpec((cout, 1), lambda i: (0, 0)),
        ],
        out_specs=pl.BlockSpec((cout, tm), lambda i: (0, i)),
        # f32 scratch keeps sub-8 channel offsets (Cin=4) robust; bf16 scratch / split-K
        # over an 'arbitrary' grid axis would be used for very deep layers on v7x.
        scratch_shapes=[pltpu.VMEM((kdim, tm), jnp.float32)],
        compiler_params=pltpu.CompilerParams(
            dimension_semantics=("parallel",),
            vmem_limit_bytes=_vmem_limit()),
    )(rel_t, feats_t, params['kpts'], params['w_t'], bias.reshape(cout, 1))
    # tiny XLA layout op back to the network-wide [N, C] convention.
    return out_t.T


def unary_apply(x, w, b, relu):
    M, cin = x.shape
    cout = w.shape[1]
    tm = _row_tile(M, 512)
    kern = functools.partial(_unary_kernel, relu=relu)
    return pl.pallas_call(
        kern,
        out_shape=jax.ShapeDtypeStruct((M, cout), jnp.float32),
        grid=(M // tm,),
        in_specs=[pl.BlockSpec((tm, cin), lambda i: (i, 0)),
                  pl.BlockSpec((cin, cout), lambda i: (0, 0)),
                  pl.BlockSpec((1, cout), lambda i: (0, 0))],
        out_specs=pl.BlockSpec((tm, cout), lambda i: (i, 0)),
        compiler_params=pltpu.CompilerParams(dimension_semantics=("parallel",)),
    )(x, w, b.reshape(1, cout))


def resnet_tail_apply(y, w2, b2, sc_in, wsc=None, bsc=None, pool=False):
    """Fused unary2 + (optional max-pool) + (optional shortcut unary) + residual + LeakyReLU."""
    M, cmid = y.shape
    cout = w2.shape[1]
    tm = _row_tile(M, 512)
    y_spec = pl.BlockSpec((tm, cmid), lambda i: (i, 0))
    w2_spec = pl.BlockSpec((cmid, cout), lambda i: (0, 0))
    b_spec = pl.BlockSpec((1, cout), lambda i: (0, 0))
    if pool:
        K, cs = sc_in.shape[1], sc_in.shape[2]
        sc_spec = pl.BlockSpec((tm, K, cs), lambda i: (i, 0, 0))
    else:
        cs = sc_in.shape[1]
        sc_spec = pl.BlockSpec((tm, cs), lambda i: (i, 0))
    out_spec = pl.BlockSpec((tm, cout), lambda i: (i, 0))
    cp = pltpu.CompilerParams(dimension_semantics=("parallel",))

    if wsc is not None:
        kern = functools.partial(_resnet_tail_kernel, pool=pool)
        return pl.pallas_call(
            kern,
            out_shape=jax.ShapeDtypeStruct((M, cout), jnp.float32),
            grid=(M // tm,),
            in_specs=[y_spec, w2_spec, b_spec, sc_spec,
                      pl.BlockSpec((cs, cout), lambda i: (0, 0)), b_spec],
            out_specs=out_spec,
            compiler_params=cp,
        )(y, w2, b2.reshape(1, cout), sc_in, wsc, bsc.reshape(1, cout))

    kern = functools.partial(_resnet_tail_nosc_kernel, pool=pool)
    return pl.pallas_call(
        kern,
        out_shape=jax.ShapeDtypeStruct((M, cout), jnp.float32),
        grid=(M // tm,),
        in_specs=[y_spec, w2_spec, b_spec, sc_spec],
        out_specs=out_spec,
        compiler_params=cp,
    )(y, w2, b2.reshape(1, cout), sc_in)


# ----------------------------------------------------------------------------
# KPFCN construction (mirrors the PyTorch __init__) and encoder forward
# ----------------------------------------------------------------------------

def build_kpfcn(config, key):
    keys = iter(jax.random.split(key, 128))
    nk = config['num_kernel_points']

    def lin(cin, cout):
        return {'w': (0.1 * jax.random.normal(next(keys), (cin, cout), jnp.float32)
                      ).astype(jnp.bfloat16),
                'b': 0.05 * jax.random.normal(next(keys), (cout,), jnp.float32)}

    def kpc(cin, cout, radius):
        ext = radius * config['KP_extent'] / config['conv_radius']
        w = 0.1 * jax.random.normal(next(keys), (nk, cin, cout), jnp.float32)
        return {'kpts': jax.random.uniform(next(keys), (nk, 3), jnp.float32, -ext, ext),
                # reshape + transpose ONCE to [Cout, Kp*Cin] bf16 (MXU lhs operand).
                'w_t': jnp.transpose(w.reshape(nk * cin, cout)).astype(jnp.bfloat16),
                'extent': ext}

    def block_decider(block, radius, in_dim, out_dim, layer):
        if block == 'unary':
            return {'type': 'unary', 'lin': lin(in_dim, out_dim), 'relu': True}
        if block == 'last_unary':
            w = (0.1 * jax.random.normal(
                next(keys), (in_dim, config['final_feats_dim']), jnp.float32)
                 ).astype(jnp.bfloat16)
            return {'type': 'unary',
                    'lin': {'w': w,
                            'b': jnp.zeros((config['final_feats_dim'],), jnp.float32)},
                    'relu': False}
        if block.startswith('simple'):
            return {'type': 'simple', 'layer': layer, 'strided': 'strided' in block,
                    'kpconv': kpc(in_dim, out_dim // 2, radius),
                    'bn_b': 0.05 * jax.random.normal(next(keys), (out_dim // 2,),
                                                     jnp.float32)}
        if block.startswith('resnetb'):
            mid = out_dim // 4
            return {'type': 'resnetb', 'layer': layer, 'strided': 'strided' in block,
                    'unary1': lin(in_dim, mid) if in_dim != mid else None,
                    'kpconv': kpc(mid, mid, radius),
                    'bn_b': 0.05 * jax.random.normal(next(keys), (mid,), jnp.float32),
                    'unary2': lin(mid, out_dim),
                    'unary_sc': lin(in_dim, out_dim) if in_dim != out_dim else None}
        raise ValueError(f'unsupported block: {block}')

    layer = 0
    r = config['first_subsampling_dl'] * config['conv_radius']
    in_dim = config['in_feats_dim']
    out_dim = config['first_feats_dim']
    encoder_blocks = []
    for block in config['architectures']:
        if 'equivariant' in block and out_dim % 3 != 0:
            raise ValueError('Equivariant block but features dimension is not a factor of 3')
        if 'upsample' in block:
            break
        encoder_blocks.append(block_decider(block, r, in_dim, out_dim, layer))
        in_dim = out_dim // 2 if 'simple' in block else out_dim
        if 'pool' in block or 'strided' in block:
            layer += 1
            r *= 2
            out_dim *= 2
    return {'encoder_blocks': encoder_blocks}


def run_block(blk, x, batch):
    t = blk['type']
    if t == 'unary':
        return unary_apply(x, blk['lin']['w'], blk['lin']['b'], relu=blk['relu'])

    l = blk['layer']
    if blk['strided']:
        q_pts, s_pts = batch['points'][l + 1], batch['points'][l]
        inds = batch['pools'][l]
    else:
        q_pts = s_pts = batch['points'][l]
        inds = batch['neighbors'][l]

    if t == 'simple':
        # KPConv with fused bias + LeakyReLU epilogue.
        return kpconv_apply(blk['kpconv'], q_pts, s_pts, inds, x, blk['bn_b'], relu=True)

    if t == 'resnetb':
        y = x if blk['unary1'] is None else unary_apply(
            x, blk['unary1']['w'], blk['unary1']['b'], relu=True)
        y = kpconv_apply(blk['kpconv'], q_pts, s_pts, inds, y, blk['bn_b'], relu=True)

        if blk['strided']:
            # shadow row of zeros so the max over K floors at 0 (KPConv max_pool semantics);
            # the pool itself is fused into the tail kernel below.
            c = x.shape[1]
            x_pad = jnp.concatenate([x, jnp.zeros((1, c), x.dtype)], axis=0)
            sc_in = x_pad[inds]                       # [M_out, K, C] glue gather
        else:
            sc_in = x

        if blk['unary_sc'] is not None:
            return resnet_tail_apply(y, blk['unary2']['w'], blk['unary2']['b'], sc_in,
                                     blk['unary_sc']['w'], blk['unary_sc']['b'],
                                     pool=blk['strided'])
        return resnet_tail_apply(y, blk['unary2']['w'], blk['unary2']['b'], sc_in,
                                 pool=blk['strided'])

    raise ValueError(t)


def kpfcn_forward(model, batch):
    x = batch['embedding']
    for blk in model['encoder_blocks']:
        x = run_block(blk, x, batch)
    return x


# ----------------------------------------------------------------------------
# main
# ----------------------------------------------------------------------------

if __name__ == "__main__":
    config = dict(
        in_feats_dim=8,
        first_feats_dim=16,
        final_feats_dim=16,
        num_kernel_points=15,
        first_subsampling_dl=0.1,
        conv_radius=2.5,
        KP_extent=1.2,
        # encoder stops at the first 'upsample' block, as in the reference __init__
        architectures=['simple', 'resnetb', 'resnetb_strided', 'resnetb',
                       'nearest_upsample', 'last_unary'],
    )

    N0, N1, K = 128, 64, 16    # layer-0 points, layer-1 (subsampled) points, neighbors
    key = jax.random.PRNGKey(0)
    k_pts, k_nb0, k_nb1, k_pool, k_emb, k_param = jax.random.split(key, 6)

    pts0 = jax.random.uniform(k_pts, (N0, 3), jnp.float32, 0.0, 0.3)
    pts1 = pts0[:N1]
    neighbors0 = jax.random.randint(k_nb0, (N0, K), 0, N0 + 1)   # == N0 -> shadow point
    neighbors1 = jax.random.randint(k_nb1, (N1, K), 0, N1 + 1)
    pools0 = jax.random.randint(k_pool, (N1, K), 0, N0 + 1)
    embedding = jax.random.normal(k_emb, (N0, config['in_feats_dim']), jnp.float32)

    batch = {
        'embedding': embedding,
        'points': [pts0, pts1],
        'neighbors': [neighbors0, neighbors1],
        'pools': [pools0],
    }

    model = build_kpfcn(config, k_param)
    out = jax.block_until_ready(kpfcn_forward(model, batch))

    # encoder output: layer-1 points, channels == 2 * first_feats_dim after one stride
    assert out.shape == (N1, 2 * config['first_feats_dim']), out.shape
    assert bool(jnp.all(jnp.isfinite(out)))
    print("KERNEL_OK")
</pallas_src>

<mosaic_0001>
module attributes {stable_mosaic.version = 11 : i64} {
  func.func @_kpconv_fused_kernel(%arg0: i32, %arg1: memref<3x16x128xf32, #tpu.memory_space<vmem>>, %arg2: memref<16x8x128xbf16, #tpu.memory_space<vmem>>, %arg3: memref<15x3xf32, #tpu.memory_space<smem>>, %arg4: memref<8x120xbf16, #tpu.memory_space<vmem>>, %arg5: memref<8x1xf32, #tpu.memory_space<vmem>>, %arg6: memref<8x128xf32, #tpu.memory_space<vmem>>, %arg7: memref<120x128xf32, #tpu.memory_space<vmem>>) attributes {dimension_semantics = [#tpu.dimension_semantics<parallel>], iteration_bounds = array<i64: 1>, scalar_prefetch = 0 : i64, scratch_operands = 1 : i64, tpu.core_type = #tpu.core_type<tc>, window_params = [{transform_indices = @transform_0, window_bounds = array<i64: 3, 16, 128>}, {transform_indices = @transform_1, window_bounds = array<i64: 16, 8, 128>}, {transform_indices = @transform_2, window_bounds = array<i64: 15, 3>}, {pipeline_mode = #tpu.pipeline_mode<synchronous>, transform_indices = @transform_3, window_bounds = array<i64: 8, 120>}, {pipeline_mode = #tpu.pipeline_mode<synchronous>, transform_indices = @transform_4, window_bounds = array<i64: 8, 1>}, {transform_indices = @transform_5, window_bounds = array<i64: 8, 128>}]} {
    %c0 = arith.constant 0 : index
    %c0_0 = arith.constant 0 : index
    %c0_1 = arith.constant 0 : index
    %0 = vector.load %arg1[%c0, %c0_0, %c0_1] : memref<3x16x128xf32, #tpu.memory_space<vmem>>, vector<1x16x128xf32>
    %1 = vector.shape_cast %0 : vector<1x16x128xf32> to vector<16x128xf32>
    %c1 = arith.constant 1 : index
    %c0_2 = arith.constant 0 : index
    %c0_3 = arith.constant 0 : index
    %2 = vector.load %arg1[%c1, %c0_2, %c0_3] : memref<3x16x128xf32, #tpu.memory_space<vmem>>, vector<1x16x128xf32>
    %3 = vector.shape_cast %2 : vector<1x16x128xf32> to vector<16x128xf32>
    %c2 = arith.constant 2 : index
    %c0_4 = arith.constant 0 : index
    %c0_5 = arith.constant 0 : index
    %4 = vector.load %arg1[%c2, %c0_4, %c0_5] : memref<3x16x128xf32, #tpu.memory_space<vmem>>, vector<1x16x128xf32>
    %5 = vector.shape_cast %4 : vector<1x16x128xf32> to vector<16x128xf32>
    %6 = arith.mulf %1, %1 : vector<16x128xf32>
    %7 = arith.mulf %3, %3 : vector<16x128xf32>
    %8 = arith.addf %6, %7 : vector<16x128xf32>
    %9 = arith.mulf %5, %5 : vector<16x128xf32>
    %10 = arith.addf %8, %9 : vector<16x128xf32>
    %c0_6 = arith.constant 0 : index
    %c0_7 = arith.constant 0 : index
    %11 = memref.load %arg3[%c0_6, %c0_7] : memref<15x3xf32, #tpu.memory_space<smem>>
    %c0_8 = arith.constant 0 : index
    %c1_9 = arith.constant 1 : index
    %12 = memref.load %arg3[%c0_8, %c1_9] : memref<15x3xf32, #tpu.memory_space<smem>>
    %c0_10 = arith.constant 0 : index
    %c2_11 = arith.constant 2 : index
    %13 = memref.load %arg3[%c0_10, %c2_11] : memref<15x3xf32, #tpu.memory_space<smem>>
    %14 = vector.broadcast %11 : f32 to vector<16x128xf32>
    %15 = arith.mulf %1, %14 : vector<16x128xf32>
    %16 = vector.broadcast %12 : f32 to vector<16x128xf32>
    %17 = arith.mulf %3, %16 : vector<16x128xf32>
    %18 = arith.addf %15, %17 : vector<16x128xf32>
    %19 = vector.broadcast %13 : f32 to vector<16x128xf32>
    %20 = arith.mulf %5, %19 : vector<16x128xf32>
    %21 = arith.addf %18, %20 : vector<16x128xf32>
    %cst = arith.constant 2.000000e+00 : f32
    %22 = vector.broadcast %cst : f32 to vector<16x128xf32>
    %23 = arith.mulf %22, %21 : vector<16x128xf32>
    %24 = arith.subf %10, %23 : vector<16x128xf32>
    %25 = arith.mulf %11, %11 : f32
    %26 = arith.mulf %12, %12 : f32
    %27 = arith.addf %25, %26 : f32
    %28 = arith.mulf %13, %13 : f32
    %29 = arith.addf %27, %28 : f32
    %30 = vector.broadcast %29 : f32 to vector<16x128xf32>
    %31 = arith.addf %24, %30 : vector<16x128xf32>
    %cst_12 = arith.constant 0.000000e+00 : f32
    %32 = vector.broadcast %cst_12 : f32 to vector<16x128xf32>
    %33 = arith.maximumf %31, %32 : vector<16x128xf32>
    %34 = math.sqrt %33 : vector<16x128xf32>
    %cst_13 = arith.constant 8.33333301 : f32
    %35 = vector.broadcast %cst_13 : f32 to vector<16x128xf32>
    %36 = arith.mulf %34, %35 : vector<16x128xf32>
    %cst_14 = arith.constant 1.000000e+00 : f32
    %37 = vector.broadcast %cst_14 : f32 to vector<16x128xf32>
    %38 = arith.subf %37, %36 : vector<16x128xf32>
    %cst_15 = arith.constant 0.000000e+00 : f32
    %39 = vector.broadcast %cst_15 : f32 to vector<16x128xf32>
    %40 = arith.maximumf %39, %38 : vector<16x128xf32>
    %41 = arith.truncf %40 : vector<16x128xf32> to vector<16x128xbf16>
    %42 = vector.shape_cast %41 : vector<16x128xbf16> to vector<16x1x128xbf16>
    %c0_16 = arith.constant 0 : index
    %c0_17 = arith.constant 0 : index
    %c0_18 = arith.constant 0 : index
    %43 = vector.load %arg2[%c0_16, %c0_17, %c0_18] : memref<16x8x128xbf16, #tpu.memory_space<vmem>>, vector<16x8x128xbf16>
    %44 = vector.broadcast %42 : vector<16x1x128xbf16> to vector<16x8x128xbf16>
    %45 = arith.mulf %44, %43 : vector<16x8x128xbf16>
    %46 = arith.extf %45 : vector<16x8x128xbf16> to vector<16x8x128xf32>
    %cst_19 = arith.constant dense<0.000000e+00> : vector<8x128xf32>
    %47 = vector.multi_reduction <add>, %46, %cst_19 [0] : vector<16x8x128xf32> to vector<8x128xf32>
    %c0_20 = arith.constant 0 : index
    %c0_21 = arith.constant 0 : index
    %48 = vector.load %arg7[%c0_20, %c0_21] : memref<120x128xf32, #tpu.memory_space<vmem>>, vector<8x128xf32>
    tpu.vector_store %arg7[%c0_20, %c0_21], %47 {strides = array<i32>} : memref<120x128xf32, #tpu.memory_space<vmem>>, vector<8x128xf32>,
    %c1_22 = arith.constant 1 : index
    %c0_23 = arith.constant 0 : index
    %49 = memref.load %arg3[%c1_22, %c0_23] : memref<15x3xf32, #tpu.memory_space<smem>>
    %c1_24 = arith.constant 1 : index
    %c1_25 = arith.constant 1 : index
    %50 = memref.load %arg3[%c1_24, %c1_25] : memref<15x3xf32, #tpu.memory_space<smem>>
    %c1_26 = arith.constant 1 : index
    %c2_27 = arith.constant 2 : index
    %51 = memref.load %arg3[%c1_26, %c2_27] : memref<15x3xf32, #tpu.memory_space<smem>>
    %52 = vector.broadcast %49 : f32 to vector<16x128xf32>
    %53 = arith.mulf %1, %52 : vector<16x128xf32>
    %54 = vector.broadcast %50 : f32 to vector<16x128xf32>
    %55 = arith.mulf %3, %54 : vector<16x128xf32>
    %56 = arith.addf %53, %55 : vector<16x128xf32>
    %57 = vector.broadcast %51 : f32 to vector<16x128xf32>
    %58 = arith.mulf %5, %57 : vector<16x128xf32>
    %59 = arith.addf %56, %58 : vector<16x128xf32>
    %cst_28 = arith.constant 2.000000e+00 : f32
    %60 = vector.broadcast %cst_28 : f32 to vector<16x128xf32>
    %61 = arith.mulf %60, %59 : vector<16x128xf32>
    %62 = arith.subf %10, %61 : vector<16x128xf32>
    %63 = arith.mulf %49, %49 : f32
    %64 = arith.mulf %50, %50 : f32
    %65 = arith.addf %63, %64 : f32
    %66 = arith.mulf %51, %51 : f32
    %67 = arith.addf %65, %66 : f32
    %68 = vector.broadcast %67 : f32 to vector<16x128xf32>
    %69 = arith.addf %62, %68 : vector<16x128xf32>
    %cst_29 = arith.constant 0.000000e+00 : f32
    %70 = vector.broadcast %cst_29 : f32 to vector<16x128xf32>
    %71 = arith.maximumf %69, %70 : vector<16x128xf32>
    %72 = math.sqrt %71 : vector<16x128xf32>
    %cst_30 = arith.constant 8.33333301 : f32
    %73 = vector.broadcast %cst_30 : f32 to vector<16x128xf32>
    %74 = arith.mulf %72, %73 : vector<16x128xf32>
    %cst_31 = arith.constant 1.000000e+00 : f32
    %75 = vector.broadcast %cst_31 : f32 to vector<16x128xf32>
    %76 = arith.subf %75, %74 : vector<16x128xf32>
    %cst_32 = arith.constant 0.000000e+00 : f32
    %77 = vector.broadcast %cst_32 : f32 to vector<16x128xf32>
    %78 = arith.maximumf %77, %76 : vector<16x128xf32>
    %79 = arith.truncf %78 : vector<16x128xf32> to vector<16x128xbf16>
    %80 = vector.shape_cast %79 : vector<16x128xbf16> to vector<16x1x128xbf16>
    %c0_33 = arith.constant 0 : index
    %c0_34 = arith.constant 0 : index
    %c0_35 = arith.constant 0 : index
    %81 = vector.load %arg2[%c0_33, %c0_34, %c0_35] : memref<16x8x128xbf16, #tpu.memory_space<vmem>>, vector<16x8x128xbf16>
    %82 = vector.broadcast %80 : vector<16x1x128xbf16> to vector<16x8x128xbf16>
    %83 = arith.mulf %82, %81 : vector<16x8x128xbf16>
    %84 = arith.extf %83 : vector<16x8x128xbf16> to vector<16x8x128xf32>
    %cst_36 = arith.constant dense<0.000000e+00> : vector<8x128xf32>
    %85 = vector.multi_reduction <add>, %84, %cst_36 [0] : vector<16x8x128xf32> to vector<8x128xf32>
    %c8 = arith.constant 8 : index
    %c0_37 = arith.constant 0 : index
    %86 = vector.load %arg7[%c8, %c0_37] : memref<120x128xf32, #tpu.memory_space<vmem>>, vector<8x128xf32>
    tpu.vector_store %arg7[%c8, %c0_37], %85 {strides = array<i32>} : memref<120x128xf32, #tpu.memory_space<vmem>>, vector<8x128xf32>,
    %c2_38 = arith.constant 2 : index
    %c0_39 = arith.constant 0 : index
    %87 = memref.load %arg3[%c2_38, %c0_39] : memref<15x3xf32, #tpu.memory_space<smem>>
    %c2_40 = arith.constant 2 : index
    %c1_41 = arith.constant 1 : index
    %88 = memref.load %arg3[%c2_40, %c1_41] : memref<15x3xf32, #tpu.memory_space<smem>>
    %c2_42 = arith.constant 2 : index
    %c2_43 = arith.constant 2 : index
    %89 = memref.load %arg3[%c2_42, %c2_43] : memref<15x3xf32, #tpu.memory_space<smem>>
    %90 = vector.broadcast %87 : f32 to vector<16x128xf32>
    %91 = arith.mulf %1, %90 : vector<16x128xf32>
    %92 = vector.broadcast %88 : f32 to vector<16x128xf32>
    %93 = arith.mulf %3, %92 : vector<16x128xf32>
    %94 = arith.addf %91, %93 : vector<16x128xf32>
    %95 = vector.broadcast %89 : f32 to vector<16x128xf32>
    %96 = arith.mulf %5, %95 : vector<16x128xf32>
    %97 = arith.addf %94, %96 : vector<16x128xf32>
    %cst_44 = arith.constant 2.000000e+00 : f32
    %98 = vector.broadcast %cst_44 : f32 to vector<16x128xf32>
    %99 = arith.mulf %98, %97 : vector<16x128xf32>
    %100 = arith.subf %10, %99 : vector<16x128xf32>
    %101 = arith.mulf %87, %87 : f32
    %102 = arith.mulf %88, %88 : f32
    %103 = arith.addf %101, %102 : f32
    %104 = arith.mulf %89, %89 : f32
    %105 = arith.addf %103, %104 : f32
    %106 = vector.broadcast %105 : f32 to vector<16x128xf32>
    %107 = arith.addf %100, %106 : vector<16x128xf32>
    %cst_45 = arith.constant 0.000000e+00 : f32
    %108 = vector.broadcast %cst_45 : f32 to vector<16x128xf32>
    %109 = arith.maximumf %107, %108 : vector<16x128xf32>
    %110 = math.sqrt %109 : vector<16x128xf32>
    %cst_46 = arith.constant 8.33333301 : f32
    %111 = vector.broadcast %cst_46 : f32 to vector<16x128xf32>
    %112 = arith.mulf %110, %111 : vector<16x128xf32>
    %cst_47 = arith.constant 1.000000e+00 : f32
    %113 = vector.broadcast %cst_47 : f32 to vector<16x128xf32>
    %114 = arith.subf %113, %112 : vector<16x128xf32>
    %cst_48 = arith.constant 0.000000e+00 : f32
    %115 = vector.broadcast %cst_48 : f32 to vector<16x128xf32>
    %116 = arith.maximumf %115, %114 : vector<16x128xf32>
    %117 = arith.truncf %116 : vector<16x128xf32> to vector<16x128xbf16>
    %118 = vector.shape_cast %117 : vector<16x128xbf16> to vector<16x1x128xbf16>
    %c0_49 = arith.constant 0 : index
    %c0_50 = arith.constant 0 : index
    %c0_51 = arith.constant 0 : index
    %119 = vector.load %arg2[%c0_49, %c0_50, %c0_51] : memref<16x8x128xbf16, #tpu.memory_space<vmem>>, vector<16x8x128xbf16>
    %120 = vector.broadcast %118 : vector<16x1x128xbf16> to vector<16x8x128xbf16>
    %121 = arith.mulf %120, %119 : vector<16x8x128xbf16>
    %122 = arith.extf %121 : vector<16x8x128xbf16> to vector<16x8x128xf32>
    %cst_52 = arith.constant dense<0.000000e+00> : vector<8x128xf32>
    %123 = vector.multi_reduction <add>, %122, %cst_52 [0] : vector<16x8x128xf32> to vector<8x128xf32>
    %c16 = arith.constant 16 : index
    %c0_53 = arith.constant 0 : index
    %124 = vector.load %arg7[%c16, %c0_53] : memref<120x128xf32, #tpu.memory_space<vmem>>, vector<8x128xf32>
    tpu.vector_store %arg7[%c16, %c0_53], %123 {strides = array<i32>} : memref<120x128xf32, #tpu.memory_space<vmem>>, vector<8x128xf32>,
    %c3 = arith.constant 3 : index
    %c0_54 = arith.constant 0 : index
    %125 = memref.load %arg3[%c3, %c0_54] : memref<15x3xf32, #tpu.memory_space<smem>>
    %c3_55 = arith.constant 3 : index
    %c1_56 = arith.constant 1 : index
    %126 = memref.load %arg3[%c3_55, %c1_56] : memref<15x3xf32, #tpu.memory_space<smem>>
    %c3_57 = arith.constant 3 : index
    %c2_58 = arith.constant 2 : index
    %127 = memref.load %arg3[%c3_57, %c2_58] : memref<15x3xf32, #tpu.memory_space<smem>>
    %128 = vector.broadcast %125 : f32 to vector<16x128xf32>
    %129 = arith.mulf %1, %128 : vector<16x128xf32>
    %130 = vector.broadcast %126 : f32 to vector<16x128xf32>
    %131 = arith.mulf %3, %130 : vector<16x128xf32>
    %132 = arith.addf %129, %131 : vector<16x128xf32>
    %133 = vector.broadcast %127 : f32 to vector<16x128xf32>
    %134 = arith.mulf %5, %133 : vector<16x128xf32>
    %135 = arith.addf %132, %134 : vector<16x128xf32>
    %cst_59 = arith.constant 2.000000e+00 : f32
    %136 = vector.broadcast %cst_59 : f32 to vector<16x128xf32>
    %137 = arith.mulf %136, %135 : vector<16x128xf32>
    %138 = arith.subf %10, %137 : vector<16x128xf32>
    %139 = arith.mulf %125, %125 : f32
    %140 = arith.mulf %126, %126 : f32
    %141 = arith.addf %139, %140 : f32
    %142 = arith.mulf %127, %127 : f32
    %143 = arith.addf %141, %142 : f32
    %144 = vector.broadcast %143 : f32 to vector<16x128xf32>
    %145 = arith.addf %138, %144 : vector<16x128xf32>
    %cst_60 = arith.constant 0.000000e+00 : f32
    %146 = vector.broadcast %cst_60 : f32 to vector<16x128xf32>
    %147 = arith.maximumf %145, %146 : vector<16x128xf32>
    %148 = math.sqrt %147 : vector<16x128xf32>
    %cst_61 = arith.constant 8.33333301 : f32
    %149 = vector.broadcast %cst_61 : f32 to vector<16x128xf32>
    %150 = arith.mulf %148, %149 : vector<16x128xf32>
    %cst_62 = arith.constant 1.000000e+00 : f32
    %151 = vector.broadcast %cst_62 : f32 to vector<16x128xf32>
    %152 = arith.subf %151, %150 : vector<16x128xf32>
    %cst_63 = arith.constant 0.000000e+00 : f32
    %153 = vector.broadcast %cst_63 : f32 to vector<16x128xf32>
    %154 = arith.maximumf %153, %152 : vector<16x128xf32>
    %155 = arith.truncf %154 : vector<16x128xf32> to vector<16x128xbf16>
    %156 = vector.shape_cast %155 : vector<16x128xbf16> to vector<16x1x128xbf16>
    %c0_64 = arith.constant 0 : index
    %c0_65 = arith.constant 0 : index
    %c0_66 = arith.constant 0 : index
    %157 = vector.load %arg2[%c0_64, %c0_65, %c0_66] : memref<16x8x128xbf16, #tpu.memory_space<vmem>>, vector<16x8x128xbf16>
    %158 = vector.broadcast %156 : vector<16x1x128xbf16> to vector<16x8x128xbf16>
    %159 = arith.mulf %158, %157 : vector<16x8x128xbf16>
    %160 = arith.extf %159 : vector<16x8x128xbf16> to vector<16x8x128xf32>
    %cst_67 = arith.constant dense<0.000000e+00> : vector<8x128xf32>
    %161 = vector.multi_reduction <add>, %160, %cst_67 [0] : vector<16x8x128xf32> to vector<8x128xf32>
    %c24 = arith.constant 24 : index
    %c0_68 = arith.constant 0 : index
    %162 = vector.load %arg7[%c24, %c0_68] : memref<120x128xf32, #tpu.memory_space<vmem>>, vector<8x128xf32>
    tpu.vector_store %arg7[%c24, %c0_68], %161 {strides = array<i32>} : memref<120x128xf32, #tpu.memory_space<vmem>>, vector<8x128xf32>,
    %c4 = arith.constant 4 : index
    %c0_69 = arith.constant 0 : index
    %163 = memref.load %arg3[%c4, %c0_69] : memref<15x3xf32, #tpu.memory_space<smem>>
    %c4_70 = arith.constant 4 : index
    %c1_71 = arith.constant 1 : index
    %164 = memref.load %arg3[%c4_70, %c1_71] : memref<15x3xf32, #tpu.memory_space<smem>>
    %c4_72 = arith.constant 4 : index
    %c2_73 = arith.constant 2 : index
    %165 = memref.load %arg3[%c4_72, %c2_73] : memref<15x3xf32, #tpu.memory_space<smem>>
    %166 = vector.broadcast %163 : f32 to vector<16x128xf32>
    %167 = arith.mulf %1, %166 : vector<16x128xf32>
    %168 = vector.broadcast %164 : f32 to vector<16x128xf32>
    %169 = arith.mulf %3, %168 : vector<16x128xf32>
    %170 = arith.addf %167, %169 : vector<16x128xf32>
    %171 = vector.broadcast %165 : f32 to vector<16x128xf32>
    %172 = arith.mulf %5, %171 : vector<16x128xf32>
    %173 = arith.addf %170, %172 : vector<16x128xf32>
    %cst_74 = arith.constant 2.000000e+00 : f32
    %174 = vector.broadcast %cst_74 : f32 to vector<16x128xf32>
    %175 = arith.mulf %174, %173 : vector<16x128xf32>
    %176 = arith.subf %10, %175 : vector<16x128xf32>
    %177 = arith.mulf %163, %163 : f32
    %178 = arith.mulf %164, %164 : f32
    %179 = arith.addf %177, %178 : f32
    %180 = arith.mulf %165, %165 : f32
    %181 = arith.addf %179, %180 : f32
    %182 = vector.broadcast %181 : f32 to vector<16x128xf32>
    %183 = arith.addf %176, %182 : vector<16x128xf32>
    %cst_75 = arith.constant 0.000000e+00 : f32
    %184 = vector.broadcast %cst_75 : f32 to vector<16x128xf32>
    %185 = arith.maximumf %183, %184 : vector<16x128xf32>
    %186 = math.sqrt %185 : vector<16x128xf32>
    %cst_76 = arith.constant 8.33333301 : f32
    %187 = vector.broadcast %cst_76 : f32 to vector<16x128xf32>
    %188 = arith.mulf %186, %187 : vector<16x128xf32>
    %cst_77 = arith.constant 1.000000e+00 : f32
    %189 = vector.broadcast %cst_77 : f32 to vector<16x128xf32>
    %190 = arith.subf %189, %188 : vector<16x128xf32>
    %cst_78 = arith.constant 0.000000e+00 : f32
    %191 = vector.broadcast %cst_78 : f32 to vector<16x128xf32>
    %192 = arith.maximumf %191, %190 : vector<16x128xf32>
    %193 = arith.truncf %192 : vector<16x128xf32> to vector<16x128xbf16>
    %194 = vector.shape_cast %193 : vector<16x128xbf16> to vector<16x1x128xbf16>
    %c0_79 = arith.constant 0 : index
    %c0_80 = arith.constant 0 : index
    %c0_81 = arith.constant 0 : index
    %195 = vector.load %arg2[%c0_79, %c0_80, %c0_81] : memref<16x8x128xbf16, #tpu.memory_space<vmem>>, vector<16x8x128xbf16>
    %196 = vector.broadcast %194 : vector<16x1x128xbf16> to vector<16x8x128xbf16>
    %197 = arith.mulf %196, %195 : vector<16x8x128xbf16>
    %198 = arith.extf %197 : vector<16x8x128xbf16> to vector<16x8x128xf32>
    %cst_82 = arith.constant dense<0.000000e+00> : vector<8x128xf32>
    %199 = vector.multi_reduction <add>, %198, %cst_82 [0] : vector<16x8x128xf32> to vector<8x128xf32>
    %c32 = arith.constant 32 : index
    %c0_83 = arith.constant 0 : index
    %200 = vector.load %arg7[%c32, %c0_83] : memref<120x128xf32, #tpu.memory_space<vmem>>, vector<8x128xf32>
    tpu.vector_store %arg7[%c32, %c0_83], %199 {strides = array<i32>} : memref<120x128xf32, #tpu.memory_space<vmem>>, vector<8x128xf32>,
    %c5 = arith.constant 5 : index
    %c0_84 = arith.constant 0 : index
    %201 = memref.load %arg3[%c5, %c0_84] : memref<15x3xf32, #tpu.memory_space<smem>>
    %c5_85 = arith.constant 5 : index
    %c1_86 = arith.constant 1 : index
    %202 = memref.load %arg3[%c5_85, %c1_86] : memref<15x3xf32, #tpu.memory_space<smem>>
    %c5_87 = arith.constant 5 : index
    %c2_88 = arith.constant 2 : index
    %203 = memref.load %arg3[%c5_87, %c2_88] : memref<15x3xf32, #tpu.memory_space<smem>>
    %204 = vector.broadcast %201 : f32 to vector<16x128xf32>
    %205 = arith.mulf %1, %204 : vector<16x128xf32>
    %206 = vector.broadcast %202 : f32 to vector<16x128xf32>
    %207 = arith.mulf %3, %206 : vector<16x128xf32>
    %208 = arith.addf %205, %207 : vector<16x128xf32>
    %209 = vector.broadcast %203 : f32 to vector<16x128xf32>
    %210 = arith.mulf %5, %209 : vector<16x128xf32>
    %211 = arith.addf %208, %210 : vector<16x128xf32>
    %cst_89 = arith.constant 2.000000e+00 : f32
    %212 = vector.broadcast %cst_89 : f32 to vector<16x128xf32>
    %213 = arith.mulf %212, %211 : vector<16x128xf32>
    %214 = arith.subf %10, %213 : vector<16x128xf32>
    %215 = arith.mulf %201, %201 : f32
    %216 = arith.mulf %202, %202 : f32
    %217 = arith.addf %215, %216 : f32
    %218 = arith.mulf %203, %203 : f32
    %219 = arith.addf %217, %218 : f32
    %220 = vector.broadcast %219 : f32 to vector<16x128xf32>
    %221 = arith.addf %214, %220 : vector<16x128xf32>
    %cst_90 = arith.constant 0.000000e+00 : f32
    %222 = vector.broadcast %cst_90 : f32 to vector<16x128xf32>
    %223 = arith.maximumf %221, %222 : vector<16x128xf32>
    %224 = math.sqrt %223 : vector<16x128xf32>
    %cst_91 = arith.constant 8.33333301 : f32
    %225 = vector.broadcast %cst_91 : f32 to vector<16x128xf32>
    %226 = arith.mulf %224, %225 : vector<16x128xf32>
    %cst_92 = arith.constant 1.000000e+00 : f32
    %227 = vector.broadcast %cst_92 : f32 to vector<16x128xf32>
    %228 = arith.subf %227, %226 : vector<16x128xf32>
    %cst_93 = arith.constant 0.000000e+00 : f32
    %229 = vector.broadcast %cst_93 : f32 to vector<16x128xf32>
    %230 = arith.maximumf %229, %228 : vector<16x128xf32>
    %231 = arith.truncf %230 : vector<16x128xf32> to vector<16x128xbf16>
    %232 = vector.shape_cast %231 : vector<16x128xbf16> to vector<16x1x128xbf16>
    %c0_94 = arith.constant 0 : index
    %c0_95 = arith.constant 0 : index
    %c0_96 = arith.constant 0 : index
    %233 = vector.load %arg2[%c0_94, %c0_95, %c0_96] : memref<16x8x128xbf16, #tpu.memory_space<vmem>>, vector<16x8x128xbf16>
    %234 = vector.broadcast %232 : vector<16x1x128xbf16> to vector<16x8x128xbf16>
    %235 = arith.mulf %234, %233 : vector<16x8x128xbf16>
    %236 = arith.extf %235 : vector<16x8x128xbf16> to vector<16x8x128xf32>
    %cst_97 = arith.constant dense<0.000000e+00> : vector<8x128xf32>
    %237 = vector.multi_reduction <add>, %236, %cst_97 [0] : vector<16x8x128xf32> to vector<8x128xf32>
    %c40 = arith.constant 40 : index
    %c0_98 = arith.constant 0 : index
    %238 = vector.load %arg7[%c40, %c0_98] : memref<120x128xf32, #tpu.memory_space<vmem>>, vector<8x128xf32>
    tpu.vector_store %arg7[%c40, %c0_98], %237 {strides = array<i32>} : memref<120x128xf32, #tpu.memory_space<vmem>>, vector<8x128xf32>,
    %c6 = arith.constant 6 : index
    %c0_99 = arith.constant 0 : index
    %239 = memref.load %arg3[%c6, %c0_99] : memref<15x3xf32, #tpu.memory_space<smem>>
    %c6_100 = arith.constant 6 : index
    %c1_101 = arith.constant 1 : index
    %240 = memref.load %arg3[%c6_100, %c1_101] : memref<15x3xf32, #tpu.memory_space<smem>>
    %c6_102 = arith.constant 6 : index
    %c2_103 = arith.constant 2 : index
    %241 = memref.load %arg3[%c6_102, %c2_103] : memref<15x3xf32, #tpu.memory_space<smem>>
    %242 = vector.broadcast %239 : f32 to vector<16x128xf32>
    %243 = arith.mulf %1, %242 : vector<16x128xf32>
    %244 = vector.broadcast %240 : f32 to vector<16x128xf32>
    %245 = arith.mulf %3, %244 : vector<16x128xf32>
    %246 = arith.addf %243, %245 : vector<16x128xf32>
    %247 = vector.broadcast %241 : f32 to vector<16x128xf32>
    %248 = arith.mulf %5, %247 : vector<16x128xf32>
    %249 = arith.addf %246, %248 : vector<16x128xf32>
    %cst_104 = arith.constant 2.000000e+00 : f32
    %250 = vector.broadcast %cst_104 : f32 to vector<16x128xf32>
    %251 = arith.mulf %250, %249 : vector<16x128xf32>
    %252 = arith.subf %10, %251 : vector<16x128xf32>
    %253 = arith.mulf %239, %239 : f32
    %254 = arith.mulf %240, %240 : f32
    %255 = arith.addf %253, %254 : f32
    %256 = arith.mulf %241, %241 : f32
    %257 = arith.addf %255, %256 : f32
    %258 = vector.broadcast %257 : f32 to vector<16x128xf32>
    %259 = arith.addf %252, %258 : vector<16x128xf32>
    %cst_105 = arith.constant 0.000000e+00 : f32
    %260 = vector.broadcast %cst_105 : f32 to vector<16x128xf32>
    %261 = arith.maximumf %259, %260 : vector<16x128xf32>
    %262 = math.sqrt %261 : vector<16x128xf32>
    %cst_106 = arith.constant 8.33333301 : f32
    %263 = vector.broadcast %cst_106 : f32 to vector<16x128xf32>
    %264 = arith.mulf %262, %263 : vector<16x128xf32>
    %cst_107 = arith.constant 1.000000e+00 : f32
    %265 = vector.broadcast %cst_107 : f32 to vector<16x128xf32>
    %266 = arith.subf %265, %264 : vector<16x128xf32>
    %cst_108 = arith.constant 0.000000e+00 : f32
    %267 = vector.broadcast %cst_108 : f32 to vector<16x128xf32>
    %268 = arith.maximumf %267, %266 : vector<16x128xf32>
    %269 = arith.truncf %268 : vector<16x128xf32> to vector<16x128xbf16>
    %270 = vector.shape_cast %269 : vector<16x128xbf16> to vector<16x1x128xbf16>
    %c0_109 = arith.constant 0 : index
    %c0_110 = arith.constant 0 : index
    %c0_111 = arith.constant 0 : index
    %271 = vector.load %arg2[%c0_109, %c0_110, %c0_111] : memref<16x8x128xbf16, #tpu.memory_space<vmem>>, vector<16x8x128xbf16>
    %272 = vector.broadcast %270 : vector<16x1x128xbf16> to vector<16x8x128xbf16>
    %273 = arith.mulf %272, %271 : vector<16x8x128xbf16>
    %274 = arith.extf %273 : vector<16x8x128xbf16> to vector<16x8x128xf32>
    %cst_112 = arith.constant dense<0.000000e+00> : vector<8x128xf32>
    %275 = vector.multi_reduction <add>, %274, %cst_112 [0] : vector<16x8x128xf32> to vector<8x128xf32>
    %c48 = arith.constant 48 : index
    %c0_113 = arith.constant 0 : index
    %276 = vector.load %arg7[%c48, %c0_113] : memref<120x128xf32, #tpu.memory_space<vmem>>, vector<8x128xf32>
    tpu.vector_store %arg7[%c48, %c0_113], %275 {strides = array<i32>} : memref<120x128xf32, #tpu.memory_space<vmem>>, vector<8x128xf32>,
    %c7 = arith.constant 7 : index
    %c0_114 = arith.constant 0 : index
    %277 = memref.load %arg3[%c7, %c0_114] : memref<15x3xf32, #tpu.memory_space<smem>>
    %c7_115 = arith.constant 7 : index
    %c1_116 = arith.constant 1 : index
    %278 = memref.load %arg3[%c7_115, %c1_116] : memref<15x3xf32, #tpu.memory_space<smem>>
    %c7_117 = arith.constant 7 : index
    %c2_118 = arith.constant 2 : index
    %279 = memref.load %arg3[%c7_117, %c2_118] : memref<15x3xf32, #tpu.memory_space<smem>>
    %280 = vector.broadcast %277 : f32 to vector<16x128xf32>
    %281 = arith.mulf %1, %280 : vector<16x128xf32>
    %282 = vector.broadcast %278 : f32 to vector<16x128xf32>
    %283 = arith.mulf %3, %282 : vector<16x128xf32>
    %284 = arith.addf %281, %283 : vector<16x128xf32>
    %285 = vector.broadcast %279 : f32 to vector<16x128xf32>
    %286 = arith.mulf %5, %285 : vector<16x128xf32>
    %287 = arith.addf %284, %286 : vector<16x128xf32>
    %cst_119 = arith.constant 2.000000e+00 : f32
    %288 = vector.broadcast %cst_119 : f32 to vector<16x128xf32>
    %289 = arith.mulf %288, %287 : vector<16x128xf32>
    %290 = arith.subf %10, %289 : vector<16x128xf32>
    %291 = arith.mulf %277, %277 : f32
    %292 = arith.mulf %278, %278 : f32
    %293 = arith.addf %291, %292 : f32
    %294 = arith.mulf %279, %279 : f32
    %295 = arith.addf %293, %294 : f32
    %296 = vector.broadcast %295 : f32 to vector<16x128xf32>
    %297 = arith.addf %290, %296 : vector<16x128xf32>
    %cst_120 = arith.constant 0.000000e+00 : f32
    %298 = vector.broadcast %cst_120 : f32 to vector<16x128xf32>
    %299 = arith.maximumf %297, %298 : vector<16x128xf32>
    %300 = math.sqrt %299 : vector<16x128xf32>
    %cst_121 = arith.constant 8.33333301 : f32
    %301 = vector.broadcast %cst_121 : f32 to vector<16x128xf32>
    %302 = arith.mulf %300, %301 : vector<16x128xf32>
    %cst_122 = arith.constant 1.000000e+00 : f32
    %303 = vector.broadcast %cst_122 : f32 to vector<16x128xf32>
    %304 = arith.subf %303, %302 : vector<16x128xf32>
    %cst_123 = arith.constant 0.000000e+00 : f32
    %305 = vector.broadcast %cst_123 : f32 to vector<16x128xf32>
    %306 = arith.maximumf %305, %304 : vector<16x128xf32>
    %307 = arith.truncf %306 : vector<16x128xf32> to vector<16x128xbf16>
    %308 = vector.shape_cast %307 : vector<16x128xbf16> to vector<16x1x128xbf16>
    %c0_124 = arith.constant 0 : index
    %c0_125 = arith.constant 0 : index
    %c0_126 = arith.constant 0 : index
    %309 = vector.load %arg2[%c0_124, %c0_125, %c0_126] : memref<16x8x128xbf16, #tpu.memory_space<vmem>>, vector<16x8x128xbf16>
    %310 = vector.broadcast %308 : vector<16x1x128xbf16> to vector<16x8x128xbf16>
    %311 = arith.mulf %310, %309 : vector<16x8x128xbf16>
    %312 = arith.extf %311 : vector<16x8x128xbf16> to vector<16x8x128xf32>
    %cst_127 = arith.constant dense<0.000000e+00> : vector<8x128xf32>
    %313 = vector.multi_reduction <add>, %312, %cst_127 [0] : vector<16x8x128xf32> to vector<8x128xf32>
    %c56 = arith.constant 56 : index
    %c0_128 = arith.constant 0 : index
    %314 = vector.load %arg7[%c56, %c0_128] : memref<120x128xf32, #tpu.memory_space<vmem>>, vector<8x128xf32>
    tpu.vector_store %arg7[%c56, %c0_128], %313 {strides = array<i32>} : memref<120x128xf32, #tpu.memory_space<vmem>>, vector<8x128xf32>,
    %c8_129 = arith.constant 8 : index
    %c0_130 = arith.constant 0 : index
    %315 = memref.load %arg3[%c8_129, %c0_130] : memref<15x3xf32, #tpu.memory_space<smem>>
    %c8_131 = arith.constant 8 : index
    %c1_132 = arith.constant 1 : index
    %316 = memref.load %arg3[%c8_131, %c1_132] : memref<15x3xf32, #tpu.memory_space<smem>>
    %c8_133 = arith.constant 8 : index
    %c2_134 = arith.constant 2 : index
    %317 = memref.load %arg3[%c8_133, %c2_134] : memref<15x3xf32, #tpu.memory_space<smem>>
    %318 = vector.broadcast %315 : f32 to vector<16x128xf32>
    %319 = arith.mulf %1, %318 : vector<16x128xf32>
    %320 = vector.broadcast %316 : f32 to vector<16x128xf32>
    %321 = arith.mulf %3, %320 : vector<16x128xf32>
    %322 = arith.addf %319, %321 : vector<16x128xf32>
    %323 = vector.broadcast %317 : f32 to vector<16x128xf32>
    %324 = arith.mulf %5, %323 : vector<16x128xf32>
    %325 = arith.addf %322, %324 : vector<16x128xf32>
    %cst_135 = arith.constant 2.000000e+00 : f32
    %326 = vector.broadcast %cst_135 : f32 to vector<16x128xf32>
    %327 = arith.mulf %326, %325 : vector<16x128xf32>
    %328 = arith.subf %10, %327 : vector<16x128xf32>
    %329 = arith.mulf %315, %315 : f32
    %330 = arith.mulf %316, %316 : f32
    %331 = arith.addf %329, %330 : f32
    %332 = arith.mulf %317, %317 : f32
    %333 = arith.addf %331, %332 : f32
    %334 = vector.broadcast %333 : f32 to vector<16x128xf32>
    %335 = arith.addf %328, %334 : vector<16x128xf32>
    %cst_136 = arith.constant 0.000000e+00 : f32
    %336 = vector.broadcast %cst_136 : f32 to vector<16x128xf32>
    %337 = arith.maximumf %335, %336 : vector<16x128xf32>
    %338 = math.sqrt %337 : vector<16x128xf32>
    %cst_137 = arith.constant 8.33333301 : f32
    %339 = vector.broadcast %cst_137 : f32 to vector<16x128xf32>
    %340 = arith.mulf %338, %339 : vector<16x128xf32>
    %cst_138 = arith.constant 1.000000e+00 : f32
    %341 = vector.broadcast %cst_138 : f32 to vector<16x128xf32>
    %342 = arith.subf %341, %340 : vector<16x128xf32>
    %cst_139 = arith.constant 0.000000e+00 : f32
    %343 = vector.broadcast %cst_139 : f32 to vector<16x128xf32>
    %344 = arith.maximumf %343, %342 : vector<16x128xf32>
    %345 = arith.truncf %344 : vector<16x128xf32> to vector<16x128xbf16>
    %346 = vector.shape_cast %345 : vector<16x128xbf16> to vector<16x1x128xbf16>
    %c0_140 = arith.constant 0 : index
    %c0_141 = arith.constant 0 : index
    %c0_142 = arith.constant 0 : index
    %347 = vector.load %arg2[%c0_140, %c0_141, %c0_142] : memref<16x8x128xbf16, #tpu.memory_space<vmem>>, vector<16x8x128xbf16>
    %348 = vector.broadcast %346 : vector<16x1x128xbf16> to vector<16x8x128xbf16>
    %349 = arith.mulf %348, %347 : vector<16x8x128xbf16>
    %350 = arith.extf %349 : vector<16x8x128xbf16> to vector<16x8x128xf32>
    %cst_143 = arith.constant dense<0.000000e+00> : vector<8x128xf32>
    %351 = vector.multi_reduction <add>, %350, %cst_143 [0] : vector<16x8x128xf32> to vector<8x128xf32>
    %c64 = arith.constant 64 : index
    %c0_144 = arith.constant 0 : index
    %352 = vector.load %arg7[%c64, %c0_144] : memref<120x128xf32, #tpu.memory_space<vmem>>, vector<8x128xf32>
    tpu.vector_store %arg7[%c64, %c0_144], %351 {strides = array<i32>} : memref<120x128xf32, #tpu.memory_space<vmem>>, vector<8x128xf32>,
    %c9 = arith.constant 9 : index
    %c0_145 = arith.constant 0 : index
    %353 = memref.load %arg3[%c9, %c0_145] : memref<15x3xf32, #tpu.memory_space<smem>>
    %c9_146 = arith.constant 9 : index
    %c1_147 = arith.constant 1 : index
    %354 = memref.load %arg3[%c9_146, %c1_147] : memref<15x3xf32, #tpu.memory_space<smem>>
    %c9_148 = arith.constant 9 : index
    %c2_149 = arith.constant 2 : index
    %355 = memref.load %arg3[%c9_148, %c2_149] : memref<15x3xf32, #tpu.memory_space<smem>>
    %356 = vector.broadcast %353 : f32 to vector<16x128xf32>
    %357 = arith.mulf %1, %356 : vector<16x128xf32>
    %358 = vector.broadcast %354 : f32 to vector<16x128xf32>
    %359 = arith.mulf %3, %358 : vector<16x128xf32>
    %360 = arith.addf %357, %359 : vector<16x128xf32>
    %361 = vector.broadcast %355 : f32 to vector<16x128xf32>
    %362 = arith.mulf %5, %361 : vector<16x128xf32>
    %363 = arith.addf %360, %362 : vector<16x128xf32>
    %cst_150 = arith.constant 2.000000e+00 : f32
    %364 = vector.broadcast %cst_150 : f32 to vector<16x128xf32>
    %365 = arith.mulf %364, %363 : vector<16x128xf32>
    %366 = arith.subf %10, %365 : vector<16x128xf32>
    %367 = arith.mulf %353, %353 : f32
    %368 = arith.mulf %354, %354 : f32
    %369 = arith.addf %367, %368 : f32
    %370 = arith.mulf %355, %355 : f32
    %371 = arith.addf %369, %370 : f32
    %372 = vector.broadcast %371 : f32 to vector<16x128xf32>
    %373 = arith.addf %366, %372 : vector<16x128xf32>
    %cst_151 = arith.constant 0.000000e+00 : f32
    %374 = vector.broadcast %cst_151 : f32 to vector<16x128xf32>
    %375 = arith.maximumf %373, %374 : vector<16x128xf32>
    %376 = math.sqrt %375 : vector<16x128xf32>
    %cst_152 = arith.constant 8.33333301 : f32
    %377 = vector.broadcast %cst_152 : f32 to vector<16x128xf32>
    %378 = arith.mulf %376, %377 : vector<16x128xf32>
    %cst_153 = arith.constant 1.000000e+00 : f32
    %379 = vector.broadcast %cst_153 : f32 to vector<16x128xf32>
    %380 = arith.subf %379, %378 : vector<16x128xf32>
    %cst_154 = arith.constant 0.000000e+00 : f32
    %381 = vector.broadcast %cst_154 : f32 to vector<16x128xf32>
    %382 = arith.maximumf %381, %380 : vector<16x128xf32>
    %383 = arith.truncf %382 : vector<16x128xf32> to vector<16x128xbf16>
    %384 = vector.shape_cast %383 : vector<16x128xbf16> to vector<16x1x128xbf16>
    %c0_155 = arith.constant 0 : index
    %c0_156 = arith.constant 0 : index
    %c0_157 = arith.constant 0 : index
    %385 = vector.load %arg2[%c0_155, %c0_156, %c0_157] : memref<16x8x128xbf16, #tpu.memory_space<vmem>>, vector<16x8x128xbf16>
    %386 = vector.broadcast %384 : vector<16x1x128xbf16> to vector<16x8x128xbf16>
    %387 = arith.mulf %386, %385 : vector<16x8x128xbf16>
    %388 = arith.extf %387 : vector<16x8x128xbf16> to vector<16x8x128xf32>
    %cst_158 = arith.constant dense<0.000000e+00> : vector<8x128xf32>
    %389 = vector.multi_reduction <add>, %388, %cst_158 [0] : vector<16x8x128xf32> to vector<8x128xf32>
    %c72 = arith.constant 72 : index
    %c0_159 = arith.constant 0 : index
    %390 = vector.load %arg7[%c72, %c0_159] : memref<120x128xf32, #tpu.memory_space<vmem>>, vector<8x128xf32>
    tpu.vector_store %arg7[%c72, %c0_159], %389 {strides = array<i32>} : memref<120x128xf32, #tpu.memory_space<vmem>>, vector<8x128xf32>,
    %c10 = arith.constant 10 : index
    %c0_160 = arith.constant 0 : index
    %391 = memref.load %arg3[%c10, %c0_160] : memref<15x3xf32, #tpu.memory_space<smem>>
    %c10_161 = arith.constant 10 : index
    %c1_162 = arith.constant 1 : index
    %392 = memref.load %arg3[%c10_161, %c1_162] : memref<15x3xf32, #tpu.memory_space<smem>>
    %c10_163 = arith.constant 10 : index
    %c2_164 = arith.constant 2 : index
    %393 = memref.load %arg3[%c10_163, %c2_164] : memref<15x3xf32, #tpu.memory_space<smem>>
    %394 = vector.broadcast %391 : f32 to vector<16x128xf32>
    %395 = arith.mulf %1, %394 : vector<16x128xf32>
    %396 = vector.broadcast %392 : f32 to vector<16x128xf32>
    %397 = arith.mulf %3, %396 : vector<16x128xf32>
    %398 = arith.addf %395, %397 : vector<16x128xf32>
    %399 = vector.broadcast %393 : f32 to vector<16x128xf32>
    %400 = arith.mulf %5, %399 : vector<16x128xf32>
    %401 = arith.addf %398, %400 : vector<16x128xf32>
    %cst_165 = arith.constant 2.000000e+00 : f32
    %402 = vector.broadcast %cst_165 : f32 to vector<16x128xf32>
    %403 = arith.mulf %402, %401 : vector<16x128xf32>
    %404 = arith.subf %10, %403 : vector<16x128xf32>
    %405 = arith.mulf %391, %391 : f32
    %406 = arith.mulf %392, %392 : f32
    %407 = arith.addf %405, %406 : f32
    %408 = arith.mulf %393, %393 : f32
    %409 = arith.addf %407, %408 : f32
    %410 = vector.broadcast %409 : f32 to vector<16x128xf32>
    %411 = arith.addf %404, %410 : vector<16x128xf32>
    %cst_166 = arith.constant 0.000000e+00 : f32
    %412 = vector.broadcast %cst_166 : f32 to vector<16x128xf32>
    %413 = arith.maximumf %411, %412 : vector<16x128xf32>
    %414 = math.sqrt %413 : vector<16x128xf32>
    %cst_167 = arith.constant 8.33333301 : f32
    %415 = vector.broadcast %cst_167 : f32 to vector<16x128xf32>
    %416 = arith.mulf %414, %415 : vector<16x128xf32>
    %cst_168 = arith.constant 1.000000e+00 : f32
    %417 = vector.broadcast %cst_168 : f32 to vector<16x128xf32>
    %418 = arith.subf %417, %416 : vector<16x128xf32>
    %cst_169 = arith.constant 0.000000e+00 : f32
    %419 = vector.broadcast %cst_169 : f32 to vector<16x128xf32>
    %420 = arith.maximumf %419, %418 : vector<16x128xf32>
    %421 = arith.truncf %420 : vector<16x128xf32> to vector<16x128xbf16>
    %422 = vector.shape_cast %421 : vector<16x128xbf16> to vector<16x1x128xbf16>
    %c0_170 = arith.constant 0 : index
    %c0_171 = arith.constant 0 : index
    %c0_172 = arith.constant 0 : index
    %423 = vector.load %arg2[%c0_170, %c0_171, %c0_172] : memref<16x8x128xbf16, #tpu.memory_space<vmem>>, vector<16x8x128xbf16>
    %424 = vector.broadcast %422 : vector<16x1x128xbf16> to vector<16x8x128xbf16>
    %425 = arith.mulf %424, %423 : vector<16x8x128xbf16>
    %426 = arith.extf %425 : vector<16x8x128xbf16> to vector<16x8x128xf32>
    %cst_173 = arith.constant dense<0.000000e+00> : vector<8x128xf32>
    %427 = vector.multi_reduction <add>, %426, %cst_173 [0] : vector<16x8x128xf32> to vector<8x128xf32>
    %c80 = arith.constant 80 : index
    %c0_174 = arith.constant 0 : index
    %428 = vector.load %arg7[%c80, %c0_174] : memref<120x128xf32, #tpu.memory_space<vmem>>, vector<8x128xf32>
    tpu.vector_store %arg7[%c80, %c0_174], %427 {strides = array<i32>} : memref<120x128xf32, #tpu.memory_space<vmem>>, vector<8x128xf32>,
    %c11 = arith.constant 11 : index
    %c0_175 = arith.constant 0 : index
    %429 = memref.load %arg3[%c11, %c0_175] : memref<15x3xf32, #tpu.memory_space<smem>>
    %c11_176 = arith.constant 11 : index
    %c1_177 = arith.constant 1 : index
    %430 = memref.load %arg3[%c11_176, %c1_177] : memref<15x3xf32, #tpu.memory_space<smem>>
    %c11_178 = arith.constant 11 : index
    %c2_179 = arith.constant 2 : index
    %431 = memref.load %arg3[%c11_178, %c2_179] : memref<15x3xf32, #tpu.memory_space<smem>>
    %432 = vector.broadcast %429 : f32 to vector<16x128xf32>
    %433 = arith.mulf %1, %432 : vector<16x128xf32>
    %434 = vector.broadcast %430 : f32 to vector<16x128xf32>
    %435 = arith.mulf %3, %434 : vector<16x128xf32>
    %436 = arith.addf %433, %435 : vector<16x128xf32>
    %437 = vector.broadcast %431 : f32 to vector<16x128xf32>
    %438 = arith.mulf %5, %437 : vector<16x128xf32>
    %439 = arith.addf %436, %438 : vector<16x128xf32>
    %cst_180 = arith.constant 2.000000e+00 : f32
    %440 = vector.broadcast %cst_180 : f32 to vector<16x128xf32>
    %441 = arith.mulf %440, %439 : vector<16x128xf32>
    %442 = arith.subf %10, %441 : vector<16x128xf32>
    %443 = arith.mulf %429, %429 : f32
    %444 = arith.mulf %430, %430 : f32
    %445 = arith.addf %443, %444 : f32
    %446 = arith.mulf %431, %431 : f32
    %447 = arith.addf %445, %446 : f32
    %448 = vector.broadcast %447 : f32 to vector<16x128xf32>
    %449 = arith.addf %442, %448 : vector<16x128xf32>
    %cst_181 = arith.constant 0.000000e+00 : f32
    %450 = vector.broadcast %cst_181 : f32 to vector<16x128xf32>
    %451 = arith.maximumf %449, %450 : vector<16x128xf32>
    %452 = math.sqrt %451 : vector<16x128xf32>
    %cst_182 = arith.constant 8.33333301 : f32
    %453 = vector.broadcast %cst_182 : f32 to vector<16x128xf32>
    %454 = arith.mulf %452, %453 : vector<16x128xf32>
    %cst_183 = arith.constant 1.000000e+00 : f32
    %455 = vector.broadcast %cst_183 : f32 to vector<16x128xf32>
    %456 = arith.subf %455, %454 : vector<16x128xf32>
    %cst_184 = arith.constant 0.000000e+00 : f32
    %457 = vector.broadcast %cst_184 : f32 to vector<16x128xf32>
    %458 = arith.maximumf %457, %456 : vector<16x128xf32>
    %459 = arith.truncf %458 : vector<16x128xf32> to vector<16x128xbf16>
    %460 = vector.shape_cast %459 : vector<16x128xbf16> to vector<16x1x128xbf16>
    %c0_185 = arith.constant 0 : index
    %c0_186 = arith.constant 0 : index
    %c0_187 = arith.constant 0 : index
    %461 = vector.load %arg2[%c0_185, %c0_186, %c0_187] : memref<16x8x128xbf16, #tpu.memory_space<vmem>>, vector<16x8x128xbf16>
    %462 = vector.broadcast %460 : vector<16x1x128xbf16> to vector<16x8x128xbf16>
    %463 = arith.mulf %462, %461 : vector<16x8x128xbf16>
    %464 = arith.extf %463 : vector<16x8x128xbf16> to vector<16x8x128xf32>
    %cst_188 = arith.constant dense<0.000000e+00> : vector<8x128xf32>
    %465 = vector.multi_reduction <add>, %464, %cst_188 [0] : vector<16x8x128xf32> to vector<8x128xf32>
    %c88 = arith.constant 88 : index
    %c0_189 = arith.constant 0 : index
    %466 = vector.load %arg7[%c88, %c0_189] : memref<120x128xf32, #tpu.memory_space<vmem>>, vector<8x128xf32>
    tpu.vector_store %arg7[%c88, %c0_189], %465 {strides = array<i32>} : memref<120x128xf32, #tpu.memory_space<vmem>>, vector<8x128xf32>,
    %c12 = arith.constant 12 : index
    %c0_190 = arith.constant 0 : index
    %467 = memref.load %arg3[%c12, %c0_190] : memref<15x3xf32, #tpu.memory_space<smem>>
    %c12_191 = arith.constant 12 : index
    %c1_192 = arith.constant 1 : index
    %468 = memref.load %arg3[%c12_191, %c1_192] : memref<15x3xf32, #tpu.memory_space<smem>>
    %c12_193 = arith.constant 12 : index
    %c2_194 = arith.constant 2 : index
    %469 = memref.load %arg3[%c12_193, %c2_194] : memref<15x3xf32, #tpu.memory_space<smem>>
    %470 = vector.broadcast %467 : f32 to vector<16x128xf32>
    %471 = arith.mulf %1, %470 : vector<16x128xf32>
    %472 = vector.broadcast %468 : f32 to vector<16x128xf32>
    %473 = arith.mulf %3, %472 : vector<16x128xf32>
    %474 = arith.addf %471, %473 : vector<16x128xf32>
    %475 = vector.broadcast %469 : f32 to vector<16x128xf32>
    %476 = arith.mulf %5, %475 : vector<16x128xf32>
    %477 = arith.addf %474, %476 : vector<16x128xf32>
    %cst_195 = arith.constant 2.000000e+00 : f32
    %478 = vector.broadcast %cst_195 : f32 to vector<16x128xf32>
    %479 = arith.mulf %478, %477 : vector<16x128xf32>
    %480 = arith.subf %10, %479 : vector<16x128xf32>
    %481 = arith.mulf %467, %467 : f32
    %482 = arith.mulf %468, %468 : f32
    %483 = arith.addf %481, %482 : f32
    %484 = arith.mulf %469, %469 : f32
    %485 = arith.addf %483, %484 : f32
    %486 = vector.broadcast %485 : f32 to vector<16x128xf32>
    %487 = arith.addf %480, %486 : vector<16x128xf32>
    %cst_196 = arith.constant 0.000000e+00 : f32
    %488 = vector.broadcast %cst_196 : f32 to vector<16x128xf32>
    %489 = arith.maximumf %487, %488 : vector<16x128xf32>
    %490 = math.sqrt %489 : vector<16x128xf32>
    %cst_197 = arith.constant 8.33333301 : f32
    %491 = vector.broadcast %cst_197 : f32 to vector<16x128xf32>
    %492 = arith.mulf %490, %491 : vector<16x128xf32>
    %cst_198 = arith.constant 1.000000e+00 : f32
    %493 = vector.broadcast %cst_198 : f32 to vector<16x128xf32>
    %494 = arith.subf %493, %492 : vector<16x128xf32>
    %cst_199 = arith.constant 0.000000e+00 : f32
    %495 = vector.broadcast %cst_199 : f32 to vector<16x128xf32>
    %496 = arith.maximumf %495, %494 : vector<16x128xf32>
    %497 = arith.truncf %496 : vector<16x128xf32> to vector<16x128xbf16>
    %498 = vector.shape_cast %497 : vector<16x128xbf16> to vector<16x1x128xbf16>
    %c0_200 = arith.constant 0 : index
    %c0_201 = arith.constant 0 : index
    %c0_202 = arith.constant 0 : index
    %499 = vector.load %arg2[%c0_200, %c0_201, %c0_202] : memref<16x8x128xbf16, #tpu.memory_space<vmem>>, vector<16x8x128xbf16>
    %500 = vector.broadcast %498 : vector<16x1x128xbf16> to vector<16x8x128xbf16>
    %501 = arith.mulf %500, %499 : vector<16x8x128xbf16>
    %502 = arith.extf %501 : vector<16x8x128xbf16> to vector<16x8x128xf32>
    %cst_203 = arith.constant dense<0.000000e+00> : vector<8x128xf32>
    %503 = vector.multi_reduction <add>, %502, %cst_203 [0] : vector<16x8x128xf32> to vector<8x128xf32>
    %c96 = arith.constant 96 : index
    %c0_204 = arith.constant 0 : index
    %504 = vector.load %arg7[%c96, %c0_204] : memref<120x128xf32, #tpu.memory_space<vmem>>, vector<8x128xf32>
    tpu.vector_store %arg7[%c96, %c0_204], %503 {strides = array<i32>} : memref<120x128xf32, #tpu.memory_space<vmem>>, vector<8x128xf32>,
    %c13 = arith.constant 13 : index
    %c0_205 = arith.constant 0 : index
    %505 = memref.load %arg3[%c13, %c0_205] : memref<15x3xf32, #tpu.memory_space<smem>>
    %c13_206 = arith.constant 13 : index
    %c1_207 = arith.constant 1 : index
    %506 = memref.load %arg3[%c13_206, %c1_207] : memref<15x3xf32, #tpu.memory_space<smem>>
    %c13_208 = arith.constant 13 : index
    %c2_209 = arith.constant 2 : index
    %507 = memref.load %arg3[%c13_208, %c2_209] : memref<15x3xf32, #tpu.memory_space<smem>>
    %508 = vector.broadcast %505 : f32 to vector<16x128xf32>
    %509 = arith.mulf %1, %508 : vector<16x128xf32>
    %510 = vector.broadcast %506 : f32 to vector<16x128xf32>
    %511 = arith.mulf %3, %510 : vector<16x128xf32>
    %512 = arith.addf %509, %511 : vector<16x128xf32>
    %513 = vector.broadcast %507 : f32 to vector<16x128xf32>
    %514 = arith.mulf %5, %513 : vector<16x128xf32>
    %515 = arith.addf %512, %514 : vector<16x128xf32>
    %cst_210 = arith.constant 2.000000e+00 : f32
    %516 = vector.broadcast %cst_210 : f32 to vector<16x128xf32>
    %517 = arith.mulf %516, %515 : vector<16x128xf32>
    %518 = arith.subf %10, %517 : vector<16x128xf32>
    %519 = arith.mulf %505, %505 : f32
    %520 = arith.mulf %506, %506 : f32
    %521 = arith.addf %519, %520 : f32
    %522 = arith.mulf %507, %507 : f32
    %523 = arith.addf %521, %522 : f32
    %524 = vector.broadcast %523 : f32 to vector<16x128xf32>
    %525 = arith.addf %518, %524 : vector<16x128xf32>
    %cst_211 = arith.constant 0.000000e+00 : f32
    %526 = vector.broadcast %cst_211 : f32 to vector<16x128xf32>
    %527 = arith.maximumf %525, %526 : vector<16x128xf32>
    %528 = math.sqrt %527 : vector<16x128xf32>
    %cst_212 = arith.constant 8.33333301 : f32
    %529 = vector.broadcast %cst_212 : f32 to vector<16x128xf32>
    %530 = arith.mulf %528, %529 : vector<16x128xf32>
    %cst_213 = arith.constant 1.000000e+00 : f32
    %531 = vector.broadcast %cst_213 : f32 to vector<16x128xf32>
    %532 = arith.subf %531, %530 : vector<16x128xf32>
    %cst_214 = arith.constant 0.000000e+00 : f32
    %533 = vector.broadcast %cst_214 : f32 to vector<16x128xf32>
    %534 = arith.maximumf %533, %532 : vector<16x128xf32>
    %535 = arith.truncf %534 : vector<16x128xf32> to vector<16x128xbf16>
    %536 = vector.shape_cast %535 : vector<16x128xbf16> to vector<16x1x128xbf16>
    %c0_215 = arith.constant 0 : index
    %c0_216 = arith.constant 0 : index
    %c0_217 = arith.constant 0 : index
    %537 = vector.load %arg2[%c0_215, %c0_216, %c0_217] : memref<16x8x128xbf16, #tpu.memory_space<vmem>>, vector<16x8x128xbf16>
    %538 = vector.broadcast %536 : vector<16x1x128xbf16> to vector<16x8x128xbf16>
    %539 = arith.mulf %538, %537 : vector<16x8x128xbf16>
    %540 = arith.extf %539 : vector<16x8x128xbf16> to vector<16x8x128xf32>
    %cst_218 = arith.constant dense<0.000000e+00> : vector<8x128xf32>
    %541 = vector.multi_reduction <add>, %540, %cst_218 [0] : vector<16x8x128xf32> to vector<8x128xf32>
    %c104 = arith.constant 104 : index
    %c0_219 = arith.constant 0 : index
    %542 = vector.load %arg7[%c104, %c0_219] : memref<120x128xf32, #tpu.memory_space<vmem>>, vector<8x128xf32>
    tpu.vector_store %arg7[%c104, %c0_219], %541 {strides = array<i32>} : memref<120x128xf32, #tpu.memory_space<vmem>>, vector<8x128xf32>,
    %c14 = arith.constant 14 : index
    %c0_220 = arith.constant 0 : index
    %543 = memref.load %arg3[%c14, %c0_220] : memref<15x3xf32, #tpu.memory_space<smem>>
    %c14_221 = arith.constant 14 : index
    %c1_222 = arith.constant 1 : index
    %544 = memref.load %arg3[%c14_221, %c1_222] : memref<15x3xf32, #tpu.memory_space<smem>>
    %c14_223 = arith.constant 14 : index
    %c2_224 = arith.constant 2 : index
    %545 = memref.load %arg3[%c14_223, %c2_224] : memref<15x3xf32, #tpu.memory_space<smem>>
    %546 = vector.broadcast %543 : f32 to vector<16x128xf32>
    %547 = arith.mulf %1, %546 : vector<16x128xf32>
    %548 = vector.broadcast %544 : f32 to vector<16x128xf32>
    %549 = arith.mulf %3, %548 : vector<16x128xf32>
    %550 = arith.addf %547, %549 : vector<16x128xf32>
    %551 = vector.broadcast %545 : f32 to vector<16x128xf32>
    %552 = arith.mulf %5, %551 : vector<16x128xf32>
    %553 = arith.addf %550, %552 : vector<16x128xf32>
    %cst_225 = arith.constant 2.000000e+00 : f32
    %554 = vector.broadcast %cst_225 : f32 to vector<16x128xf32>
    %555 = arith.mulf %554, %553 : vector<16x128xf32>
    %556 = arith.subf %10, %555 : vector<16x128xf32>
    %557 = arith.mulf %543, %543 : f32
    %558 = arith.mulf %544, %544 : f32
    %559 = arith.addf %557, %558 : f32
    %560 = arith.mulf %545, %545 : f32
    %561 = arith.addf %559, %560 : f32
    %562 = vector.broadcast %561 : f32 to vector<16x128xf32>
    %563 = arith.addf %556, %562 : vector<16x128xf32>
    %cst_226 = arith.constant 0.000000e+00 : f32
    %564 = vector.broadcast %cst_226 : f32 to vector<16x128xf32>
    %565 = arith.maximumf %563, %564 : vector<16x128xf32>
    %566 = math.sqrt %565 : vector<16x128xf32>
    %cst_227 = arith.constant 8.33333301 : f32
    %567 = vector.broadcast %cst_227 : f32 to vector<16x128xf32>
    %568 = arith.mulf %566, %567 : vector<16x128xf32>
    %cst_228 = arith.constant 1.000000e+00 : f32
    %569 = vector.broadcast %cst_228 : f32 to vector<16x128xf32>
    %570 = arith.subf %569, %568 : vector<16x128xf32>
    %cst_229 = arith.constant 0.000000e+00 : f32
    %571 = vector.broadcast %cst_229 : f32 to vector<16x128xf32>
    %572 = arith.maximumf %571, %570 : vector<16x128xf32>
    %573 = arith.truncf %572 : vector<16x128xf32> to vector<16x128xbf16>
    %574 = vector.shape_cast %573 : vector<16x128xbf16> to vector<16x1x128xbf16>
    %c0_230 = arith.constant 0 : index
    %c0_231 = arith.constant 0 : index
    %c0_232 = arith.constant 0 : index
    %575 = vector.load %arg2[%c0_230, %c0_231, %c0_232] : memref<16x8x128xbf16, #tpu.memory_space<vmem>>, vector<16x8x128xbf16>
    %576 = vector.broadcast %574 : vector<16x1x128xbf16> to vector<16x8x128xbf16>
    %577 = arith.mulf %576, %575 : vector<16x8x128xbf16>
    %578 = arith.extf %577 : vector<16x8x128xbf16> to vector<16x8x128xf32>
    %cst_233 = arith.constant dense<0.000000e+00> : vector<8x128xf32>
    %579 = vector.multi_reduction <add>, %578, %cst_233 [0] : vector<16x8x128xf32> to vector<8x128xf32>
    %c112 = arith.constant 112 : index
    %c0_234 = arith.constant 0 : index
    %580 = vector.load %arg7[%c112, %c0_234] : memref<120x128xf32, #tpu.memory_space<vmem>>, vector<8x128xf32>
    tpu.vector_store %arg7[%c112, %c0_234], %579 {strides = array<i32>} : memref<120x128xf32, #tpu.memory_space<vmem>>, vector<8x128xf32>,
    %c0_235 = arith.constant 0 : index
    %c0_236 = arith.constant 0 : index
    %581 = vector.load %arg4[%c0_235, %c0_236] : memref<8x120xbf16, #tpu.memory_space<vmem>>, vector<8x120xbf16>
    %c0_237 = arith.constant 0 : index
    %c0_238 = arith.constant 0 : index
    %582 = vector.load %arg7[%c0_237, %c0_238] : memref<120x128xf32, #tpu.memory_space<vmem>>, vector<120x128xf32>
    %583 = arith.truncf %582 : vector<120x128xf32> to vector<120x128xbf16>
    %cst_239 = arith.constant dense<0.000000e+00> : vector<8x128xf32>
    %584 = tpu.matmul %581, %583, %cst_239 {dimension_numbers = #tpu.dot_dimension_numbers<[1], [0], [0], [1], [0, 0, 1, 1], [], []>} : vector<8x120xbf16>, vector<120x128xbf16>, vector<8x128xf32> -> vector<8x128xf32>
    %c0_240 = arith.constant 0 : index
    %c0_241 = arith.constant 0 : index
    %585 = vector.load %arg5[%c0_240, %c0_241] : memref<8x1xf32, #tpu.memory_space<vmem>>, vector<8x1xf32>
    %586 = vector.broadcast %585 : vector<8x1xf32> to vector<8x128xf32>
    %587 = arith.addf %584, %586 : vector<8x128xf32>
    %cst_242 = arith.constant 0.000000e+00 : f32
    %588 = vector.broadcast %cst_242 : f32 to vector<8x128xf32>
    %589 = arith.cmpf ogt, %587, %588 : vector<8x128xf32>
    %cst_243 = arith.constant 1.000000e-01 : f32
    %590 = vector.broadcast %cst_243 : f32 to vector<8x128xf32>
    %591 = arith.mulf %590, %587 : vector<8x128xf32>
    %592 = arith.select %589, %587, %591 : vector<8x128xi1>, vector<8x128xf32>
    %c0_244 = arith.constant 0 : index
    %c0_245 = arith.constant 0 : index
    %593 = vector.load %arg6[%c0_244, %c0_245] : memref<8x128xf32, #tpu.memory_space<vmem>>, vector<8x128xf32>
    tpu.vector_store %arg6[%c0_244, %c0_245], %592 {strides = array<i32>} : memref<8x128xf32, #tpu.memory_space<vmem>>, vector<8x128xf32>,
    return
  }
  func.func @transform_0(%arg0: i32) -> (i32, i32, i32) {
    %c0_i32 = arith.constant 0 : i32
    %c0_i32_0 = arith.constant 0 : i32
    %c0_i32_1 = arith.constant 0 : i32
    return %c0_i32, %c0_i32_0, %arg0 : i32, i32, i32
  }
  func.func @transform_1(%arg0: i32) -> (i32, i32, i32) {
    %c0_i32 = arith.constant 0 : i32
    %c0_i32_0 = arith.constant 0 : i32
    %c0_i32_1 = arith.constant 0 : i32
    return %c0_i32, %c0_i32_0, %arg0 : i32, i32, i32
  }
  func.func @transform_2(%arg0: i32) -> (i32, i32) {
    %c0_i32 = arith.constant 0 : i32
    %c0_i32_0 = arith.constant 0 : i32
    %c0_i32_1 = arith.constant 0 : i32
    return %c0_i32, %c0_i32_0 : i32, i32
  }
  func.func @transform_3(%arg0: i32) -> (i32, i32) {
    %c0_i32 = arith.constant 0 : i32
    %c0_i32_0 = arith.constant 0 : i32
    %c0_i32_1 = arith.constant 0 : i32
    return %c0_i32, %c0_i32_0 : i32, i32
  }
  func.func @transform_4(%arg0: i32) -> (i32, i32) {
    %c0_i32 = arith.constant 0 : i32
    %c0_i32_0 = arith.constant 0 : i32
    %c0_i32_1 = arith.constant 0 : i32
    return %c0_i32, %c0_i32_0 : i32, i32
  }
  func.func @transform_5(%arg0: i32) -> (i32, i32) {
    %c0_i32 = arith.constant 0 : i32
    %c0_i32_0 = arith.constant 0 : i32
    return %c0_i32, %arg0 : i32, i32
  }
}

</mosaic_0001>

<llo_original>
// kernel: tpu_custom_call.1
$region0: #{tpu_custom_call.1}
  #allocation0 [shape = 'u32[]', space=smem, size = 0x4, offset = 0x4, fixed_abs, tag = 'smem constant byte address 0x4 - core index']
  #allocation1 [shape = 'u32[144,128]{1,0:T(1,128)}', space=vmem, size = 0x12000, scoped, tag = 'internal scratch']
  #allocation2 [shape = 'f32[120,128]{1,0:T(8,128)}', space=vmem, size = 0xf000, scoped, tag = 'scratch operand']
  %s0 = inlined_call_operand.hbm [shape: f32[3,16,128], index: 0, kind: input, shape index: {}]
  %s1 = inlined_call_operand.hbm [shape: bf16[16,8,128], index: 1, kind: input, shape index: {}]
  %s2 = inlined_call_operand.vmem [shape: f32[15,3], index: 2, kind: input, shape index: {}]
  %s3 = inlined_call_operand.vmem [shape: bf16[8,120], index: 3, kind: input, shape index: {}]
  %s4 = inlined_call_operand.vmem [shape: f32[8,1], index: 4, kind: input, shape index: {}]
  %s5 = inlined_call_operand.hbm [shape: f32[8,128], index: 5, kind: output, shape index: {}]
  %s6 = sld [smem:[#allocation0]]
  $region42: #{tpu_custom_call.1} parent=0
    _
  %s8 = ssub.s32 1, %s6
  %s9 = scalar_select 0, %s8, %s6
  $region1: #{tpu_custom_call.1} parent=0
    #allocation3 [shape = 'u8[24576]{0}', space=vmem, size = 0x6000, scoped, tag = 'input window, operand 0, single buffered']
    #allocation4 [shape = 's32[1]{0}', space=sflag, size = 0x4, scoped, tag = 'scoped memory for tpu_custom_call.1']
    #allocation5 [shape = 's32[1]{0}', space=sflag, size = 0x4, scoped, tag = 'scoped memory for tpu_custom_call.1']
    #allocation6 [shape = 's32[1]{0}', space=sflag, size = 0x4, scoped, tag = 'scoped memory for tpu_custom_call.1']
    #allocation7 [shape = 'u8[32768]{0}', space=vmem, size = 0x8000, scoped, tag = 'input window, operand 1, single buffered']
    #allocation8 [shape = 's32[1]{0}', space=sflag, size = 0x4, scoped, tag = 'scoped memory for tpu_custom_call.1']
    #allocation9 [shape = 'u8[8192]{0}', space=smem, size = 0x2000, scoped, tag = 'input window, operand 2, single buffered']
    #allocation10 [shape = 'u8[4096]{0}', space=vmem, size = 0x1000, scoped, tag = 'output window, operand 0, single buffered']
    %10 = vsyncpa [#allocation4], 0
    %11 = vsyncpa [#allocation8], 0
    %12 = vsyncpa [#allocation6], 0
    %13 = vsyncpa [#allocation5], 0
    // Predicated region
    $region2: #{tpu_custom_call.1} parent=1 // pred_check
      _
    $region3: #{tpu_custom_call.1} parent=1 // pred_check_branch
      %15 = sbr.rel (0) target = $region5
    $region4: #{tpu_custom_call.1} parent=1 // pred_region
      %s17 = ssub.s32 768, 768
      %18 = vsyncadd [#allocation4], %s17
      %s19 = sshll.u32 [#allocation3], 4
      %s20 = int_to_ptr.vmem [resolvable:$true] %s19
      %25 = dma.hbm_to_vmem [thread:$0]  %s0, 768, %s20, [#allocation4], 128, 128, 8
    $region5: #{tpu_custom_call.1} parent=1 // pred_fallthru
      _
    // Predicated region
    $region6: #{tpu_custom_call.1} parent=1 // pred_check
      _
    $region7: #{tpu_custom_call.1} parent=1 // pred_check_branch
      %27 = sbr.rel (0) target = $region9
    $region8: #{tpu_custom_call.1} parent=1 // pred_region
      %s29 = ssub.s32 1024, 1024
      %30 = vsyncadd [#allocation8], %s29
      %s31 = sshll.u32 [#allocation7], 4
      %s32 = int_to_ptr.vmem [resolvable:$true] %s31
      %37 = dma.hbm_to_vmem [thread:$0]  %s1, 1024, %s32, [#allocation8], 64, 64, 4
    $region9: #{tpu_custom_call.1} parent=1 // pred_fallthru
      _
    // Predicated region
    $region10: #{tpu_custom_call.1} parent=1 // pred_check
      _
    $region11: #{tpu_custom_call.1} parent=1 // pred_check_branch
      %39 = sbr.rel (0) target = $region13
    $region12: #{tpu_custom_call.1} parent=1 // pred_region
      %s41 = ssub.s32 256, 256
      %42 = vsyncadd [#allocation6], %s41
      %s43 = sshll.u32 %s2, 4
      %s44 = int_to_ptr.vmem [resolvable:$true] %s43
      %49 = dma.vmem_to_smem %s44, 256, [#allocation9], [#allocation6], 128, 128, 8
    $region13: #{tpu_custom_call.1} parent=1 // pred_fallthru
      _
    // Predicated region
    $region14: #{tpu_custom_call.1} parent=1 // pred_check
      _
    $region15: #{tpu_custom_call.1} parent=1 // pred_check_branch
      %51 = sbr.rel (0) target = $region17
    $region16: #{tpu_custom_call.1} parent=1 // pred_region
      _
    $region17: #{tpu_custom_call.1} parent=1 // pred_fallthru
      _
    // Predicated region
    $region18: #{tpu_custom_call.1} parent=1 // pred_check
      _
    $region19: #{tpu_custom_call.1} parent=1 // pred_check_branch
      %53 = sbr.rel (0) target = $region21
    $region20: #{tpu_custom_call.1} parent=1 // pred_region
      _
    $region21: #{tpu_custom_call.1} parent=1 // pred_fallthru
      _
    // Predicated region
    $region22: #{tpu_custom_call.1} parent=1 // pred_check
      _
    $region23: #{tpu_custom_call.1} parent=1 // pred_check_branch
      %55 = sbr.rel (0) target = $region25
    $region24: #{tpu_custom_call.1} parent=1 // pred_region
      %56 = dma.done [#allocation4], 768
    $region25: #{tpu_custom_call.1} parent=1 // pred_fallthru
      _
    // Predicated region
    $region26: #{tpu_custom_call.1} parent=1 // pred_check
      _
    $region27: #{tpu_custom_call.1} parent=1 // pred_check_branch
      %58 = sbr.rel (0) target = $region29
    $region28: #{tpu_custom_call.1} parent=1 // pred_region
      %59 = dma.done [#allocation8], 1024
    $region29: #{tpu_custom_call.1} parent=1 // pred_fallthru
      _
    // Predicated region
    $region30: #{tpu_custom_call.1} parent=1 // pred_check
      _
    $region31: #{tpu_custom_call.1} parent=1 // pred_check_branch
      %61 = sbr.rel (0) target = $region33
    $region32: #{tpu_custom_call.1} parent=1 // pred_region
      %62 = dma.done [#allocation6], 256
    $region33: #{tpu_custom_call.1} parent=1 // pred_fallthru
      _
    %63 = sfence
    %v65 = vld [vmem:[#allocation3] sm:$0xff]
    %v66 = vld [vmem:[#allocation3 + $0x8] sm:$0xff]
    %s67 = scalar_lea.vmem [#allocation3], 16
    %v68 = vld [vmem:[%s67] sm:$0xff]
    %v69 = vld [vmem:[%s67 + $0x8] sm:$0xff]
    %s70 = scalar_lea.vmem [#allocation3], 32
    %v71 = vld [vmem:[%s70] sm:$0xff]
    %v72 = vld [vmem:[%s70 + $0x8] sm:$0xff]
    %v73 = vmul.f32 %v65, %v65
    %v74 = vmul.f32 %v66, %v66
    %v75 = vmul.f32 %v68, %v68
    %v76 = vmul.f32 %v69, %v69
    %v77 = vadd.f32 %v73, %v75
    %v78 = vadd.f32 %v74, %v76
    %v79 = vmul.f32 %v71, %v71
    %v80 = vmul.f32 %v72, %v72
    %v81 = vadd.f32 %v77, %v79
    %v82 = vadd.f32 %v78, %v80
    %s83 = sld [smem:[#allocation9]]
    %s84 = sld [smem:[#allocation9 + $0x1]]
    %s85 = sld [smem:[#allocation9 + $0x2]]
    %v86 = vstv %s83
    %v87 = vmul.f32 %v65, %v86
    %v88 = vmul.f32 %v66, %v86
    %v89 = vstv %s84
    %v90 = vmul.f32 %v68, %v89
    %v91 = vmul.f32 %v69, %v89
    %v92 = vadd.f32 %v87, %v90
    %v93 = vadd.f32 %v88, %v91
    %v94 = vstv %s85
    %v95 = vmul.f32 %v71, %v94
    %v96 = vmul.f32 %v72, %v94
    %v97 = vadd.f32 %v92, %v95
    %v98 = vadd.f32 %v93, %v96
    %v99 = vmul.f32 %v97, 2.0
    %v100 = vmul.f32 %v98, 2.0
    %v101 = vsub.f32 %v81, %v99
    %v102 = vsub.f32 %v82, %v100
    %s103 = smul.f32 %s83, %s83
    %s104 = smul.f32 %s84, %s84
    %s105 = sadd.f32 %s103, %s104
    %s106 = smul.f32 %s85, %s85
    %s107 = sadd.f32 %s105, %s106
    %v108 = vstv %s107
    %v109 = vadd.f32 %v101, %v108
    %v110 = vadd.f32 %v102, %v108
    %v111 = vmax.f32 %v109, 0.0
    %v112 = vmax.f32 %v110, 0.0
    %v113 = vrsqrt.pop %v111
    %v114 = vmul.f32 %v111, %v113
    %vm115 = vcmp.eq.f32.partialorder %v111, inf
    %v116 = vsel %vm115, %v111, %v114
    %vm117 = vcmp.eq.f32.partialorder %v111, 0.0
    %v118 = vand.u32 %v111, 2147483648
    %v119 = vsel %vm117, %v118, %v116
    %v120 = vrsqrt.pop %v112
    %v121 = vmul.f32 %v112, %v120
    %vm122 = vcmp.eq.f32.partialorder %v112, inf
    %v123 = vsel %vm122, %v112, %v121
    %vm124 = vcmp.eq.f32.partialorder %v112, 0.0
    %v125 = vand.u32 %v112, 2147483648
    %v126 = vsel %vm124, %v125, %v123
    %v127 = vmul.f32 %v119, 8.333333
    %v128 = vmul.f32 %v126, 8.333333
    %v129 = vsub.f32 1.0, %v127
    %v130 = vsub.f32 1.0, %v128
    %v131 = vmax.f32 %v129, 0.0
    %v132 = vmax.f32 %v130, 0.0
    %v133 = vpack.c.bf16 %v132, %v131
    %v135 = vcombine.high %v133, %v133
    %v137 = vunpack.c.l.s4 1966171168
    %v138 = vunpack.c.0.s8 %v137
    %v139 = vlaneseq
    %v140 = vshrl.u32 %v139, 7
    %v141 = vsub.s32 %v138, %v140
    %v142 = vrot.slane %v133, %v141
    %v144 = vunpack.c.l.s4 1966171168
    %v145 = vunpack.c.0.s8 %v144
    %v146 = vlaneseq
    %v147 = vshrl.u32 %v146, 7
    %v148 = vsub.s32 %v145, %v147
    %v149 = vrot.slane %v135, %v148
    %v150 = vcombine.high %v142, %v142
    %v151 = vcombine.high %v149, %v149
    %v153 = vunpack.c.l.s4 1966171168
    %v154 = vunpack.c.0.s8 %v153
    %v155 = vlaneseq
    %v156 = vshrl.u32 %v155, 7
    %v157 = vsub.s32 %v154, %v156
    %v158 = vrot.slane %v142, %v157
    %v160 = vunpack.c.l.s4 1966171168
    %v161 = vunpack.c.0.s8 %v160
    %v162 = vlaneseq
    %v163 = vshrl.u32 %v162, 7
    %v164 = vsub.s32 %v161, %v163
    %v165 = vrot.slane %v149, %v164
    %v167 = vunpack.c.l.s4 1966171168
    %v168 = vunpack.c.0.s8 %v167
    %v169 = vlaneseq
    %v170 = vshrl.u32 %v169, 7
    %v171 = vsub.s32 %v168, %v170
    %v172 = vrot.slane %v150, %v171
    %v174 = vunpack.c.l.s4 1966171168
    %v175 = vunpack.c.0.s8 %v174
    %v176 = vlaneseq
    %v177 = vshrl.u32 %v176, 7
    %v178 = vsub.s32 %v175, %v177
    %v179 = vrot.slane %v151, %v178
    %v180 = vcombine.high %v158, %v158
    %v181 = vcombine.high %v165, %v165
    %v182 = vcombine.high %v172, %v172
    %v183 = vcombine.high %v179, %v179
    %v184 = vunpack.i.l.s16 %v158
    %v185 = vunpack.i.h.s16 %v158
    %v186 = vunpack.i.l.s16 %v172
    %v187 = vunpack.i.h.s16 %v172
    %v188 = vunpack.i.l.s16 %v180
    %v189 = vunpack.i.h.s16 %v180
    %v190 = vunpack.i.l.s16 %v182
    %v191 = vunpack.i.h.s16 %v182
    %v192 = vunpack.i.l.s16 %v165
    %v193 = vunpack.i.h.s16 %v165
    %v194 = vunpack.i.l.s16 %v179
    %v195 = vunpack.i.h.s16 %v179
    %v196 = vunpack.i.l.s16 %v181
    %v197 = vunpack.i.h.s16 %v181
    %v198 = vunpack.i.l.s16 %v183
    %v199 = vunpack.i.h.s16 %v183
    %v200 = vld [vmem:[#allocation7] sm:$0xf]
    %v201 = vld [vmem:[#allocation7 + $0x4] sm:$0xf]
    %v202 = vld [vmem:[#allocation7 + $0x8] sm:$0xf]
    %v203 = vld [vmem:[#allocation7 + $0xc] sm:$0xf]
    %v204 = vld [vmem:[#allocation7 + $0x10] sm:$0xf]
    %v205 = vld [vmem:[#allocation7 + $0x14] sm:$0xf]
    %v206 = vld [vmem:[#allocation7 + $0x18] sm:$0xf]
    %v207 = vld [vmem:[#allocation7 + $0x1c] sm:$0xf]
    %v208 = vld [vmem:[#allocation7 + $0x20] sm:$0xf]
    %v209 = vld [vmem:[#allocation7 + $0x24] sm:$0xf]
    %v210 = vld [vmem:[#allocation7 + $0x28] sm:$0xf]
    %v211 = vld [vmem:[#allocation7 + $0x2c] sm:$0xf]
    %v212 = vld [vmem:[#allocation7 + $0x30] sm:$0xf]
    %v213 = vld [vmem:[#allocation7 + $0x34] sm:$0xf]
    %v214 = vld [vmem:[#allocation7 + $0x38] sm:$0xf]
    %v215 = vld [vmem:[#allocation7 + $0x3c] sm:$0xf]
    %v216 = vpack.i.b16 %v184, %v184
    %v217 = vpack.i.b16 %v185, %v185
    %v218 = vpack.i.b16 %v186, %v186
    %v219 = vpack.i.b16 %v187, %v187
    %v220 = vpack.i.b16 %v188, %v188
    %v221 = vpack.i.b16 %v189, %v189
    %v222 = vpack.i.b16 %v190, %v190
    %v223 = vpack.i.b16 %v191, %v191
    %v224 = vpack.i.b16 %v192, %v192
    %v225 = vpack.i.b16 %v193, %v193
    %v226 = vpack.i.b16 %v194, %v194
    %v227 = vpack.i.b16 %v195, %v195
    %v228 = vpack.i.b16 %v196, %v196
    %v229 = vpack.i.b16 %v197, %v197
    %v230 = vpack.i.b16 %v198, %v198
    %v231 = vpack.i.b16 %v199, %v199
    %v232 = vlaneseq
    %v233 = vshrl.u32 %v232, 7
    %v234 = vsub.s32 0, %v233
    %v235 = vrot.slane %v216, %v234
    %v236 = vlaneseq
    %v237 = vshrl.u32 %v236, 7
    %v238 = vsub.s32 0, %v237
    %v239 = vrot.slane %v217, %v238
    %v240 = vlaneseq
    %v241 = vshrl.u32 %v240, 7
    %v242 = vsub.s32 0, %v241
    %v243 = vrot.slane %v218, %v242
    %v244 = vlaneseq
    %v245 = vshrl.u32 %v244, 7
    %v246 = vsub.s32 0, %v245
    %v247 = vrot.slane %v219, %v246
    %v248 = vlaneseq
    %v249 = vshrl.u32 %v248, 7
    %v250 = vsub.s32 0, %v249
    %v251 = vrot.slane %v220, %v250
    %v252 = vlaneseq
    %v253 = vshrl.u32 %v252, 7
    %v254 = vsub.s32 0, %v253
    %v255 = vrot.slane %v221, %v254
    %v256 = vlaneseq
    %v257 = vshrl.u32 %v256, 7
    %v258 = vsub.s32 0, %v257
    %v259 = vrot.slane %v222, %v258
    %v260 = vlaneseq
    %v261 = vshrl.u32 %v260, 7
    %v262 = vsub.s32 0, %v261
    %v263 = vrot.slane %v223, %v262
    %v264 = vlaneseq
    %v265 = vshrl.u32 %v264, 7
    %v266 = vsub.s32 0, %v265
    %v267 = vrot.slane %v224, %v266
    %v268 = vlaneseq
    %v269 = vshrl.u32 %v268, 7
    %v270 = vsub.s32 0, %v269
    %v271 = vrot.slane %v225, %v270
    %v272 = vlaneseq
    %v273 = vshrl.u32 %v272, 7
    %v274 = vsub.s32 0, %v273
    %v275 = vrot.slane %v226, %v274
    %v276 = vlaneseq
    %v277 = vshrl.u32 %v276, 7
    %v278 = vsub.s32 0, %v277
    %v279 = vrot.slane %v227, %v278
    %v280 = vlaneseq
    %v281 = vshrl.u32 %v280, 7
    %v282 = vsub.s32 0, %v281
    %v283 = vrot.slane %v228, %v282
    %v284 = vlaneseq
    %v285 = vshrl.u32 %v284, 7
    %v286 = vsub.s32 0, %v285
    %v287 = vrot.slane %v229, %v286
    %v288 = vlaneseq
    %v289 = vshrl.u32 %v288, 7
    %v290 = vsub.s32 0, %v289
    %v291 = vrot.slane %v230, %v290
    %v292 = vlaneseq
    %v293 = vshrl.u32 %v292, 7
    %v294 = vsub.s32 0, %v293
    %v295 = vrot.slane %v231, %v294
    %v297 = vpack.i.b16 %v235, %v235
    %v299 = vlaneseq
    %v300 = vshrl.u32 %v299, 7
    %v301 = vsub.s32 0, %v300
    %v302 = vrot.slane %v297, %v301
    %v304 = vpack.i.b16 %v239, %v239
    %v306 = vlaneseq
    %v307 = vshrl.u32 %v306, 7
    %v308 = vsub.s32 0, %v307
    %v309 = vrot.slane %v304, %v308
    %v311 = vpack.i.b16 %v243, %v243
    %v313 = vlaneseq
    %v314 = vshrl.u32 %v313, 7
    %v315 = vsub.s32 0, %v314
    %v316 = vrot.slane %v311, %v315
    %v318 = vpack.i.b16 %v247, %v247
    %v320 = vlaneseq
    %v321 = vshrl.u32 %v320, 7
    %v322 = vsub.s32 0, %v321
    %v323 = vrot.slane %v318, %v322
    %v325 = vpack.i.b16 %v251, %v251
    %v327 = vlaneseq
    %v328 = vshrl.u32 %v327, 7
    %v329 = vsub.s32 0, %v328
    %v330 = vrot.slane %v325, %v329
    %v332 = vpack.i.b16 %v255, %v255
    %v334 = vlaneseq
    %v335 = vshrl.u32 %v334, 7
    %v336 = vsub.s32 0, %v335
    %v337 = vrot.slane %v332, %v336
    %v339 = vpack.i.b16 %v259, %v259
    %v341 = vlaneseq
    %v342 = vshrl.u32 %v341, 7
    %v343 = vsub.s32 0, %v342
    %v344 = vrot.slane %v339, %v343
    %v346 = vpack.i.b16 %v263, %v263
    %v348 = vlaneseq
    %v349 = vshrl.u32 %v348, 7
    %v350 = vsub.s32 0, %v349
    %v351 = vrot.slane %v346, %v350
    %v353 = vpack.i.b16 %v267, %v267
    %v355 = vlaneseq
    %v356 = vshrl.u32 %v355, 7
    %v357 = vsub.s32 0, %v356
    %v358 = vrot.slane %v353, %v357
    %v360 = vpack.i.b16 %v271, %v271
    %v362 = vlaneseq
    %v363 = vshrl.u32 %v362, 7
    %v364 = vsub.s32 0, %v363
    %v365 = vrot.slane %v360, %v364
    %v367 = vpack.i.b16 %v275, %v275
    %v369 = vlaneseq
    %v370 = vshrl.u32 %v369, 7
    %v371 = vsub.s32 0, %v370
    %v372 = vrot.slane %v367, %v371
    %v374 = vpack.i.b16 %v279, %v279
    %v376 = vlaneseq
    %v377 = vshrl.u32 %v376, 7
    %v378 = vsub.s32 0, %v377
    %v379 = vrot.slane %v374, %v378
    %v381 = vpack.i.b16 %v283, %v283
    %v383 = vlaneseq
    %v384 = vshrl.u32 %v383, 7
    %v385 = vsub.s32 0, %v384
    %v386 = vrot.slane %v381, %v385
    %v388 = vpack.i.b16 %v287, %v287
    %v390 = vlaneseq
    %v391 = vshrl.u32 %v390, 7
    %v392 = vsub.s32 0, %v391
    %v393 = vrot.slane %v388, %v392
    %v395 = vpack.i.b16 %v291, %v291
    %v397 = vlaneseq
    %v398 = vshrl.u32 %v397, 7
    %v399 = vsub.s32 0, %v398
    %v400 = vrot.slane %v395, %v399
    %v402 = vpack.i.b16 %v295, %v295
    %v404 = vlaneseq
    %v405 = vshrl.u32 %v404, 7
    %v406 = vsub.s32 0, %v405
    %v407 = vrot.slane %v402, %v406
    %v408 = vmul.bf16 %v302, %v200
    %v409 = vmul.bf16 %v309, %v201
    %v410 = vmul.bf16 %v316, %v202
    %v411 = vmul.bf16 %v323, %v203
    %v412 = vmul.bf16 %v330, %v204
    %v413 = vmul.bf16 %v337, %v205
    %v414 = vmul.bf16 %v344, %v206
    %v415 = vmul.bf16 %v351, %v207
    %v416 = vmul.bf16 %v358, %v208
    %v417 = vmul.bf16 %v365, %v209
    %v418 = vmul.bf16 %v372, %v210
    %v419 = vmul.bf16 %v379, %v211
    %v420 = vmul.bf16 %v386, %v212
    %v421 = vmul.bf16 %v393, %v213
    %v422 = vmul.bf16 %v400, %v214
    %v423 = vmul.bf16 %v407, %v215
    %v424 = vunpack.c.l.bf16 %v408
    %v425 = vunpack.c.l.bf16 %v409
    %v426 = vunpack.c.l.bf16 %v410
    %v427 = vunpack.c.l.bf16 %v411
    %v428 = vunpack.c.l.bf16 %v412
    %v429 = vunpack.c.l.bf16 %v413
    %v430 = vunpack.c.l.bf16 %v414
    %v431 = vunpack.c.l.bf16 %v415
    %v432 = vunpack.c.l.bf16 %v416
    %v433 = vunpack.c.l.bf16 %v417
    %v434 = vunpack.c.l.bf16 %v418
    %v435 = vunpack.c.l.bf16 %v419
    %v436 = vunpack.c.l.bf16 %v420
    %v437 = vunpack.c.l.bf16 %v421
    %v438 = vunpack.c.l.bf16 %v422
    %v439 = vunpack.c.l.bf16 %v423
    %v440 = vadd.f32 %v424, %v425
    %v441 = vadd.f32 %v440, %v426
    %v442 = vadd.f32 %v441, %v427
    %v443 = vadd.f32 %v442, %v428
    %v444 = vadd.f32 %v443, %v429
    %v445 = vadd.f32 %v444, %v430
    %v446 = vadd.f32 %v445, %v431
    %v447 = vadd.f32 %v446, %v432
    %v448 = vadd.f32 %v447, %v433
    %v449 = vadd.f32 %v448, %v434
    %v450 = vadd.f32 %v449, %v435
    %v451 = vadd.f32 %v450, %v436
    %v452 = vadd.f32 %v451, %v437
    %v453 = vadd.f32 %v452, %v438
    %v454 = vadd.f32 %v453, %v439
    %455 = vst [vmem:[#allocation2] sm:$0xff] %v454
    %s456 = sld [smem:[#allocation9 + $0x80]]
    %s457 = sld [smem:[#allocation9 + $0x81]]
    %s458 = sld [smem:[#allocation9 + $0x82]]
    %v459 = vstv %s456
    %v460 = vmul.f32 %v65, %v459
    %v461 = vmul.f32 %v66, %v459
    %v462 = vstv %s457
    %v463 = vmul.f32 %v68, %v462
    %v464 = vmul.f32 %v69, %v462
    %v465 = vadd.f32 %v460, %v463
    %v466 = vadd.f32 %v461, %v464
    %v467 = vstv %s458
    %v468 = vmul.f32 %v71, %v467
    %v469 = vmul.f32 %v72, %v467
    %v470 = vadd.f32 %v465, %v468
    %v471 = vadd.f32 %v466, %v469
    %v472 = vmul.f32 %v470, 2.0
    %v473 = vmul.f32 %v471, 2.0
    %v474 = vsub.f32 %v81, %v472
    %v475 = vsub.f32 %v82, %v473
    %s476 = smul.f32 %s456, %s456
    %s477 = smul.f32 %s457, %s457
    %s478 = sadd.f32 %s476, %s477
    %s479 = smul.f32 %s458, %s458
    %s480 = sadd.f32 %s478, %s479
    %v481 = vstv %s480
    %v482 = vadd.f32 %v474, %v481
    %v483 = vadd.f32 %v475, %v481
    %v484 = vmax.f32 %v482, 0.0
    %v485 = vmax.f32 %v483, 0.0
    %v486 = vrsqrt.pop %v484
    %v487 = vmul.f32 %v484, %v486
    %vm488 = vcmp.eq.f32.partialorder %v484, inf
    %v489 = vsel %vm488, %v484, %v487
    %vm490 = vcmp.eq.f32.partialorder %v484, 0.0
    %v491 = vand.u32 %v484, 2147483648
    %v492 = vsel %vm490, %v491, %v489
    %v493 = vrsqrt.pop %v485
    %v494 = vmul.f32 %v485, %v493
    %vm495 = vcmp.eq.f32.partialorder %v485, inf
    %v496 = vsel %vm495, %v485, %v494
    %vm497 = vcmp.eq.f32.partialorder %v485, 0.0
    %v498 = vand.u32 %v485, 2147483648
    %v499 = vsel %vm497, %v498, %v496
    %v500 = vmul.f32 %v492, 8.333333
    %v501 = vmul.f32 %v499, 8.333333
    %v502 = vsub.f32 1.0, %v500
    %v503 = vsub.f32 1.0, %v501
    %v504 = vmax.f32 %v502, 0.0
    %v505 = vmax.f32 %v503, 0.0
    %v506 = vpack.c.bf16 %v505, %v504
    %v508 = vcombine.high %v506, %v506
    %v510 = vunpack.c.l.s4 1966171168
    %v511 = vunpack.c.0.s8 %v510
    %v512 = vlaneseq
    %v513 = vshrl.u32 %v512, 7
    %v514 = vsub.s32 %v511, %v513
    %v515 = vrot.slane %v506, %v514
    %v517 = vunpack.c.l.s4 1966171168
    %v518 = vunpack.c.0.s8 %v517
    %v519 = vlaneseq
    %v520 = vshrl.u32 %v519, 7
    %v521 = vsub.s32 %v518, %v520
    %v522 = vrot.slane %v508, %v521
    %v523 = vcombine.high %v515, %v515
    %v524 = vcombine.high %v522, %v522
    %v526 = vunpack.c.l.s4 1966171168
    %v527 = vunpack.c.0.s8 %v526
    %v528 = vlaneseq
    %v529 = vshrl.u32 %v528, 7
    %v530 = vsub.s32 %v527, %v529
    %v531 = vrot.slane %v515, %v530
    %v533 = vunpack.c.l.s4 1966171168
    %v534 = vunpack.c.0.s8 %v533
    %v535 = vlaneseq
    %v536 = vshrl.u32 %v535, 7
    %v537 = vsub.s32 %v534, %v536
    %v538 = vrot.slane %v522, %v537
    %v540 = vunpack.c.l.s4 1966171168
    %v541 = vunpack.c.0.s8 %v540
    %v542 = vlaneseq
    %v543 = vshrl.u32 %v542, 7
    %v544 = vsub.s32 %v541, %v543
    %v545 = vrot.slane %v523, %v544
    %v547 = vunpack.c.l.s4 1966171168
    %v548 = vunpack.c.0.s8 %v547
    %v549 = vlaneseq
    %v550 = vshrl.u32 %v549, 7
    %v551 = vsub.s32 %v548, %v550
    %v552 = vrot.slane %v524, %v551
    %v553 = vcombine.high %v531, %v531
    %v554 = vcombine.high %v538, %v538
    %v555 = vcombine.high %v545, %v545
    %v556 = vcombine.high %v552, %v552
    %v557 = vunpack.i.l.s16 %v531
    %v558 = vunpack.i.h.s16 %v531
    %v559 = vunpack.i.l.s16 %v545
    %v560 = vunpack.i.h.s16 %v545
    %v561 = vunpack.i.l.s16 %v553
    %v562 = vunpack.i.h.s16 %v553
    %v563 = vunpack.i.l.s16 %v555
    %v564 = vunpack.i.h.s16 %v555
    %v565 = vunpack.i.l.s16 %v538
    %v566 = vunpack.i.h.s16 %v538
    %v567 = vunpack.i.l.s16 %v552
    %v568 = vunpack.i.h.s16 %v552
    %v569 = vunpack.i.l.s16 %v554
    %v570 = vunpack.i.h.s16 %v554
    %v571 = vunpack.i.l.s16 %v556
    %v572 = vunpack.i.h.s16 %v556
    %v573 = vld [vmem:[#allocation7] sm:$0xf]
    %v574 = vld [vmem:[#allocation7 + $0x4] sm:$0xf]
    %v575 = vld [vmem:[#allocation7 + $0x8] sm:$0xf]
    %v576 = vld [vmem:[#allocation7 + $0xc] sm:$0xf]
    %v577 = vld [vmem:[#allocation7 + $0x10] sm:$0xf]
    %v578 = vld [vmem:[#allocation7 + $0x14] sm:$0xf]
    %v579 = vld [vmem:[#allocation7 + $0x18] sm:$0xf]
    %v580 = vld [vmem:[#allocation7 + $0x1c] sm:$0xf]
    %v581 = vld [vmem:[#allocation7 + $0x20] sm:$0xf]
    %v582 = vld [vmem:[#allocation7 + $0x24] sm:$0xf]
    %v583 = vld [vmem:[#allocation7 + $0x28] sm:$0xf]
    %v584 = vld [vmem:[#allocation7 + $0x2c] sm:$0xf]
    %v585 = vld [vmem:[#allocation7 + $0x30] sm:$0xf]
    %v586 = vld [vmem:[#allocation7 + $0x34] sm:$0xf]
    %v587 = vld [vmem:[#allocation7 + $0x38] sm:$0xf]
    %v588 = vld [vmem:[#allocation7 + $0x3c] sm:$0xf]
    %v589 = vpack.i.b16 %v557, %v557
    %v590 = vpack.i.b16 %v558, %v558
    %v591 = vpack.i.b16 %v559, %v559
    %v592 = vpack.i.b16 %v560, %v560
    %v593 = vpack.i.b16 %v561, %v561
    %v594 = vpack.i.b16 %v562, %v562
    %v595 = vpack.i.b16 %v563, %v563
    %v596 = vpack.i.b16 %v564, %v564
    %v597 = vpack.i.b16 %v565, %v565
    %v598 = vpack.i.b16 %v566, %v566
    %v599 = vpack.i.b16 %v567, %v567
    %v600 = vpack.i.b16 %v568, %v568
    %v601 = vpack.i.b16 %v569, %v569
    %v602 = vpack.i.b16 %v570, %v570
    %v603 = vpack.i.b16 %v571, %v571
    %v604 = vpack.i.b16 %v572, %v572
    %v605 = vlaneseq
    %v606 = vshrl.u32 %v605, 7
    %v607 = vsub.s32 0, %v606
    %v608 = vrot.slane %v589, %v607
    %v609 = vlaneseq
    %v610 = vshrl.u32 %v609, 7
    %v611 = vsub.s32 0, %v610
    %v612 = vrot.slane %v590, %v611
    %v613 = vlaneseq
    %v614 = vshrl.u32 %v613, 7
    %v615 = vsub.s32 0, %v614
    %v616 = vrot.slane %v591, %v615
    %v617 = vlaneseq
    %v618 = vshrl.u32 %v617, 7
    %v619 = vsub.s32 0, %v618
    %v620 = vrot.slane %v592, %v619
    %v621 = vlaneseq
    %v622 = vshrl.u32 %v621, 7
    %v623 = vsub.s32 0, %v622
    %v624 = vrot.slane %v593, %v623
    %v625 = vlaneseq
    %v626 = vshrl.u32 %v625, 7
    %v627 = vsub.s32 0, %v626
    %v628 = vrot.slane %v594, %v627
    %v629 = vlaneseq
    %v630 = vshrl.u32 %v629, 7
    %v631 = vsub.s32 0, %v630
    %v632 = vrot.slane %v595, %v631
    %v633 = vlaneseq
    %v634 = vshrl.u32 %v633, 7
    %v635 = vsub.s32 0, %v634
    %v636 = vrot.slane %v596, %v635
    %v637 = vlaneseq
    %v638 = vshrl.u32 %v637, 7
    %v639 = vsub.s32 0, %v638
    %v640 = vrot.slane %v597, %v639
    %v641 = vlaneseq
    %v642 = vshrl.u32 %v641, 7
    %v643 = vsub.s32 0, %v642
    %v644 = vrot.slane %v598, %v643
    %v645 = vlaneseq
    %v646 = vshrl.u32 %v645, 7
    %v647 = vsub.s32 0, %v646
    %v648 = vrot.slane %v599, %v647
    %v649 = vlaneseq
    %v650 = vshrl.u32 %v649, 7
    %v651 = vsub.s32 0, %v650
    %v652 = vrot.slane %v600, %v651
    %v653 = vlaneseq
    %v654 = vshrl.u32 %v653, 7
    %v655 = vsub.s32 0, %v654
    %v656 = vrot.slane %v601, %v655
    %v657 = vlaneseq
    %v658 = vshrl.u32 %v657, 7
    %v659 = vsub.s32 0, %v658
    %v660 = vrot.slane %v602, %v659
    %v661 = vlaneseq
    %v662 = vshrl.u32 %v661, 7
    %v663 = vsub.s32 0, %v662
    %v664 = vrot.slane %v603, %v663
    %v665 = vlaneseq
    %v666 = vshrl.u32 %v665, 7
    %v667 = vsub.s32 0, %v666
    %v668 = vrot.slane %v604, %v667
    %v670 = vpack.i.b16 %v608, %v608
    %v672 = vlaneseq
    %v673 = vshrl.u32 %v672, 7
    %v674 = vsub.s32 0, %v673
    %v675 = vrot.slane %v670, %v674
    %v677 = vpack.i.b16 %v612, %v612
    %v679 = vlaneseq
    %v680 = vshrl.u32 %v679, 7
    %v681 = vsub.s32 0, %v680
    %v682 = vrot.slane %v677, %v681
    %v684 = vpack.i.b16 %v616, %v616
    %v686 = vlaneseq
    %v687 = vshrl.u32 %v686, 7
    %v688 = vsub.s32 0, %v687
    %v689 = vrot.slane %v684, %v688
    %v691 = vpack.i.b16 %v620, %v620
    %v693 = vlaneseq
    %v694 = vshrl.u32 %v693, 7
    %v695 = vsub.s32 0, %v694
    %v696 = vrot.slane %v691, %v695
    %v698 = vpack.i.b16 %v624, %v624
    %v700 = vlaneseq
    %v701 = vshrl.u32 %v700, 7
    %v702 = vsub.s32 0, %v701
    %v703 = vrot.slane %v698, %v702
    %v705 = vpack.i.b16 %v628, %v628
    %v707 = vlaneseq
    %v708 = vshrl.u32 %v707, 7
    %v709 = vsub.s32 0, %v708
    %v710 = vrot.slane %v705, %v709
    %v712 = vpack.i.b16 %v632, %v632
    %v714 = vlaneseq
    %v715 = vshrl.u32 %v714, 7
    %v716 = vsub.s32 0, %v715
    %v717 = vrot.slane %v712, %v716
    %v719 = vpack.i.b16 %v636, %v636
    %v721 = vlaneseq
    %v722 = vshrl.u32 %v721, 7
    %v723 = vsub.s32 0, %v722
    %v724 = vrot.slane %v719, %v723
    %v726 = vpack.i.b16 %v640, %v640
    %v728 = vlaneseq
    %v729 = vshrl.u32 %v728, 7
    %v730 = vsub.s32 0, %v729
    %v731 = vrot.slane %v726, %v730
    %v733 = vpack.i.b16 %v644, %v644
    %v735 = vlaneseq
    %v736 = vshrl.u32 %v735, 7
    %v737 = vsub.s32 0, %v736
    %v738 = vrot.slane %v733, %v737
    %v740 = vpack.i.b16 %v648, %v648
    %v742 = vlaneseq
    %v743 = vshrl.u32 %v742, 7
    %v744 = vsub.s32 0, %v743
    %v745 = vrot.slane %v740, %v744
    %v747 = vpack.i.b16 %v652, %v652
    %v749 = vlaneseq
    %v750 = vshrl.u32 %v749, 7
    %v751 = vsub.s32 0, %v750
    %v752 = vrot.slane %v747, %v751
    %v754 = vpack.i.b16 %v656, %v656
    %v756 = vlaneseq
    %v757 = vshrl.u32 %v756, 7
    %v758 = vsub.s32 0, %v757
    %v759 = vrot.slane %v754, %v758
    %v761 = vpack.i.b16 %v660, %v660
    %v763 = vlaneseq
    %v764 = vshrl.u32 %v763, 7
    %v765 = vsub.s32 0, %v764
    %v766 = vrot.slane %v761, %v765
    %v768 = vpack.i.b16 %v664, %v664
    %v770 = vlaneseq
    %v771 = vshrl.u32 %v770, 7
    %v772 = vsub.s32 0, %v771
    %v773 = vrot.slane %v768, %v772
    %v775 = vpack.i.b16 %v668, %v668
    %v777 = vlaneseq
    %v778 = vshrl.u32 %v777, 7
    %v779 = vsub.s32 0, %v778
    %v780 = vrot.slane %v775, %v779
    %v781 = vmul.bf16 %v675, %v573
    %v782 = vmul.bf16 %v682, %v574
    %v783 = vmul.bf16 %v689, %v575
    %v784 = vmul.bf16 %v696, %v576
    %v785 = vmul.bf16 %v703, %v577
    %v786 = vmul.bf16 %v710, %v578
    %v787 = vmul.bf16 %v717, %v579
    %v788 = vmul.bf16 %v724, %v580
    %v789 = vmul.bf16 %v731, %v581
    %v790 = vmul.bf16 %v738, %v582
    %v791 = vmul.bf16 %v745, %v583
    %v792 = vmul.bf16 %v752, %v584
    %v793 = vmul.bf16 %v759, %v585
    %v794 = vmul.bf16 %v766, %v586
    %v795 = vmul.bf16 %v773, %v587
    %v796 = vmul.bf16 %v780, %v588
    %v797 = vunpack.c.l.bf16 %v781
    %v798 = vunpack.c.l.bf16 %v782
    %v799 = vunpack.c.l.bf16 %v783
    %v800 = vunpack.c.l.bf16 %v784
    %v801 = vunpack.c.l.bf16 %v785
    %v802 = vunpack.c.l.bf16 %v786
    %v803 = vunpack.c.l.bf16 %v787
    %v804 = vunpack.c.l.bf16 %v788
    %v805 = vunpack.c.l.bf16 %v789
    %v806 = vunpack.c.l.bf16 %v790
    %v807 = vunpack.c.l.bf16 %v791
    %v808 = vunpack.c.l.bf16 %v792
    %v809 = vunpack.c.l.bf16 %v793
    %v810 = vunpack.c.l.bf16 %v794
    %v811 = vunpack.c.l.bf16 %v795
    %v812 = vunpack.c.l.bf16 %v796
    %v813 = vadd.f32 %v797, %v798
    %v814 = vadd.f32 %v813, %v799
    %v815 = vadd.f32 %v814, %v800
    %v816 = vadd.f32 %v815, %v801
    %v817 = vadd.f32 %v816, %v802
    %v818 = vadd.f32 %v817, %v803
    %v819 = vadd.f32 %v818, %v804
    %v820 = vadd.f32 %v819, %v805
    %v821 = vadd.f32 %v820, %v806
    %v822 = vadd.f32 %v821, %v807
    %v823 = vadd.f32 %v822, %v808
    %v824 = vadd.f32 %v823, %v809
    %v825 = vadd.f32 %v824, %v810
    %v826 = vadd.f32 %v825, %v811
    %v827 = vadd.f32 %v826, %v812
    %828 = vst [vmem:[#allocation2 + $0x8] sm:$0xff] %v827
    %s829 = sld [smem:[#allocation9 + $0x100]]
    %s830 = sld [smem:[#allocation9 + $0x101]]
    %s831 = sld [smem:[#allocation9 + $0x102]]
    %v832 = vstv %s829
    %v833 = vmul.f32 %v65, %v832
    %v834 = vmul.f32 %v66, %v832
    %v835 = vstv %s830
    %v836 = vmul.f32 %v68, %v835
    %v837 = vmul.f32 %v69, %v835
    %v838 = vadd.f32 %v833, %v836
    %v839 = vadd.f32 %v834, %v837
    %v840 = vstv %s831
    %v841 = vmul.f32 %v71, %v840
    %v842 = vmul.f32 %v72, %v840
    %v843 = vadd.f32 %v838, %v841
    %v844 = vadd.f32 %v839, %v842
    %v845 = vmul.f32 %v843, 2.0
    %v846 = vmul.f32 %v844, 2.0
    %v847 = vsub.f32 %v81, %v845
    %v848 = vsub.f32 %v82, %v846
    %s849 = smul.f32 %s829, %s829
    %s850 = smul.f32 %s830, %s830
    %s851 = sadd.f32 %s849, %s850
    %s852 = smul.f32 %s831, %s831
    %s853 = sadd.f32 %s851, %s852
    %v854 = vstv %s853
    %v855 = vadd.f32 %v847, %v854
    %v856 = vadd.f32 %v848, %v854
    %v857 = vmax.f32 %v855, 0.0
    %v858 = vmax.f32 %v856, 0.0
    %v859 = vrsqrt.pop %v857
    %v860 = vmul.f32 %v857, %v859
    %vm861 = vcmp.eq.f32.partialorder %v857, inf
    %v862 = vsel %vm861, %v857, %v860
    %vm863 = vcmp.eq.f32.partialorder %v857, 0.0
    %v864 = vand.u32 %v857, 2147483648
    %v865 = vsel %vm863, %v864, %v862
    %v866 = vrsqrt.pop %v858
    %v867 = vmul.f32 %v858, %v866
    %vm868 = vcmp.eq.f32.partialorder %v858, inf
    %v869 = vsel %vm868, %v858, %v867
    %vm870 = vcmp.eq.f32.partialorder %v858, 0.0
    %v871 = vand.u32 %v858, 2147483648
    %v872 = vsel %vm870, %v871, %v869
    %v873 = vmul.f32 %v865, 8.333333
    %v874 = vmul.f32 %v872, 8.333333
    %v875 = vsub.f32 1.0, %v873
    %v876 = vsub.f32 1.0, %v874
    %v877 = vmax.f32 %v875, 0.0
    %v878 = vmax.f32 %v876, 0.0
    %v879 = vpack.c.bf16 %v878, %v877
    %v881 = vcombine.high %v879, %v879
    %v883 = vunpack.c.l.s4 1966171168
    %v884 = vunpack.c.0.s8 %v883
    %v885 = vlaneseq
    %v886 = vshrl.u32 %v885, 7
    %v887 = vsub.s32 %v884, %v886
    %v888 = vrot.slane %v879, %v887
    %v890 = vunpack.c.l.s4 1966171168
    %v891 = vunpack.c.0.s8 %v890
    %v892 = vlaneseq
    %v893 = vshrl.u32 %v892, 7
    %v894 = vsub.s32 %v891, %v893
    %v895 = vrot.slane %v881, %v894
    %v896 = vcombine.high %v888, %v888
    %v897 = vcombine.high %v895, %v895
    %v899 = vunpack.c.l.s4 1966171168
    %v900 = vunpack.c.0.s8 %v899
    %v901 = vlaneseq
    %v902 = vshrl.u32 %v901, 7
    %v903 = vsub.s32 %v900, %v902
    %v904 = vrot.slane %v888, %v903
    %v906 = vunpack.c.l.s4 1966171168
    %v907 = vunpack.c.0.s8 %v906
    %v908 = vlaneseq
    %v909 = vshrl.u32 %v908, 7
    %v910 = vsub.s32 %v907, %v909
    %v911 = vrot.slane %v895, %v910
    %v913 = vunpack.c.l.s4 1966171168
    %v914 = vunpack.c.0.s8 %v913
    %v915 = vlaneseq
    %v916 = vshrl.u32 %v915, 7
    %v917 = vsub.s32 %v914, %v916
    %v918 = vrot.slane %v896, %v917
    %v920 = vunpack.c.l.s4 1966171168
    %v921 = vunpack.c.0.s8 %v920
    %v922 = vlaneseq
    %v923 = vshrl.u32 %v922, 7
    %v924 = vsub.s32 %v921, %v923
    %v925 = vrot.slane %v897, %v924
    %v926 = vcombine.high %v904, %v904
    %v927 = vcombine.high %v911, %v911
    %v928 = vcombine.high %v918, %v918
    %v929 = vcombine.high %v925, %v925
    %v930 = vunpack.i.l.s16 %v904
    %v931 = vunpack.i.h.s16 %v904
    %v932 = vunpack.i.l.s16 %v918
    %v933 = vunpack.i.h.s16 %v918
    %v934 = vunpack.i.l.s16 %v926
    %v935 = vunpack.i.h.s16 %v926
    %v936 = vunpack.i.l.s16 %v928
    %v937 = vunpack.i.h.s16 %v928
    %v938 = vunpack.i.l.s16 %v911
    %v939 = vunpack.i.h.s16 %v911
    %v940 = vunpack.i.l.s16 %v925
    %v941 = vunpack.i.h.s16 %v925
    %v942 = vunpack.i.l.s16 %v927
    %v943 = vunpack.i.h.s16 %v927
    %v944 = vunpack.i.l.s16 %v929
    %v945 = vunpack.i.h.s16 %v929
    %v946 = vld [vmem:[#allocation7] sm:$0xf]
    %v947 = vld [vmem:[#allocation7 + $0x4] sm:$0xf]
    %v948 = vld [vmem:[#allocation7 + $0x8] sm:$0xf]
    %v949 = vld [vmem:[#allocation7 + $0xc] sm:$0xf]
    %v950 = vld [vmem:[#allocation7 + $0x10] sm:$0xf]
    %v951 = vld [vmem:[#allocation7 + $0x14] sm:$0xf]
    %v952 = vld [vmem:[#allocation7 + $0x18] sm:$0xf]
    %v953 = vld [vmem:[#allocation7 + $0x1c] sm:$0xf]
    %v954 = vld [vmem:[#allocation7 + $0x20] sm:$0xf]
    %v955 = vld [vmem:[#allocation7 + $0x24] sm:$0xf]
    %v956 = vld [vmem:[#allocation7 + $0x28] sm:$0xf]
    %v957 = vld [vmem:[#allocation7 + $0x2c] sm:$0xf]
    %v958 = vld [vmem:[#allocation7 + $0x30] sm:$0xf]
    %v959 = vld [vmem:[#allocation7 + $0x34] sm:$0xf]
    %v960 = vld [vmem:[#allocation7 + $0x38] sm:$0xf]
    %v961 = vld [vmem:[#allocation7 + $0x3c] sm:$0xf]
    %v962 = vpack.i.b16 %v930, %v930
    %v963 = vpack.i.b16 %v931, %v931
    %v964 = vpack.i.b16 %v932, %v932
    %v965 = vpack.i.b16 %v933, %v933
    %v966 = vpack.i.b16 %v934, %v934
    %v967 = vpack.i.b16 %v935, %v935
    %v968 = vpack.i.b16 %v936, %v936
    %v969 = vpack.i.b16 %v937, %v937
    %v970 = vpack.i.b16 %v938, %v938
    %v971 = vpack.i.b16 %v939, %v939
    %v972 = vpack.i.b16 %v940, %v940
    %v973 = vpack.i.b16 %v941, %v941
    %v974 = vpack.i.b16 %v942, %v942
    %v975 = vpack.i.b16 %v943, %v943
    %v976 = vpack.i.b16 %v944, %v944
    %v977 = vpack.i.b16 %v945, %v945
    %v978 = vlaneseq
    %v979 = vshrl.u32 %v978, 7
    %v980 = vsub.s32 0, %v979
    %v981 = vrot.slane %v962, %v980
    %v982 = vlaneseq
    %v983 = vshrl.u32 %v982, 7
    %v984 = vsub.s32 0, %v983
    %v985 = vrot.slane %v963, %v984
    %v986 = vlaneseq
    %v987 = vshrl.u32 %v986, 7
    %v988 = vsub.s32 0, %v987
    %v989 = vrot.slane %v964, %v988
    %v990 = vlaneseq
    %v991 = vshrl.u32 %v990, 7
    %v992 = vsub.s32 0, %v991
    %v993 = vrot.slane %v965, %v992
    %v994 = vlaneseq
    %v995 = vshrl.u32 %v994, 7
    %v996 = vsub.s32 0, %v995
    %v997 = vrot.slane %v966, %v996
    %v998 = vlaneseq
    %v999 = vshrl.u32 %v998, 7
    %v1000 = vsub.s32 0, %v999
    %v1001 = vrot.slane %v967, %v1000
    %v1002 = vlaneseq
    %v1003 = vshrl.u32 %v1002, 7
    %v1004 = vsub.s32 0, %v1003
    %v1005 = vrot.slane %v968, %v1004
    %v1006 = vlaneseq
    %v1007 = vshrl.u32 %v1006, 7
    %v1008 = vsub.s32 0, %v1007
    %v1009 = vrot.slane %v969, %v1008
    %v1010 = vlaneseq
    %v1011 = vshrl.u32 %v1010, 7
    %v1012 = vsub.s32 0, %v1011
    %v1013 = vrot.slane %v970, %v1012
    %v1014 = vlaneseq
    %v1015 = vshrl.u32 %v1014, 7
    %v1016 = vsub.s32 0, %v1015
    %v1017 = vrot.slane %v971, %v1016
    %v1018 = vlaneseq
    %v1019 = vshrl.u32 %v1018, 7
    %v1020 = vsub.s32 0, %v1019
    %v1021 = vrot.slane %v972, %v1020
    %v1022 = vlaneseq
    %v1023 = vshrl.u32 %v1022, 7
    %v1024 = vsub.s32 0, %v1023
    %v1025 = vrot.slane %v973, %v1024
    %v1026 = vlaneseq
    %v1027 = vshrl.u32 %v1026, 7
    %v1028 = vsub.s32 0, %v1027
    %v1029 = vrot.slane %v974, %v1028
    %v1030 = vlaneseq
    %v1031 = vshrl.u32 %v1030, 7
    %v1032 = vsub.s32 0, %v1031
    %v1033 = vrot.slane %v975, %v1032
    %v1034 = vlaneseq
    %v1035 = vshrl.u32 %v1034, 7
    %v1036 = vsub.s32 0, %v1035
    %v1037 = vrot.slane %v976, %v1036
    %v1038 = vlaneseq
    %v1039 = vshrl.u32 %v1038, 7
    %v1040 = vsub.s32 0, %v1039
    %v1041 = vrot.slane %v977, %v1040
    %v1043 = vpack.i.b16 %v981, %v981
    %v1045 = vlaneseq
    %v1046 = vshrl.u32 %v1045, 7
    %v1047 = vsub.s32 0, %v1046
    %v1048 = vrot.slane %v1043, %v1047
    %v1050 = vpack.i.b16 %v985, %v985
    %v1052 = vlaneseq
    %v1053 = vshrl.u32 %v1052, 7
    %v1054 = vsub.s32 0, %v1053
    %v1055 = vrot.slane %v1050, %v1054
    %v1057 = vpack.i.b16 %v989, %v989
    %v1059 = vlaneseq
    %v1060 = vshrl.u32 %v1059, 7
    %v1061 = vsub.s32 0, %v1060
    %v1062 = vrot.slane %v1057, %v1061
    %v1064 = vpack.i.b16 %v993, %v993
    %v1066 = vlaneseq
    %v1067 = vshrl.u32 %v1066, 7
    %v1068 = vsub.s32 0, %v1067
    %v1069 = vrot.slane %v1064, %v1068
    %v1071 = vpack.i.b16 %v997, %v997
    %v1073 = vlaneseq
    %v1074 = vshrl.u32 %v1073, 7
    %v1075 = vsub.s32 0, %v1074
    %v1076 = vrot.slane %v1071, %v1075
    %v1078 = vpack.i.b16 %v1001, %v1001
    %v1080 = vlaneseq
    %v1081 = vshrl.u32 %v1080, 7
    %v1082 = vsub.s32 0, %v1081
    %v1083 = vrot.slane %v1078, %v1082
    %v1085 = vpack.i.b16 %v1005, %v1005
    %v1087 = vlaneseq
    %v1088 = vshrl.u32 %v1087, 7
    %v1089 = vsub.s32 0, %v1088
    %v1090 = vrot.slane %v1085, %v1089
    %v1092 = vpack.i.b16 %v1009, %v1009
    %v1094 = vlaneseq
    %v1095 = vshrl.u32 %v1094, 7
    %v1096 = vsub.s32 0, %v1095
    %v1097 = vrot.slane %v1092, %v1096
    %v1099 = vpack.i.b16 %v1013, %v1013
    %v1101 = vlaneseq
    %v1102 = vshrl.u32 %v1101, 7
    %v1103 = vsub.s32 0, %v1102
    %v1104 = vrot.slane %v1099, %v1103
    %v1106 = vpack.i.b16 %v1017, %v1017
    %v1108 = vlaneseq
    %v1109 = vshrl.u32 %v1108, 7
    %v1110 = vsub.s32 0, %v1109
    %v1111 = vrot.slane %v1106, %v1110
    %v1113 = vpack.i.b16 %v1021, %v1021
    %v1115 = vlaneseq
    %v1116 = vshrl.u32 %v1115, 7
    %v1117 = vsub.s32 0, %v1116
    %v1118 = vrot.slane %v1113, %v1117
    %v1120 = vpack.i.b16 %v1025, %v1025
    %v1122 = vlaneseq
    %v1123 = vshrl.u32 %v1122, 7
    %v1124 = vsub.s32 0, %v1123
    %v1125 = vrot.slane %v1120, %v1124
    %v1127 = vpack.i.b16 %v1029, %v1029
    %v1129 = vlaneseq
    %v1130 = vshrl.u32 %v1129, 7
    %v1131 = vsub.s32 0, %v1130
    %v1132 = vrot.slane %v1127, %v1131
    %v1134 = vpack.i.b16 %v1033, %v1033
    %v1136 = vlaneseq
    %v1137 = vshrl.u32 %v1136, 7
    %v1138 = vsub.s32 0, %v1137
    %v1139 = vrot.slane %v1134, %v1138
    %v1141 = vpack.i.b16 %v1037, %v1037
    %v1143 = vlaneseq
    %v1144 = vshrl.u32 %v1143, 7
    %v1145 = vsub.s32 0, %v1144
    %v1146 = vrot.slane %v1141, %v1145
    %v1148 = vpack.i.b16 %v1041, %v1041
    %v1150 = vlaneseq
    %v1151 = vshrl.u32 %v1150, 7
    %v1152 = vsub.s32 0, %v1151
    %v1153 = vrot.slane %v1148, %v1152
    %v1154 = vmul.bf16 %v1048, %v946
    %v1155 = vmul.bf16 %v1055, %v947
    %v1156 = vmul.bf16 %v1062, %v948
    %v1157 = vmul.bf16 %v1069, %v949
    %v1158 = vmul.bf16 %v1076, %v950
    %v1159 = vmul.bf16 %v1083, %v951
    %v1160 = vmul.bf16 %v1090, %v952
    %v1161 = vmul.bf16 %v1097, %v953
    %v1162 = vmul.bf16 %v1104, %v954
    %v1163 = vmul.bf16 %v1111, %v955
    %v1164 = vmul.bf16 %v1118, %v956
    %v1165 = vmul.bf16 %v1125, %v957
    %v1166 = vmul.bf16 %v1132, %v958
    %v1167 = vmul.bf16 %v1139, %v959
    %v1168 = vmul.bf16 %v1146, %v960
    %v1169 = vmul.bf16 %v1153, %v961
    %v1170 = vunpack.c.l.bf16 %v1154
    %v1171 = vunpack.c.l.bf16 %v1155
    %v1172 = vunpack.c.l.bf16 %v1156
    %v1173 = vunpack.c.l.bf16 %v1157
    %v1174 = vunpack.c.l.bf16 %v1158
    %v1175 = vunpack.c.l.bf16 %v1159
    %v1176 = vunpack.c.l.bf16 %v1160
    %v1177 = vunpack.c.l.bf16 %v1161
    %v1178 = vunpack.c.l.bf16 %v1162
    %v1179 = vunpack.c.l.bf16 %v1163
    %v1180 = vunpack.c.l.bf16 %v1164
    %v1181 = vunpack.c.l.bf16 %v1165
    %v1182 = vunpack.c.l.bf16 %v1166
    %v1183 = vunpack.c.l.bf16 %v1167
    %v1184 = vunpack.c.l.bf16 %v1168
    %v1185 = vunpack.c.l.bf16 %v1169
    %v1186 = vadd.f32 %v1170, %v1171
    %v1187 = vadd.f32 %v1186, %v1172
    %v1188 = vadd.f32 %v1187, %v1173
    %v1189 = vadd.f32 %v1188, %v1174
    %v1190 = vadd.f32 %v1189, %v1175
    %v1191 = vadd.f32 %v1190, %v1176
    %v1192 = vadd.f32 %v1191, %v1177
    %v1193 = vadd.f32 %v1192, %v1178
    %v1194 = vadd.f32 %v1193, %v1179
    %v1195 = vadd.f32 %v1194, %v1180
    %v1196 = vadd.f32 %v1195, %v1181
    %v1197 = vadd.f32 %v1196, %v1182
    %v1198 = vadd.f32 %v1197, %v1183
    %v1199 = vadd.f32 %v1198, %v1184
    %v1200 = vadd.f32 %v1199, %v1185
    %1201 = vst [vmem:[#allocation2 + $0x10] sm:$0xff] %v1200
    %s1202 = sld [smem:[#allocation9 + $0x180]]
    %s1203 = sld [smem:[#allocation9 + $0x181]]
    %s1204 = sld [smem:[#allocation9 + $0x182]]
    %v1205 = vstv %s1202
    %v1206 = vmul.f32 %v65, %v1205
    %v1207 = vmul.f32 %v66, %v1205
    %v1208 = vstv %s1203
    %v1209 = vmul.f32 %v68, %v1208
    %v1210 = vmul.f32 %v69, %v1208
    %v1211 = vadd.f32 %v1206, %v1209
    %v1212 = vadd.f32 %v1207, %v1210
    %v1213 = vstv %s1204
    %v1214 = vmul.f32 %v71, %v1213
    %v1215 = vmul.f32 %v72, %v1213
    %v1216 = vadd.f32 %v1211, %v1214
    %v1217 = vadd.f32 %v1212, %v1215
    %v1218 = vmul.f32 %v1216, 2.0
    %v1219 = vmul.f32 %v1217, 2.0
    %v1220 = vsub.f32 %v81, %v1218
    %v1221 = vsub.f32 %v82, %v1219
    %s1222 = smul.f32 %s1202, %s1202
    %s1223 = smul.f32 %s1203, %s1203
    %s1224 = sadd.f32 %s1222, %s1223
    %s1225 = smul.f32 %s1204, %s1204
    %s1226 = sadd.f32 %s1224, %s1225
    %v1227 = vstv %s1226
    %v1228 = vadd.f32 %v1220, %v1227
    %v1229 = vadd.f32 %v1221, %v1227
    %v1230 = vmax.f32 %v1228, 0.0
    %v1231 = vmax.f32 %v1229, 0.0
    %v1232 = vrsqrt.pop %v1230
    %v1233 = vmul.f32 %v1230, %v1232
    %vm1234 = vcmp.eq.f32.partialorder %v1230, inf
    %v1235 = vsel %vm1234, %v1230, %v1233
    %vm1236 = vcmp.eq.f32.partialorder %v1230, 0.0
    %v1237 = vand.u32 %v1230, 2147483648
    %v1238 = vsel %vm1236, %v1237, %v1235
    %v1239 = vrsqrt.pop %v1231
    %v1240 = vmul.f32 %v1231, %v1239
    %vm1241 = vcmp.eq.f32.partialorder %v1231, inf
    %v1242 = vsel %vm1241, %v1231, %v1240
    %vm1243 = vcmp.eq.f32.partialorder %v1231, 0.0
    %v1244 = vand.u32 %v1231, 2147483648
    %v1245 = vsel %vm1243, %v1244, %v1242
    %v1246 = vmul.f32 %v1238, 8.333333
    %v1247 = vmul.f32 %v1245, 8.333333
    %v1248 = vsub.f32 1.0, %v1246
    %v1249 = vsub.f32 1.0, %v1247
    %v1250 = vmax.f32 %v1248, 0.0
    %v1251 = vmax.f32 %v1249, 0.0
    %v1252 = vpack.c.bf16 %v1251, %v1250
    %v1254 = vcombine.high %v1252, %v1252
    %v1256 = vunpack.c.l.s4 1966171168
    %v1257 = vunpack.c.0.s8 %v1256
    %v1258 = vlaneseq
    %v1259 = vshrl.u32 %v1258, 7
    %v1260 = vsub.s32 %v1257, %v1259
    %v1261 = vrot.slane %v1252, %v1260
    %v1263 = vunpack.c.l.s4 1966171168
    %v1264 = vunpack.c.0.s8 %v1263
    %v1265 = vlaneseq
    %v1266 = vshrl.u32 %v1265, 7
    %v1267 = vsub.s32 %v1264, %v1266
    %v1268 = vrot.slane %v1254, %v1267
    %v1269 = vcombine.high %v1261, %v1261
    %v1270 = vcombine.high %v1268, %v1268
    %v1272 = vunpack.c.l.s4 1966171168
    %v1273 = vunpack.c.0.s8 %v1272
    %v1274 = vlaneseq
    %v1275 = vshrl.u32 %v1274, 7
    %v1276 = vsub.s32 %v1273, %v1275
    %v1277 = vrot.slane %v1261, %v1276
    %v1279 = vunpack.c.l.s4 1966171168
    %v1280 = vunpack.c.0.s8 %v1279
    %v1281 = vlaneseq
    %v1282 = vshrl.u32 %v1281, 7
    %v1283 = vsub.s32 %v1280, %v1282
    %v1284 = vrot.slane %v1268, %v1283
    %v1286 = vunpack.c.l.s4 1966171168
    %v1287 = vunpack.c.0.s8 %v1286
    %v1288 = vlaneseq
    %v1289 = vshrl.u32 %v1288, 7
    %v1290 = vsub.s32 %v1287, %v1289
    %v1291 = vrot.slane %v1269, %v1290
    %v1293 = vunpack.c.l.s4 1966171168
    %v1294 = vunpack.c.0.s8 %v1293
    %v1295 = vlaneseq
    %v1296 = vshrl.u32 %v1295, 7
    %v1297 = vsub.s32 %v1294, %v1296
    %v1298 = vrot.slane %v1270, %v1297
    %v1299 = vcombine.high %v1277, %v1277
    %v1300 = vcombine.high %v1284, %v1284
    %v1301 = vcombine.high %v1291, %v1291
    %v1302 = vcombine.high %v1298, %v1298
    %v1303 = vunpack.i.l.s16 %v1277
    %v1304 = vunpack.i.h.s16 %v1277
    %v1305 = vunpack.i.l.s16 %v1291
    %v1306 = vunpack.i.h.s16 %v1291
    %v1307 = vunpack.i.l.s16 %v1299
    %v1308 = vunpack.i.h.s16 %v1299
    %v1309 = vunpack.i.l.s16 %v1301
    %v1310 = vunpack.i.h.s16 %v1301
    %v1311 = vunpack.i.l.s16 %v1284
    %v1312 = vunpack.i.h.s16 %v1284
    %v1313 = vunpack.i.l.s16 %v1298
    %v1314 = vunpack.i.h.s16 %v1298
    %v1315 = vunpack.i.l.s16 %v1300
    %v1316 = vunpack.i.h.s16 %v1300
    %v1317 = vunpack.i.l.s16 %v1302
    %v1318 = vunpack.i.h.s16 %v1302
    %v1319 = vld [vmem:[#allocation7] sm:$0xf]
    %v1320 = vld [vmem:[#allocation7 + $0x4] sm:$0xf]
    %v1321 = vld [vmem:[#allocation7 + $0x8] sm:$0xf]
    %v1322 = vld [vmem:[#allocation7 + $0xc] sm:$0xf]
    %v1323 = vld [vmem:[#allocation7 + $0x10] sm:$0xf]
    %v1324 = vld [vmem:[#allocation7 + $0x14] sm:$0xf]
    %v1325 = vld [vmem:[#allocation7 + $0x18] sm:$0xf]
    %v1326 = vld [vmem:[#allocation7 + $0x1c] sm:$0xf]
    %v1327 = vld [vmem:[#allocation7 + $0x20] sm:$0xf]
    %v1328 = vld [vmem:[#allocation7 + $0x24] sm:$0xf]
    %v1329 = vld [vmem:[#allocation7 + $0x28] sm:$0xf]
    %v1330 = vld [vmem:[#allocation7 + $0x2c] sm:$0xf]
    %v1331 = vld [vmem:[#allocation7 + $0x30] sm:$0xf]
    %v1332 = vld [vmem:[#allocation7 + $0x34] sm:$0xf]
    %v1333 = vld [vmem:[#allocation7 + $0x38] sm:$0xf]
    %v1334 = vld [vmem:[#allocation7 + $0x3c] sm:$0xf]
    %v1335 = vpack.i.b16 %v1303, %v1303
    %v1336 = vpack.i.b16 %v1304, %v1304
    %v1337 = vpack.i.b16 %v1305, %v1305
    %v1338 = vpack.i.b16 %v1306, %v1306
    %v1339 = vpack.i.b16 %v1307, %v1307
    %v1340 = vpack.i.b16 %v1308, %v1308
    %v1341 = vpack.i.b16 %v1309, %v1309
    %v1342 = vpack.i.b16 %v1310, %v1310
    %v1343 = vpack.i.b16 %v1311, %v1311
    %v1344 = vpack.i.b16 %v1312, %v1312
    %v1345 = vpack.i.b16 %v1313, %v1313
    %v1346 = vpack.i.b16 %v1314, %v1314
    %v1347 = vpack.i.b16 %v1315, %v1315
    %v1348 = vpack.i.b16 %v1316, %v1316
    %v1349 = vpack.i.b16 %v1317, %v1317
    %v1350 = vpack.i.b16 %v1318, %v1318
    %v1351 = vlaneseq
    %v1352 = vshrl.u32 %v1351, 7
    %v1353 = vsub.s32 0, %v1352
    %v1354 = vrot.slane %v1335, %v1353
    %v1355 = vlaneseq
    %v1356 = vshrl.u32 %v1355, 7
    %v1357 = vsub.s32 0, %v1356
    %v1358 = vrot.slane %v1336, %v1357
    %v1359 = vlaneseq
    %v1360 = vshrl.u32 %v1359, 7
    %v1361 = vsub.s32 0, %v1360
    %v1362 = vrot.slane %v1337, %v1361
    %v1363 = vlaneseq
    %v1364 = vshrl.u32 %v1363, 7
    %v1365 = vsub.s32 0, %v1364
    %v1366 = vrot.slane %v1338, %v1365
    %v1367 = vlaneseq
    %v1368 = vshrl.u32 %v1367, 7
    %v1369 = vsub.s32 0, %v1368
    %v1370 = vrot.slane %v1339, %v1369
    %v1371 = vlaneseq
    %v1372 = vshrl.u32 %v1371, 7
    %v1373 = vsub.s32 0, %v1372
    %v1374 = vrot.slane %v1340, %v1373
    %v1375 = vlaneseq
    %v1376 = vshrl.u32 %v1375, 7
    %v1377 = vsub.s32 0, %v1376
    %v1378 = vrot.slane %v1341, %v1377
    %v1379 = vlaneseq
    %v1380 = vshrl.u32 %v1379, 7
    %v1381 = vsub.s32 0, %v1380
    %v1382 = vrot.slane %v1342, %v1381
    %v1383 = vlaneseq
    %v1384 = vshrl.u32 %v1383, 7
    %v1385 = vsub.s32 0, %v1384
    %v1386 = vrot.slane %v1343, %v1385
    %v1387 = vlaneseq
    %v1388 = vshrl.u32 %v1387, 7
    %v1389 = vsub.s32 0, %v1388
    %v1390 = vrot.slane %v1344, %v1389
    %v1391 = vlaneseq
    %v1392 = vshrl.u32 %v1391, 7
    %v1393 = vsub.s32 0, %v1392
    %v1394 = vrot.slane %v1345, %v1393
    %v1395 = vlaneseq
    %v1396 = vshrl.u32 %v1395, 7
    %v1397 = vsub.s32 0, %v1396
    %v1398 = vrot.slane %v1346, %v1397
    %v1399 = vlaneseq
    %v1400 = vshrl.u32 %v1399, 7
    %v1401 = vsub.s32 0, %v1400
    %v1402 = vrot.slane %v1347, %v1401
    %v1403 = vlaneseq
    %v1404 = vshrl.u32 %v1403, 7
    %v1405 = vsub.s32 0, %v1404
    %v1406 = vrot.slane %v1348, %v1405
    %v1407 = vlaneseq
    %v1408 = vshrl.u32 %v1407, 7
    %v1409 = vsub.s32 0, %v1408
    %v1410 = vrot.slane %v1349, %v1409
    %v1411 = vlaneseq
    %v1412 = vshrl.u32 %v1411, 7
    %v1413 = vsub.s32 0, %v1412
    %v1414 = vrot.slane %v1350, %v1413
    %v1416 = vpack.i.b16 %v1354, %v1354
    %v1418 = vlaneseq
    %v1419 = vshrl.u32 %v1418, 7
    %v1420 = vsub.s32 0, %v1419
    %v1421 = vrot.slane %v1416, %v1420
    %v1423 = vpack.i.b16 %v1358, %v1358
    %v1425 = vlaneseq
    %v1426 = vshrl.u32 %v1425, 7
    %v1427 = vsub.s32 0, %v1426
    %v1428 = vrot.slane %v1423, %v1427
    %v1430 = vpack.i.b16 %v1362, %v1362
    %v1432 = vlaneseq
    %v1433 = vshrl.u32 %v1432, 7
    %v1434 = vsub.s32 0, %v1433
    %v1435 = vrot.slane %v1430, %v1434
    %v1437 = vpack.i.b16 %v1366, %v1366
    %v1439 = vlaneseq
    %v1440 = vshrl.u32 %v1439, 7
    %v1441 = vsub.s32 0, %v1440
    %v1442 = vrot.slane %v1437, %v1441
    %v1444 = vpack.i.b16 %v1370, %v1370
    %v1446 = vlaneseq
    %v1447 = vshrl.u32 %v1446, 7
    %v1448 = vsub.s32 0, %v1447
    %v1449 = vrot.slane %v1444, %v1448
    %v1451 = vpack.i.b16 %v1374, %v1374
    %v1453 = vlaneseq
    %v1454 = vshrl.u32 %v1453, 7
    %v1455 = vsub.s32 0, %v1454
    %v1456 = vrot.slane %v1451, %v1455
    %v1458 = vpack.i.b16 %v1378, %v1378
    %v1460 = vlaneseq
    %v1461 = vshrl.u32 %v1460, 7
    %v1462 = vsub.s32 0, %v1461
    %v1463 = vrot.slane %v1458, %v1462
    %v1465 = vpack.i.b16 %v1382, %v1382
    %v1467 = vlaneseq
    %v1468 = vshrl.u32 %v1467, 7
    %v1469 = vsub.s32 0, %v1468
    %v1470 = vrot.slane %v1465, %v1469
    %v1472 = vpack.i.b16 %v1386, %v1386
    %v1474 = vlaneseq
    %v1475 = vshrl.u32 %v1474, 7
    %v1476 = vsub.s32 0, %v1475
    %v1477 = vrot.slane %v1472, %v1476
    %v1479 = vpack.i.b16 %v1390, %v1390
    %v1481 = vlaneseq
    %v1482 = vshrl.u32 %v1481, 7
    %v1483 = vsub.s32 0, %v1482
    %v1484 = vrot.slane %v1479, %v1483
    %v1486 = vpack.i.b16 %v1394, %v1394
    %v1488 = vlaneseq
    %v1489 = vshrl.u32 %v1488, 7
    %v1490 = vsub.s32 0, %v1489
    %v1491 = vrot.slane %v1486, %v1490
    %v1493 = vpack.i.b16 %v1398, %v1398
    %v1495 = vlaneseq
    %v1496 = vshrl.u32 %v1495, 7
    %v1497 = vsub.s32 0, %v1496
    %v1498 = vrot.slane %v1493, %v1497
    %v1500 = vpack.i.b16 %v1402, %v1402
    %v1502 = vlaneseq
    %v1503 = vshrl.u32 %v1502, 7
    %v1504 = vsub.s32 0, %v1503
    %v1505 = vrot.slane %v1500, %v1504
    %v1507 = vpack.i.b16 %v1406, %v1406
    %v1509 = vlaneseq
    %v1510 = vshrl.u32 %v1509, 7
    %v1511 = vsub.s32 0, %v1510
    %v1512 = vrot.slane %v1507, %v1511
    %v1514 = vpack.i.b16 %v1410, %v1410
    %v1516 = vlaneseq
    %v1517 = vshrl.u32 %v1516, 7
    %v1518 = vsub.s32 0, %v1517
    %v1519 = vrot.slane %v1514, %v1518
    %v1521 = vpack.i.b16 %v1414, %v1414
    %v1523 = vlaneseq
    %v1524 = vshrl.u32 %v1523, 7
    %v1525 = vsub.s32 0, %v1524
    %v1526 = vrot.slane %v1521, %v1525
    %v1527 = vmul.bf16 %v1421, %v1319
    %v1528 = vmul.bf16 %v1428, %v1320
    %v1529 = vmul.bf16 %v1435, %v1321
    %v1530 = vmul.bf16 %v1442, %v1322
    %v1531 = vmul.bf16 %v1449, %v1323
    %v1532 = vmul.bf16 %v1456, %v1324
    %v1533 = vmul.bf16 %v1463, %v1325
    %v1534 = vmul.bf16 %v1470, %v1326
    %v1535 = vmul.bf16 %v1477, %v1327
    %v1536 = vmul.bf16 %v1484, %v1328
    %v1537 = vmul.bf16 %v1491, %v1329
    %v1538 = vmul.bf16 %v1498, %v1330
    %v1539 = vmul.bf16 %v1505, %v1331
    %v1540 = vmul.bf16 %v1512, %v1332
    %v1541 = vmul.bf16 %v1519, %v1333
    %v1542 = vmul.bf16 %v1526, %v1334
    %v1543 = vunpack.c.l.bf16 %v1527
    %v1544 = vunpack.c.l.bf16 %v1528
    %v1545 = vunpack.c.l.bf16 %v1529
    %v1546 = vunpack.c.l.bf16 %v1530
    %v1547 = vunpack.c.l.bf16 %v1531
    %v1548 = vunpack.c.l.bf16 %v1532
    %v1549 = vunpack.c.l.bf16 %v1533
    %v1550 = vunpack.c.l.bf16 %v1534
    %v1551 = vunpack.c.l.bf16 %v1535
    %v1552 = vunpack.c.l.bf16 %v1536
    %v1553 = vunpack.c.l.bf16 %v1537
    %v1554 = vunpack.c.l.bf16 %v1538
    %v1555 = vunpack.c.l.bf16 %v1539
    %v1556 = vunpack.c.l.bf16 %v1540
    %v1557 = vunpack.c.l.bf16 %v1541
    %v1558 = vunpack.c.l.bf16 %v1542
    %v1559 = vadd.f32 %v1543, %v1544
    %v1560 = vadd.f32 %v1559, %v1545
    %v1561 = vadd.f32 %v1560, %v1546
    %v1562 = vadd.f32 %v1561, %v1547
    %v1563 = vadd.f32 %v1562, %v1548
    %v1564 = vadd.f32 %v1563, %v1549
    %v1565 = vadd.f32 %v1564, %v1550
    %v1566 = vadd.f32 %v1565, %v1551
    %v1567 = vadd.f32 %v1566, %v1552
    %v1568 = vadd.f32 %v1567, %v1553
    %v1569 = vadd.f32 %v1568, %v1554
    %v1570 = vadd.f32 %v1569, %v1555
    %v1571 = vadd.f32 %v1570, %v1556
    %v1572 = vadd.f32 %v1571, %v1557
    %v1573 = vadd.f32 %v1572, %v1558
    %1574 = vst [vmem:[#allocation2 + $0x18] sm:$0xff] %v1573
    %s1575 = sld [smem:[#allocation9 + $0x200]]
    %s1576 = sld [smem:[#allocation9 + $0x201]]
    %s1577 = sld [smem:[#allocation9 + $0x202]]
    %v1578 = vstv %s1575
    %v1579 = vmul.f32 %v65, %v1578
    %v1580 = vmul.f32 %v66, %v1578
    %v1581 = vstv %s1576
    %v1582 = vmul.f32 %v68, %v1581
    %v1583 = vmul.f32 %v69, %v1581
    %v1584 = vadd.f32 %v1579, %v1582
    %v1585 = vadd.f32 %v1580, %v1583
    %v1586 = vstv %s1577
    %v1587 = vmul.f32 %v71, %v1586
    %v1588 = vmul.f32 %v72, %v1586
    %v1589 = vadd.f32 %v1584, %v1587
    %v1590 = vadd.f32 %v1585, %v1588
    %v1591 = vmul.f32 %v1589, 2.0
    %v1592 = vmul.f32 %v1590, 2.0
    %v1593 = vsub.f32 %v81, %v1591
    %v1594 = vsub.f32 %v82, %v1592
    %s1595 = smul.f32 %s1575, %s1575
    %s1596 = smul.f32 %s1576, %s1576
    %s1597 = sadd.f32 %s1595, %s1596
    %s1598 = smul.f32 %s1577, %s1577
    %s1599 = sadd.f32 %s1597, %s1598
    %v1600 = vstv %s1599
    %v1601 = vadd.f32 %v1593, %v1600
    %v1602 = vadd.f32 %v1594, %v1600
    %v1603 = vmax.f32 %v1601, 0.0
    %v1604 = vmax.f32 %v1602, 0.0
    %v1605 = vrsqrt.pop %v1603
    %v1606 = vmul.f32 %v1603, %v1605
    %vm1607 = vcmp.eq.f32.partialorder %v1603, inf
    %v1608 = vsel %vm1607, %v1603, %v1606
    %vm1609 = vcmp.eq.f32.partialorder %v1603, 0.0
    %v1610 = vand.u32 %v1603, 2147483648
    %v1611 = vsel %vm1609, %v1610, %v1608
    %v1612 = vrsqrt.pop %v1604
    %v1613 = vmul.f32 %v1604, %v1612
    %vm1614 = vcmp.eq.f32.partialorder %v1604, inf
    %v1615 = vsel %vm1614, %v1604, %v1613
    %vm1616 = vcmp.eq.f32.partialorder %v1604, 0.0
    %v1617 = vand.u32 %v1604, 2147483648
    %v1618 = vsel %vm1616, %v1617, %v1615
    %v1619 = vmul.f32 %v1611, 8.333333
    %v1620 = vmul.f32 %v1618, 8.333333
    %v1621 = vsub.f32 1.0, %v1619
    %v1622 = vsub.f32 1.0, %v1620
    %v1623 = vmax.f32 %v1621, 0.0
    %v1624 = vmax.f32 %v1622, 0.0
    %v1625 = vpack.c.bf16 %v1624, %v1623
    %v1627 = vcombine.high %v1625, %v1625
    %v1629 = vunpack.c.l.s4 1966171168
    %v1630 = vunpack.c.0.s8 %v1629
    %v1631 = vlaneseq
    %v1632 = vshrl.u32 %v1631, 7
    %v1633 = vsub.s32 %v1630, %v1632
    %v1634 = vrot.slane %v1625, %v1633
    %v1636 = vunpack.c.l.s4 1966171168
    %v1637 = vunpack.c.0.s8 %v1636
    %v1638 = vlaneseq
    %v1639 = vshrl.u32 %v1638, 7
    %v1640 = vsub.s32 %v1637, %v1639
    %v1641 = vrot.slane %v1627, %v1640
    %v1642 = vcombine.high %v1634, %v1634
    %v1643 = vcombine.high %v1641, %v1641
    %v1645 = vunpack.c.l.s4 1966171168
    %v1646 = vunpack.c.0.s8 %v1645
    %v1647 = vlaneseq
    %v1648 = vshrl.u32 %v1647, 7
    %v1649 = vsub.s32 %v1646, %v1648
    %v1650 = vrot.slane %v1634, %v1649
    %v1652 = vunpack.c.l.s4 1966171168
    %v1653 = vunpack.c.0.s8 %v1652
    %v1654 = vlaneseq
    %v1655 = vshrl.u32 %v1654, 7
    %v1656 = vsub.s32 %v1653, %v1655
    %v1657 = vrot.slane %v1641, %v1656
    %v1659 = vunpack.c.l.s4 1966171168
    %v1660 = vunpack.c.0.s8 %v1659
    %v1661 = vlaneseq
    %v1662 = vshrl.u32 %v1661, 7
    %v1663 = vsub.s32 %v1660, %v1662
    %v1664 = vrot.slane %v1642, %v1663
    %v1666 = vunpack.c.l.s4 1966171168
    %v1667 = vunpack.c.0.s8 %v1666
    %v1668 = vlaneseq
    %v1669 = vshrl.u32 %v1668, 7
    %v1670 = vsub.s32 %v1667, %v1669
    %v1671 = vrot.slane %v1643, %v1670
    %v1672 = vcombine.high %v1650, %v1650
    %v1673 = vcombine.high %v1657, %v1657
    %v1674 = vcombine.high %v1664, %v1664
    %v1675 = vcombine.high %v1671, %v1671
    %v1676 = vunpack.i.l.s16 %v1650
    %v1677 = vunpack.i.h.s16 %v1650
    %v1678 = vunpack.i.l.s16 %v1664
    %v1679 = vunpack.i.h.s16 %v1664
    %v1680 = vunpack.i.l.s16 %v1672
    %v1681 = vunpack.i.h.s16 %v1672
    %v1682 = vunpack.i.l.s16 %v1674
    %v1683 = vunpack.i.h.s16 %v1674
    %v1684 = vunpack.i.l.s16 %v1657
    %v1685 = vunpack.i.h.s16 %v1657
    %v1686 = vunpack.i.l.s16 %v1671
    %v1687 = vunpack.i.h.s16 %v1671
    %v1688 = vunpack.i.l.s16 %v1673
    %v1689 = vunpack.i.h.s16 %v1673
    %v1690 = vunpack.i.l.s16 %v1675
    %v1691 = vunpack.i.h.s16 %v1675
    %v1692 = vld [vmem:[#allocation7] sm:$0xf]
    %v1693 = vld [vmem:[#allocation7 + $0x4] sm:$0xf]
    %v1694 = vld [vmem:[#allocation7 + $0x8] sm:$0xf]
    %v1695 = vld [vmem:[#allocation7 + $0xc] sm:$0xf]
    %v1696 = vld [vmem:[#allocation7 + $0x10] sm:$0xf]
    %v1697 = vld [vmem:[#allocation7 + $0x14] sm:$0xf]
    %v1698 = vld [vmem:[#allocation7 + $0x18] sm:$0xf]
    %v1699 = vld [vmem:[#allocation7 + $0x1c] sm:$0xf]
    %v1700 = vld [vmem:[#allocation7 + $0x20] sm:$0xf]
    %v1701 = vld [vmem:[#allocation7 + $0x24] sm:$0xf]
    %v1702 = vld [vmem:[#allocation7 + $0x28] sm:$0xf]
    %v1703 = vld [vmem:[#allocation7 + $0x2c] sm:$0xf]
    %v1704 = vld [vmem:[#allocation7 + $0x30] sm:$0xf]
    %v1705 = vld [vmem:[#allocation7 + $0x34] sm:$0xf]
    %v1706 = vld [vmem:[#allocation7 + $0x38] sm:$0xf]
    %v1707 = vld [vmem:[#allocation7 + $0x3c] sm:$0xf]
    %v1708 = vpack.i.b16 %v1676, %v1676
    %v1709 = vpack.i.b16 %v1677, %v1677
    %v1710 = vpack.i.b16 %v1678, %v1678
    %v1711 = vpack.i.b16 %v1679, %v1679
    %v1712 = vpack.i.b16 %v1680, %v1680
    %v1713 = vpack.i.b16 %v1681, %v1681
    %v1714 = vpack.i.b16 %v1682, %v1682
    %v1715 = vpack.i.b16 %v1683, %v1683
    %v1716 = vpack.i.b16 %v1684, %v1684
    %v1717 = vpack.i.b16 %v1685, %v1685
    %v1718 = vpack.i.b16 %v1686, %v1686
    %v1719 = vpack.i.b16 %v1687, %v1687
    %v1720 = vpack.i.b16 %v1688, %v1688
    %v1721 = vpack.i.b16 %v1689, %v1689
    %v1722 = vpack.i.b16 %v1690, %v1690
    %v1723 = vpack.i.b16 %v1691, %v1691
    %v1724 = vlaneseq
    %v1725 = vshrl.u32 %v1724, 7
    %v1726 = vsub.s32 0, %v1725
    %v1727 = vrot.slane %v1708, %v1726
    %v1728 = vlaneseq
    %v1729 = vshrl.u32 %v1728, 7
    %v1730 = vsub.s32 0, %v1729
    %v1731 = vrot.slane %v1709, %v1730
    %v1732 = vlaneseq
    %v1733 = vshrl.u32 %v1732, 7
    %v1734 = vsub.s32 0, %v1733
    %v1735 = vrot.slane %v1710, %v1734
    %v1736 = vlaneseq
    %v1737 = vshrl.u32 %v1736, 7
    %v1738 = vsub.s32 0, %v1737
    %v1739 = vrot.slane %v1711, %v1738
    %v1740 = vlaneseq
    %v1741 = vshrl.u32 %v1740, 7
    %v1742 = vsub.s32 0, %v1741
    %v1743 = vrot.slane %v1712, %v1742
    %v1744 = vlaneseq
    %v1745 = vshrl.u32 %v1744, 7
    %v1746 = vsub.s32 0, %v1745
    %v1747 = vrot.slane %v1713, %v1746
    %v1748 = vlaneseq
    %v1749 = vshrl.u32 %v1748, 7
    %v1750 = vsub.s32 0, %v1749
    %v1751 = vrot.slane %v1714, %v1750
    %v1752 = vlaneseq
    %v1753 = vshrl.u32 %v1752, 7
    %v1754 = vsub.s32 0, %v1753
    %v1755 = vrot.slane %v1715, %v1754
    %v1756 = vlaneseq
    %v1757 = vshrl.u32 %v1756, 7
    %v1758 = vsub.s32 0, %v1757
    %v1759 = vrot.slane %v1716, %v1758
    %v1760 = vlaneseq
    %v1761 = vshrl.u32 %v1760, 7
    %v1762 = vsub.s32 0, %v1761
    %v1763 = vrot.slane %v1717, %v1762
    %v1764 = vlaneseq
    %v1765 = vshrl.u32 %v1764, 7
    %v1766 = vsub.s32 0, %v1765
    %v1767 = vrot.slane %v1718, %v1766
    %v1768 = vlaneseq
    %v1769 = vshrl.u32 %v1768, 7
    %v1770 = vsub.s32 0, %v1769
    %v1771 = vrot.slane %v1719, %v1770
    %v1772 = vlaneseq
    %v1773 = vshrl.u32 %v1772, 7
    %v1774 = vsub.s32 0, %v1773
    %v1775 = vrot.slane %v1720, %v1774
    %v1776 = vlaneseq
    %v1777 = vshrl.u32 %v1776, 7
    %v1778 = vsub.s32 0, %v1777
    %v1779 = vrot.slane %v1721, %v1778
    %v1780 = vlaneseq
    %v1781 = vshrl.u32 %v1780, 7
    %v1782 = vsub.s32 0, %v1781
    %v1783 = vrot.slane %v1722, %v1782
    %v1784 = vlaneseq
    %v1785 = vshrl.u32 %v1784, 7
    %v1786 = vsub.s32 0, %v1785
    %v1787 = vrot.slane %v1723, %v1786
    %v1789 = vpack.i.b16 %v1727, %v1727
    %v1791 = vlaneseq
    %v1792 = vshrl.u32 %v1791, 7
    %v1793 = vsub.s32 0, %v1792
    %v1794 = vrot.slane %v1789, %v1793
    %v1796 = vpack.i.b16 %v1731, %v1731
    %v1798 = vlaneseq
    %v1799 = vshrl.u32 %v1798, 7
    %v1800 = vsub.s32 0, %v1799
    %v1801 = vrot.slane %v1796, %v1800
    %v1803 = vpack.i.b16 %v1735, %v1735
    %v1805 = vlaneseq
    %v1806 = vshrl.u32 %v1805, 7
    %v1807 = vsub.s32 0, %v1806
    %v1808 = vrot.slane %v1803, %v1807
    %v1810 = vpack.i.b16 %v1739, %v1739
    %v1812 = vlaneseq
    %v1813 = vshrl.u32 %v1812, 7
    %v1814 = vsub.s32 0, %v1813
    %v1815 = vrot.slane %v1810, %v1814
    %v1817 = vpack.i.b16 %v1743, %v1743
    %v1819 = vlaneseq
    %v1820 = vshrl.u32 %v1819, 7
    %v1821 = vsub.s32 0, %v1820
    %v1822 = vrot.slane %v1817, %v1821
    %v1824 = vpack.i.b16 %v1747, %v1747
    %v1826 = vlaneseq
    %v1827 = vshrl.u32 %v1826, 7
    %v1828 = vsub.s32 0, %v1827
    %v1829 = vrot.slane %v1824, %v1828
    %v1831 = vpack.i.b16 %v1751, %v1751
    %v1833 = vlaneseq
    %v1834 = vshrl.u32 %v1833, 7
    %v1835 = vsub.s32 0, %v1834
    %v1836 = vrot.slane %v1831, %v1835
    %v1838 = vpack.i.b16 %v1755, %v1755
    %v1840 = vlaneseq
    %v1841 = vshrl.u32 %v1840, 7
    %v1842 = vsub.s32 0, %v1841
    %v1843 = vrot.slane %v1838, %v1842
    %v1845 = vpack.i.b16 %v1759, %v1759
    %v1847 = vlaneseq
    %v1848 = vshrl.u32 %v1847, 7
    %v1849 = vsub.s32 0, %v1848
    %v1850 = vrot.slane %v1845, %v1849
    %v1852 = vpack.i.b16 %v1763, %v1763
    %v1854 = vlaneseq
    %v1855 = vshrl.u32 %v1854, 7
    %v1856 = vsub.s32 0, %v1855
    %v1857 = vrot.slane %v1852, %v1856
    %v1859 = vpack.i.b16 %v1767, %v1767
    %v1861 = vlaneseq
    %v1862 = vshrl.u32 %v1861, 7
    %v1863 = vsub.s32 0, %v1862
    %v1864 = vrot.slane %v1859, %v1863
    %v1866 = vpack.i.b16 %v1771, %v1771
    %v1868 = vlaneseq
    %v1869 = vshrl.u32 %v1868, 7
    %v1870 = vsub.s32 0, %v1869
    %v1871 = vrot.slane %v1866, %v1870
    %v1873 = vpack.i.b16 %v1775, %v1775
    %v1875 = vlaneseq
    %v1876 = vshrl.u32 %v1875, 7
    %v1877 = vsub.s32 0, %v1876
    %v1878 = vrot.slane %v1873, %v1877
    %v1880 = vpack.i.b16 %v1779, %v1779
    %v1882 = vlaneseq
    %v1883 = vshrl.u32 %v1882, 7
    %v1884 = vsub.s32 0, %v1883
    %v1885 = vrot.slane %v1880, %v1884
    %v1887 = vpack.i.b16 %v1783, %v1783
    %v1889 = vlaneseq
    %v1890 = vshrl.u32 %v1889, 7
    %v1891 = vsub.s32 0, %v1890
    %v1892 = vrot.slane %v1887, %v1891
    %v1894 = vpack.i.b16 %v1787, %v1787
    %v1896 = vlaneseq
    %v1897 = vshrl.u32 %v1896, 7
    %v1898 = vsub.s32 0, %v1897
    %v1899 = vrot.slane %v1894, %v1898
    %v1900 = vmul.bf16 %v1794, %v1692
    %v1901 = vmul.bf16 %v1801, %v1693
    %v1902 = vmul.bf16 %v1808, %v1694
    %v1903 = vmul.bf16 %v1815, %v1695
    %v1904 = vmul.bf16 %v1822, %v1696
    %v1905 = vmul.bf16 %v1829, %v1697
    %v1906 = vmul.bf16 %v1836, %v1698
    %v1907 = vmul.bf16 %v1843, %v1699
    %v1908 = vmul.bf16 %v1850, %v1700
    %v1909 = vmul.bf16 %v1857, %v1701
    %v1910 = vmul.bf16 %v1864, %v1702
    %v1911 = vmul.bf16 %v1871, %v1703
    %v1912 = vmul.bf16 %v1878, %v1704
    %v1913 = vmul.bf16 %v1885, %v1705
    %v1914 = vmul.bf16 %v1892, %v1706
    %v1915 = vmul.bf16 %v1899, %v1707
    %v1916 = vunpack.c.l.bf16 %v1900
    %v1917 = vunpack.c.l.bf16 %v1901
    %v1918 = vunpack.c.l.bf16 %v1902
    %v1919 = vunpack.c.l.bf16 %v1903
    %v1920 = vunpack.c.l.bf16 %v1904
    %v1921 = vunpack.c.l.bf16 %v1905
    %v1922 = vunpack.c.l.bf16 %v1906
    %v1923 = vunpack.c.l.bf16 %v1907
    %v1924 = vunpack.c.l.bf16 %v1908
    %v1925 = vunpack.c.l.bf16 %v1909
    %v1926 = vunpack.c.l.bf16 %v1910
    %v1927 = vunpack.c.l.bf16 %v1911
    %v1928 = vunpack.c.l.bf16 %v1912
    %v1929 = vunpack.c.l.bf16 %v1913
    %v1930 = vunpack.c.l.bf16 %v1914
    %v1931 = vunpack.c.l.bf16 %v1915
    %v1932 = vadd.f32 %v1916, %v1917
    %v1933 = vadd.f32 %v1932, %v1918
    %v1934 = vadd.f32 %v1933, %v1919
    %v1935 = vadd.f32 %v1934, %v1920
    %v1936 = vadd.f32 %v1935, %v1921
    %v1937 = vadd.f32 %v1936, %v1922
    %v1938 = vadd.f32 %v1937, %v1923
    %v1939 = vadd.f32 %v1938, %v1924
    %v1940 = vadd.f32 %v1939, %v1925
    %v1941 = vadd.f32 %v1940, %v1926
    %v1942 = vadd.f32 %v1941, %v1927
    %v1943 = vadd.f32 %v1942, %v1928
    %v1944 = vadd.f32 %v1943, %v1929
    %v1945 = vadd.f32 %v1944, %v1930
    %v1946 = vadd.f32 %v1945, %v1931
    %1947 = vst [vmem:[#allocation2 + $0x20] sm:$0xff] %v1946
    %s1948 = sld [smem:[#allocation9 + $0x280]]
    %s1949 = sld [smem:[#allocation9 + $0x281]]
    %s1950 = sld [smem:[#allocation9 + $0x282]]
    %v1951 = vstv %s1948
    %v1952 = vmul.f32 %v65, %v1951
    %v1953 = vmul.f32 %v66, %v1951
    %v1954 = vstv %s1949
    %v1955 = vmul.f32 %v68, %v1954
    %v1956 = vmul.f32 %v69, %v1954
    %v1957 = vadd.f32 %v1952, %v1955
    %v1958 = vadd.f32 %v1953, %v1956
    %v1959 = vstv %s1950
    %v1960 = vmul.f32 %v71, %v1959
    %v1961 = vmul.f32 %v72, %v1959
    %v1962 = vadd.f32 %v1957, %v1960
    %v1963 = vadd.f32 %v1958, %v1961
    %v1964 = vmul.f32 %v1962, 2.0
    %v1965 = vmul.f32 %v1963, 2.0
    %v1966 = vsub.f32 %v81, %v1964
    %v1967 = vsub.f32 %v82, %v1965
    %s1968 = smul.f32 %s1948, %s1948
    %s1969 = smul.f32 %s1949, %s1949
    %s1970 = sadd.f32 %s1968, %s1969
    %s1971 = smul.f32 %s1950, %s1950
    %s1972 = sadd.f32 %s1970, %s1971
    %v1973 = vstv %s1972
    %v1974 = vadd.f32 %v1966, %v1973
    %v1975 = vadd.f32 %v1967, %v1973
    %v1976 = vmax.f32 %v1974, 0.0
    %v1977 = vmax.f32 %v1975, 0.0
    %v1978 = vrsqrt.pop %v1976
    %v1979 = vmul.f32 %v1976, %v1978
    %vm1980 = vcmp.eq.f32.partialorder %v1976, inf
    %v1981 = vsel %vm1980, %v1976, %v1979
    %vm1982 = vcmp.eq.f32.partialorder %v1976, 0.0
    %v1983 = vand.u32 %v1976, 2147483648
    %v1984 = vsel %vm1982, %v1983, %v1981
    %v1985 = vrsqrt.pop %v1977
    %v1986 = vmul.f32 %v1977, %v1985
    %vm1987 = vcmp.eq.f32.partialorder %v1977, inf
    %v1988 = vsel %vm1987, %v1977, %v1986
    %vm1989 = vcmp.eq.f32.partialorder %v1977, 0.0
    %v1990 = vand.u32 %v1977, 2147483648
    %v1991 = vsel %vm1989, %v1990, %v1988
    %v1992 = vmul.f32 %v1984, 8.333333
    %v1993 = vmul.f32 %v1991, 8.333333
    %v1994 = vsub.f32 1.0, %v1992
    %v1995 = vsub.f32 1.0, %v1993
    %v1996 = vmax.f32 %v1994, 0.0
    %v1997 = vmax.f32 %v1995, 0.0
    %v1998 = vpack.c.bf16 %v1997, %v1996
    %v2000 = vcombine.high %v1998, %v1998
    %v2002 = vunpack.c.l.s4 1966171168
    %v2003 = vunpack.c.0.s8 %v2002
    %v2004 = vlaneseq
    %v2005 = vshrl.u32 %v2004, 7
    %v2006 = vsub.s32 %v2003, %v2005
    %v2007 = vrot.slane %v1998, %v2006
    %v2009 = vunpack.c.l.s4 1966171168
    %v2010 = vunpack.c.0.s8 %v2009
    %v2011 = vlaneseq
    %v2012 = vshrl.u32 %v2011, 7
    %v2013 = vsub.s32 %v2010, %v2012
    %v2014 = vrot.slane %v2000, %v2013
    %v2015 = vcombine.high %v2007, %v2007
    %v2016 = vcombine.high %v2014, %v2014
    %v2018 = vunpack.c.l.s4 1966171168
    %v2019 = vunpack.c.0.s8 %v2018
    %v2020 = vlaneseq
    %v2021 = vshrl.u32 %v2020, 7
    %v2022 = vsub.s32 %v2019, %v2021
    %v2023 = vrot.slane %v2007, %v2022
    %v2025 = vunpack.c.l.s4 1966171168
    %v2026 = vunpack.c.0.s8 %v2025
    %v2027 = vlaneseq
    %v2028 = vshrl.u32 %v2027, 7
    %v2029 = vsub.s32 %v2026, %v2028
    %v2030 = vrot.slane %v2014, %v2029
    %v2032 = vunpack.c.l.s4 1966171168
    %v2033 = vunpack.c.0.s8 %v2032
    %v2034 = vlaneseq
    %v2035 = vshrl.u32 %v2034, 7
    %v2036 = vsub.s32 %v2033, %v2035
    %v2037 = vrot.slane %v2015, %v2036
    %v2039 = vunpack.c.l.s4 1966171168
    %v2040 = vunpack.c.0.s8 %v2039
    %v2041 = vlaneseq
    %v2042 = vshrl.u32 %v2041, 7
    %v2043 = vsub.s32 %v2040, %v2042
    %v2044 = vrot.slane %v2016, %v2043
    %v2045 = vcombine.high %v2023, %v2023
    %v2046 = vcombine.high %v2030, %v2030
    %v2047 = vcombine.high %v2037, %v2037
    %v2048 = vcombine.high %v2044, %v2044
    %v2049 = vunpack.i.l.s16 %v2023
    %v2050 = vunpack.i.h.s16 %v2023
    %v2051 = vunpack.i.l.s16 %v2037
    %v2052 = vunpack.i.h.s16 %v2037
    %v2053 = vunpack.i.l.s16 %v2045
    %v2054 = vunpack.i.h.s16 %v2045
    %v2055 = vunpack.i.l.s16 %v2047
    %v2056 = vunpack.i.h.s16 %v2047
    %v2057 = vunpack.i.l.s16 %v2030
    %v2058 = vunpack.i.h.s16 %v2030
    %v2059 = vunpack.i.l.s16 %v2044
    %v2060 = vunpack.i.h.s16 %v2044
    %v2061 = vunpack.i.l.s16 %v2046
    %v2062 = vunpack.i.h.s16 %v2046
    %v2063 = vunpack.i.l.s16 %v2048
    %v2064 = vunpack.i.h.s16 %v2048
    %v2065 = vld [vmem:[#allocation7] sm:$0xf]
    %v2066 = vld [vmem:[#allocation7 + $0x4] sm:$0xf]
    %v2067 = vld [vmem:[#allocation7 + $0x8] sm:$0xf]
    %v2068 = vld [vmem:[#allocation7 + $0xc] sm:$0xf]
    %v2069 = vld [vmem:[#allocation7 + $0x10] sm:$0xf]
    %v2070 = vld [vmem:[#allocation7 + $0x14] sm:$0xf]
    %v2071 = vld [vmem:[#allocation7 + $0x18] sm:$0xf]
    %v2072 = vld [vmem:[#allocation7 + $0x1c] sm:$0xf]
    %v2073 = vld [vmem:[#allocation7 + $0x20] sm:$0xf]
    %v2074 = vld [vmem:[#allocation7 + $0x24] sm:$0xf]
    %v2075 = vld [vmem:[#allocation7 + $0x28] sm:$0xf]
    %v2076 = vld [vmem:[#allocation7 + $0x2c] sm:$0xf]
    %v2077 = vld [vmem:[#allocation7 + $0x30] sm:$0xf]
    %v2078 = vld [vmem:[#allocation7 + $0x34] sm:$0xf]
    %v2079 = vld [vmem:[#allocation7 + $0x38] sm:$0xf]
    %v2080 = vld [vmem:[#allocation7 + $0x3c] sm:$0xf]
    %v2081 = vpack.i.b16 %v2049, %v2049
    %v2082 = vpack.i.b16 %v2050, %v2050
    %v2083 = vpack.i.b16 %v2051, %v2051
    %v2084 = vpack.i.b16 %v2052, %v2052
    %v2085 = vpack.i.b16 %v2053, %v2053
    %v2086 = vpack.i.b16 %v2054, %v2054
    %v2087 = vpack.i.b16 %v2055, %v2055
    %v2088 = vpack.i.b16 %v2056, %v2056
    %v2089 = vpack.i.b16 %v2057, %v2057
    %v2090 = vpack.i.b16 %v2058, %v2058
    %v2091 = vpack.i.b16 %v2059, %v2059
    %v2092 = vpack.i.b16 %v2060, %v2060
    %v2093 = vpack.i.b16 %v2061, %v2061
    %v2094 = vpack.i.b16 %v2062, %v2062
    %v2095 = vpack.i.b16 %v2063, %v2063
    %v2096 = vpack.i.b16 %v2064, %v2064
    %v2097 = vlaneseq
    %v2098 = vshrl.u32 %v2097, 7
    %v2099 = vsub.s32 0, %v2098
    %v2100 = vrot.slane %v2081, %v2099
    %v2101 = vlaneseq
    %v2102 = vshrl.u32 %v2101, 7
    %v2103 = vsub.s32 0, %v2102
    %v2104 = vrot.slane %v2082, %v2103
    %v2105 = vlaneseq
    %v2106 = vshrl.u32 %v2105, 7
    %v2107 = vsub.s32 0, %v2106
    %v2108 = vrot.slane %v2083, %v2107
    %v2109 = vlaneseq
    %v2110 = vshrl.u32 %v2109, 7
    %v2111 = vsub.s32 0, %v2110
    %v2112 = vrot.slane %v2084, %v2111
    %v2113 = vlaneseq
    %v2114 = vshrl.u32 %v2113, 7
    %v2115 = vsub.s32 0, %v2114
    %v2116 = vrot.slane %v2085, %v2115
    %v2117 = vlaneseq
    %v2118 = vshrl.u32 %v2117, 7
    %v2119 = vsub.s32 0, %v2118
    %v2120 = vrot.slane %v2086, %v2119
    %v2121 = vlaneseq
    %v2122 = vshrl.u32 %v2121, 7
    %v2123 = vsub.s32 0, %v2122
    %v2124 = vrot.slane %v2087, %v2123
    %v2125 = vlaneseq
    %v2126 = vshrl.u32 %v2125, 7
    %v2127 = vsub.s32 0, %v2126
    %v2128 = vrot.slane %v2088, %v2127
    %v2129 = vlaneseq
    %v2130 = vshrl.u32 %v2129, 7
    %v2131 = vsub.s32 0, %v2130
    %v2132 = vrot.slane %v2089, %v2131
    %v2133 = vlaneseq
    %v2134 = vshrl.u32 %v2133, 7
    %v2135 = vsub.s32 0, %v2134
    %v2136 = vrot.slane %v2090, %v2135
    %v2137 = vlaneseq
    %v2138 = vshrl.u32 %v2137, 7
    %v2139 = vsub.s32 0, %v2138
    %v2140 = vrot.slane %v2091, %v2139
    %v2141 = vlaneseq
    %v2142 = vshrl.u32 %v2141, 7
    %v2143 = vsub.s32 0, %v2142
    %v2144 = vrot.slane %v2092, %v2143
    %v2145 = vlaneseq
    %v2146 = vshrl.u32 %v2145, 7
    %v2147 = vsub.s32 0, %v2146
    %v2148 = vrot.slane %v2093, %v2147
    %v2149 = vlaneseq
    %v2150 = vshrl.u32 %v2149, 7
    %v2151 = vsub.s32 0, %v2150
    %v2152 = vrot.slane %v2094, %v2151
    %v2153 = vlaneseq
    %v2154 = vshrl.u32 %v2153, 7
    %v2155 = vsub.s32 0, %v2154
    %v2156 = vrot.slane %v2095, %v2155
    %v2157 = vlaneseq
    %v2158 = vshrl.u32 %v2157, 7
    %v2159 = vsub.s32 0, %v2158
    %v2160 = vrot.slane %v2096, %v2159
    %v2162 = vpack.i.b16 %v2100, %v2100
    %v2164 = vlaneseq
    %v2165 = vshrl.u32 %v2164, 7
    %v2166 = vsub.s32 0, %v2165
    %v2167 = vrot.slane %v2162, %v2166
    %v2169 = vpack.i.b16 %v2104, %v2104
    %v2171 = vlaneseq
    %v2172 = vshrl.u32 %v2171, 7
    %v2173 = vsub.s32 0, %v2172
    %v2174 = vrot.slane %v2169, %v2173
    %v2176 = vpack.i.b16 %v2108, %v2108
    %v2178 = vlaneseq
    %v2179 = vshrl.u32 %v2178, 7
    %v2180 = vsub.s32 0, %v2179
    %v2181 = vrot.slane %v2176, %v2180
    %v2183 = vpack.i.b16 %v2112, %v2112
    %v2185 = vlaneseq
    %v2186 = vshrl.u32 %v2185, 7
    %v2187 = vsub.s32 0, %v2186
    %v2188 = vrot.slane %v2183, %v2187
    %v2190 = vpack.i.b16 %v2116, %v2116
    %v2192 = vlaneseq
    %v2193 = vshrl.u32 %v2192, 7
    %v2194 = vsub.s32 0, %v2193
    %v2195 = vrot.slane %v2190, %v2194
    %v2197 = vpack.i.b16 %v2120, %v2120
    %v2199 = vlaneseq
    %v2200 = vshrl.u32 %v2199, 7
    %v2201 = vsub.s32 0, %v2200
    %v2202 = vrot.slane %v2197, %v2201
    %v2204 = vpack.i.b16 %v2124, %v2124
    %v2206 = vlaneseq
    %v2207 = vshrl.u32 %v2206, 7
    %v2208 = vsub.s32 0, %v2207
    %v2209 = vrot.slane %v2204, %v2208
    %v2211 = vpack.i.b16 %v2128, %v2128
    %v2213 = vlaneseq
    %v2214 = vshrl.u32 %v2213, 7
    %v2215 = vsub.s32 0, %v2214
    %v2216 = vrot.slane %v2211, %v2215
    %v2218 = vpack.i.b16 %v2132, %v2132
    %v2220 = vlaneseq
    %v2221 = vshrl.u32 %v2220, 7
    %v2222 = vsub.s32 0, %v2221
    %v2223 = vrot.slane %v2218, %v2222
    %v2225 = vpack.i.b16 %v2136, %v2136
    %v2227 = vlaneseq
    %v2228 = vshrl.u32 %v2227, 7
    %v2229 = vsub.s32 0, %v2228
    %v2230 = vrot.slane %v2225, %v2229
    %v2232 = vpack.i.b16 %v2140, %v2140
    %v2234 = vlaneseq
    %v2235 = vshrl.u32 %v2234, 7
    %v2236 = vsub.s32 0, %v2235
    %v2237 = vrot.slane %v2232, %v2236
    %v2239 = vpack.i.b16 %v2144, %v2144
    %v2241 = vlaneseq
    %v2242 = vshrl.u32 %v2241, 7
    %v2243 = vsub.s32 0, %v2242
    %v2244 = vrot.slane %v2239, %v2243
    %v2246 = vpack.i.b16 %v2148, %v2148
    %v2248 = vlaneseq
    %v2249 = vshrl.u32 %v2248, 7
    %v2250 = vsub.s32 0, %v2249
    %v2251 = vrot.slane %v2246, %v2250
    %v2253 = vpack.i.b16 %v2152, %v2152
    %v2255 = vlaneseq
    %v2256 = vshrl.u32 %v2255, 7
    %v2257 = vsub.s32 0, %v2256
    %v2258 = vrot.slane %v2253, %v2257
    %v2260 = vpack.i.b16 %v2156, %v2156
    %v2262 = vlaneseq
    %v2263 = vshrl.u32 %v2262, 7
    %v2264 = vsub.s32 0, %v2263
    %v2265 = vrot.slane %v2260, %v2264
    %v2267 = vpack.i.b16 %v2160, %v2160
    %v2269 = vlaneseq
    %v2270 = vshrl.u32 %v2269, 7
    %v2271 = vsub.s32 0, %v2270
    %v2272 = vrot.slane %v2267, %v2271
    %v2273 = vmul.bf16 %v2167, %v2065
    %v2274 = vmul.bf16 %v2174, %v2066
    %v2275 = vmul.bf16 %v2181, %v2067
    %v2276 = vmul.bf16 %v2188, %v2068
    %v2277 = vmul.bf16 %v2195, %v2069
    %v2278 = vmul.bf16 %v2202, %v2070
    %v2279 = vmul.bf16 %v2209, %v2071
    %v2280 = vmul.bf16 %v2216, %v2072
    %v2281 = vmul.bf16 %v2223, %v2073
    %v2282 = vmul.bf16 %v2230, %v2074
    %v2283 = vmul.bf16 %v2237, %v2075
    %v2284 = vmul.bf16 %v2244, %v2076
    %v2285 = vmul.bf16 %v2251, %v2077
    %v2286 = vmul.bf16 %v2258, %v2078
    %v2287 = vmul.bf16 %v2265, %v2079
    %v2288 = vmul.bf16 %v2272, %v2080
    %v2289 = vunpack.c.l.bf16 %v2273
    %v2290 = vunpack.c.l.bf16 %v2274
    %v2291 = vunpack.c.l.bf16 %v2275
    %v2292 = vunpack.c.l.bf16 %v2276
    %v2293 = vunpack.c.l.bf16 %v2277
    %v2294 = vunpack.c.l.bf16 %v2278
    %v2295 = vunpack.c.l.bf16 %v2279
    %v2296 = vunpack.c.l.bf16 %v2280
    %v2297 = vunpack.c.l.bf16 %v2281
    %v2298 = vunpack.c.l.bf16 %v2282
    %v2299 = vunpack.c.l.bf16 %v2283
    %v2300 = vunpack.c.l.bf16 %v2284
    %v2301 = vunpack.c.l.bf16 %v2285
    %v2302 = vunpack.c.l.bf16 %v2286
    %v2303 = vunpack.c.l.bf16 %v2287
    %v2304 = vunpack.c.l.bf16 %v2288
    %v2305 = vadd.f32 %v2289, %v2290
    %v2306 = vadd.f32 %v2305, %v2291
    %v2307 = vadd.f32 %v2306, %v2292
    %v2308 = vadd.f32 %v2307, %v2293
    %v2309 = vadd.f32 %v2308, %v2294
    %v2310 = vadd.f32 %v2309, %v2295
    %v2311 = vadd.f32 %v2310, %v2296
    %v2312 = vadd.f32 %v2311, %v2297
    %v2313 = vadd.f32 %v2312, %v2298
    %v2314 = vadd.f32 %v2313, %v2299
    %v2315 = vadd.f32 %v2314, %v2300
    %v2316 = vadd.f32 %v2315, %v2301
    %v2317 = vadd.f32 %v2316, %v2302
    %v2318 = vadd.f32 %v2317, %v2303
    %v2319 = vadd.f32 %v2318, %v2304
    %2320 = vst [vmem:[#allocation2 + $0x28] sm:$0xff] %v2319
    %s2321 = sld [smem:[#allocation9 + $0x300]]
    %s2322 = sld [smem:[#allocation9 + $0x301]]
    %s2323 = sld [smem:[#allocation9 + $0x302]]
    %v2324 = vstv %s2321
    %v2325 = vmul.f32 %v65, %v2324
    %v2326 = vmul.f32 %v66, %v2324
    %v2327 = vstv %s2322
    %v2328 = vmul.f32 %v68, %v2327
    %v2329 = vmul.f32 %v69, %v2327
    %v2330 = vadd.f32 %v2325, %v2328
    %v2331 = vadd.f32 %v2326, %v2329
    %v2332 = vstv %s2323
    %v2333 = vmul.f32 %v71, %v2332
    %v2334 = vmul.f32 %v72, %v2332
    %v2335 = vadd.f32 %v2330, %v2333
    %v2336 = vadd.f32 %v2331, %v2334
    %v2337 = vmul.f32 %v2335, 2.0
    %v2338 = vmul.f32 %v2336, 2.0
    %v2339 = vsub.f32 %v81, %v2337
    %v2340 = vsub.f32 %v82, %v2338
    %s2341 = smul.f32 %s2321, %s2321
    %s2342 = smul.f32 %s2322, %s2322
    %s2343 = sadd.f32 %s2341, %s2342
    %s2344 = smul.f32 %s2323, %s2323
    %s2345 = sadd.f32 %s2343, %s2344
    %v2346 = vstv %s2345
    %v2347 = vadd.f32 %v2339, %v2346
    %v2348 = vadd.f32 %v2340, %v2346
    %v2349 = vmax.f32 %v2347, 0.0
    %v2350 = vmax.f32 %v2348, 0.0
    %v2351 = vrsqrt.pop %v2349
    %v2352 = vmul.f32 %v2349, %v2351
    %vm2353 = vcmp.eq.f32.partialorder %v2349, inf
    %v2354 = vsel %vm2353, %v2349, %v2352
    %vm2355 = vcmp.eq.f32.partialorder %v2349, 0.0
    %v2356 = vand.u32 %v2349, 2147483648
    %v2357 = vsel %vm2355, %v2356, %v2354
    %v2358 = vrsqrt.pop %v2350
    %v2359 = vmul.f32 %v2350, %v2358
    %vm2360 = vcmp.eq.f32.partialorder %v2350, inf
    %v2361 = vsel %vm2360, %v2350, %v2359
    %vm2362 = vcmp.eq.f32.partialorder %v2350, 0.0
    %v2363 = vand.u32 %v2350, 2147483648
    %v2364 = vsel %vm2362, %v2363, %v2361
    %v2365 = vmul.f32 %v2357, 8.333333
    %v2366 = vmul.f32 %v2364, 8.333333
    %v2367 = vsub.f32 1.0, %v2365
    %v2368 = vsub.f32 1.0, %v2366
    %v2369 = vmax.f32 %v2367, 0.0
    %v2370 = vmax.f32 %v2368, 0.0
    %v2371 = vpack.c.bf16 %v2370, %v2369
    %v2373 = vcombine.high %v2371, %v2371
    %v2375 = vunpack.c.l.s4 1966171168
    %v2376 = vunpack.c.0.s8 %v2375
    %v2377 = vlaneseq
    %v2378 = vshrl.u32 %v2377, 7
    %v2379 = vsub.s32 %v2376, %v2378
    %v2380 = vrot.slane %v2371, %v2379
    %v2382 = vunpack.c.l.s4 1966171168
    %v2383 = vunpack.c.0.s8 %v2382
    %v2384 = vlaneseq
    %v2385 = vshrl.u32 %v2384, 7
    %v2386 = vsub.s32 %v2383, %v2385
    %v2387 = vrot.slane %v2373, %v2386
    %v2388 = vcombine.high %v2380, %v2380
    %v2389 = vcombine.high %v2387, %v2387
    %v2391 = vunpack.c.l.s4 1966171168
    %v2392 = vunpack.c.0.s8 %v2391
    %v2393 = vlaneseq
    %v2394 = vshrl.u32 %v2393, 7
    %v2395 = vsub.s32 %v2392, %v2394
    %v2396 = vrot.slane %v2380, %v2395
    %v2398 = vunpack.c.l.s4 1966171168
    %v2399 = vunpack.c.0.s8 %v2398
    %v2400 = vlaneseq
    %v2401 = vshrl.u32 %v2400, 7
    %v2402 = vsub.s32 %v2399, %v2401
    %v2403 = vrot.slane %v2387, %v2402
    %v2405 = vunpack.c.l.s4 1966171168
    %v2406 = vunpack.c.0.s8 %v2405
    %v2407 = vlaneseq
    %v2408 = vshrl.u32 %v2407, 7
    %v2409 = vsub.s32 %v2406, %v2408
    %v2410 = vrot.slane %v2388, %v2409
    %v2412 = vunpack.c.l.s4 1966171168
    %v2413 = vunpack.c.0.s8 %v2412
    %v2414 = vlaneseq
    %v2415 = vshrl.u32 %v2414, 7
    %v2416 = vsub.s32 %v2413, %v2415
    %v2417 = vrot.slane %v2389, %v2416
    %v2418 = vcombine.high %v2396, %v2396
    %v2419 = vcombine.high %v2403, %v2403
    %v2420 = vcombine.high %v2410, %v2410
    %v2421 = vcombine.high %v2417, %v2417
    %v2422 = vunpack.i.l.s16 %v2396
    %v2423 = vunpack.i.h.s16 %v2396
    %v2424 = vunpack.i.l.s16 %v2410
    %v2425 = vunpack.i.h.s16 %v2410
    %v2426 = vunpack.i.l.s16 %v2418
    %v2427 = vunpack.i.h.s16 %v2418
    %v2428 = vunpack.i.l.s16 %v2420
    %v2429 = vunpack.i.h.s16 %v2420
    %v2430 = vunpack.i.l.s16 %v2403
    %v2431 = vunpack.i.h.s16 %v2403
    %v2432 = vunpack.i.l.s16 %v2417
    %v2433 = vunpack.i.h.s16 %v2417
    %v2434 = vunpack.i.l.s16 %v2419
    %v2435 = vunpack.i.h.s16 %v2419
    %v2436 = vunpack.i.l.s16 %v2421
    %v2437 = vunpack.i.h.s16 %v2421
    %v2438 = vld [vmem:[#allocation7] sm:$0xf]
    %v2439 = vld [vmem:[#allocation7 + $0x4] sm:$0xf]
    %v2440 = vld [vmem:[#allocation7 + $0x8] sm:$0xf]
    %v2441 = vld [vmem:[#allocation7 + $0xc] sm:$0xf]
    %v2442 = vld [vmem:[#allocation7 + $0x10] sm:$0xf]
    %v2443 = vld [vmem:[#allocation7 + $0x14] sm:$0xf]
    %v2444 = vld [vmem:[#allocation7 + $0x18] sm:$0xf]
    %v2445 = vld [vmem:[#allocation7 + $0x1c] sm:$0xf]
    %v2446 = vld [vmem:[#allocation7 + $0x20] sm:$0xf]
    %v2447 = vld [vmem:[#allocation7 + $0x24] sm:$0xf]
    %v2448 = vld [vmem:[#allocation7 + $0x28] sm:$0xf]
    %v2449 = vld [vmem:[#allocation7 + $0x2c] sm:$0xf]
    %v2450 = vld [vmem:[#allocation7 + $0x30] sm:$0xf]
    %v2451 = vld [vmem:[#allocation7 + $0x34] sm:$0xf]
    %v2452 = vld [vmem:[#allocation7 + $0x38] sm:$0xf]
    %v2453 = vld [vmem:[#allocation7 + $0x3c] sm:$0xf]
    %v2454 = vpack.i.b16 %v2422, %v2422
    %v2455 = vpack.i.b16 %v2423, %v2423
    %v2456 = vpack.i.b16 %v2424, %v2424
    %v2457 = vpack.i.b16 %v2425, %v2425
    %v2458 = vpack.i.b16 %v2426, %v2426
    %v2459 = vpack.i.b16 %v2427, %v2427
    %v2460 = vpack.i.b16 %v2428, %v2428
    %v2461 = vpack.i.b16 %v2429, %v2429
    %v2462 = vpack.i.b16 %v2430, %v2430
    %v2463 = vpack.i.b16 %v2431, %v2431
    %v2464 = vpack.i.b16 %v2432, %v2432
    %v2465 = vpack.i.b16 %v2433, %v2433
    %v2466 = vpack.i.b16 %v2434, %v2434
    %v2467 = vpack.i.b16 %v2435, %v2435
    %v2468 = vpack.i.b16 %v2436, %v2436
    %v2469 = vpack.i.b16 %v2437, %v2437
    %v2470 = vlaneseq
    %v2471 = vshrl.u32 %v2470, 7
    %v2472 = vsub.s32 0, %v2471
    %v2473 = vrot.slane %v2454, %v2472
    %v2474 = vlaneseq
    %v2475 = vshrl.u32 %v2474, 7
    %v2476 = vsub.s32 0, %v2475
    %v2477 = vrot.slane %v2455, %v2476
    %v2478 = vlaneseq
    %v2479 = vshrl.u32 %v2478, 7
    %v2480 = vsub.s32 0, %v2479
    %v2481 = vrot.slane %v2456, %v2480
    %v2482 = vlaneseq
    %v2483 = vshrl.u32 %v2482, 7
    %v2484 = vsub.s32 0, %v2483
    %v2485 = vrot.slane %v2457, %v2484
    %v2486 = vlaneseq
    %v2487 = vshrl.u32 %v2486, 7
    %v2488 = vsub.s32 0, %v2487
    %v2489 = vrot.slane %v2458, %v2488
    %v2490 = vlaneseq
    %v2491 = vshrl.u32 %v2490, 7
    %v2492 = vsub.s32 0, %v2491
    %v2493 = vrot.slane %v2459, %v2492
    %v2494 = vlaneseq
    %v2495 = vshrl.u32 %v2494, 7
    %v2496 = vsub.s32 0, %v2495
    %v2497 = vrot.slane %v2460, %v2496
    %v2498 = vlaneseq
    %v2499 = vshrl.u32 %v2498, 7
    %v2500 = vsub.s32 0, %v2499
    %v2501 = vrot.slane %v2461, %v2500
    %v2502 = vlaneseq
    %v2503 = vshrl.u32 %v2502, 7
    %v2504 = vsub.s32 0, %v2503
    %v2505 = vrot.slane %v2462, %v2504
    %v2506 = vlaneseq
    %v2507 = vshrl.u32 %v2506, 7
    %v2508 = vsub.s32 0, %v2507
    %v2509 = vrot.slane %v2463, %v2508
    %v2510 = vlaneseq
    %v2511 = vshrl.u32 %v2510, 7
    %v2512 = vsub.s32 0, %v2511
    %v2513 = vrot.slane %v2464, %v2512
    %v2514 = vlaneseq
    %v2515 = vshrl.u32 %v2514, 7
    %v2516 = vsub.s32 0, %v2515
    %v2517 = vrot.slane %v2465, %v2516
    %v2518 = vlaneseq
    %v2519 = vshrl.u32 %v2518, 7
    %v2520 = vsub.s32 0, %v2519
    %v2521 = vrot.slane %v2466, %v2520
    %v2522 = vlaneseq
    %v2523 = vshrl.u32 %v2522, 7
    %v2524 = vsub.s32 0, %v2523
    %v2525 = vrot.slane %v2467, %v2524
    %v2526 = vlaneseq
    %v2527 = vshrl.u32 %v2526, 7
    %v2528 = vsub.s32 0, %v2527
    %v2529 = vrot.slane %v2468, %v2528
    %v2530 = vlaneseq
    %v2531 = vshrl.u32 %v2530, 7
    %v2532 = vsub.s32 0, %v2531
    %v2533 = vrot.slane %v2469, %v2532
    %v2535 = vpack.i.b16 %v2473, %v2473
    %v2537 = vlaneseq
    %v2538 = vshrl.u32 %v2537, 7
    %v2539 = vsub.s32 0, %v2538
    %v2540 = vrot.slane %v2535, %v2539
    %v2542 = vpack.i.b16 %v2477, %v2477
    %v2544 = vlaneseq
    %v2545 = vshrl.u32 %v2544, 7
    %v2546 = vsub.s32 0, %v2545
    %v2547 = vrot.slane %v2542, %v2546
    %v2549 = vpack.i.b16 %v2481, %v2481
    %v2551 = vlaneseq
    %v2552 = vshrl.u32 %v2551, 7
    %v2553 = vsub.s32 0, %v2552
    %v2554 = vrot.slane %v2549, %v2553
    %v2556 = vpack.i.b16 %v2485, %v2485
    %v2558 = vlaneseq
    %v2559 = vshrl.u32 %v2558, 7
    %v2560 = vsub.s32 0, %v2559
    %v2561 = vrot.slane %v2556, %v2560
    %v2563 = vpack.i.b16 %v2489, %v2489
    %v2565 = vlaneseq
    %v2566 = vshrl.u32 %v2565, 7
    %v2567 = vsub.s32 0, %v2566
    %v2568 = vrot.slane %v2563, %v2567
    %v2570 = vpack.i.b16 %v2493, %v2493
    %v2572 = vlaneseq
    %v2573 = vshrl.u32 %v2572, 7
    %v2574 = vsub.s32 0, %v2573
    %v2575 = vrot.slane %v2570, %v2574
    %v2577 = vpack.i.b16 %v2497, %v2497
    %v2579 = vlaneseq
    %v2580 = vshrl.u32 %v2579, 7
    %v2581 = vsub.s32 0, %v2580
    %v2582 = vrot.slane %v2577, %v2581
    %v2584 = vpack.i.b16 %v2501, %v2501
    %v2586 = vlaneseq
    %v2587 = vshrl.u32 %v2586, 7
    %v2588 = vsub.s32 0, %v2587
    %v2589 = vrot.slane %v2584, %v2588
    %v2591 = vpack.i.b16 %v2505, %v2505
    %v2593 = vlaneseq
    %v2594 = vshrl.u32 %v2593, 7
    %v2595 = vsub.s32 0, %v2594
    %v2596 = vrot.slane %v2591, %v2595
    %v2598 = vpack.i.b16 %v2509, %v2509
    %v2600 = vlaneseq
    %v2601 = vshrl.u32 %v2600, 7
    %v2602 = vsub.s32 0, %v2601
    %v2603 = vrot.slane %v2598, %v2602
    %v2605 = vpack.i.b16 %v2513, %v2513
    %v2607 = vlaneseq
    %v2608 = vshrl.u32 %v2607, 7
    %v2609 = vsub.s32 0, %v2608
    %v2610 = vrot.slane %v2605, %v2609
    %v2612 = vpack.i.b16 %v2517, %v2517
    %v2614 = vlaneseq
    %v2615 = vshrl.u32 %v2614, 7
    %v2616 = vsub.s32 0, %v2615
    %v2617 = vrot.slane %v2612, %v2616
    %v2619 = vpack.i.b16 %v2521, %v2521
    %v2621 = vlaneseq
    %v2622 = vshrl.u32 %v2621, 7
    %v2623 = vsub.s32 0, %v2622
    %v2624 = vrot.slane %v2619, %v2623
    %v2626 = vpack.i.b16 %v2525, %v2525
    %v2628 = vlaneseq
    %v2629 = vshrl.u32 %v2628, 7
    %v2630 = vsub.s32 0, %v2629
    %v2631 = vrot.slane %v2626, %v2630
    %v2633 = vpack.i.b16 %v2529, %v2529
    %v2635 = vlaneseq
    %v2636 = vshrl.u32 %v2635, 7
    %v2637 = vsub.s32 0, %v2636
    %v2638 = vrot.slane %v2633, %v2637
    %v2640 = vpack.i.b16 %v2533, %v2533
    %v2642 = vlaneseq
    %v2643 = vshrl.u32 %v2642, 7
    %v2644 = vsub.s32 0, %v2643
    %v2645 = vrot.slane %v2640, %v2644
    %v2646 = vmul.bf16 %v2540, %v2438
    %v2647 = vmul.bf16 %v2547, %v2439
    %v2648 = vmul.bf16 %v2554, %v2440
    %v2649 = vmul.bf16 %v2561, %v2441
    %v2650 = vmul.bf16 %v2568, %v2442
    %v2651 = vmul.bf16 %v2575, %v2443
    %v2652 = vmul.bf16 %v2582, %v2444
    %v2653 = vmul.bf16 %v2589, %v2445
    %v2654 = vmul.bf16 %v2596, %v2446
    %v2655 = vmul.bf16 %v2603, %v2447
    %v2656 = vmul.bf16 %v2610, %v2448
    %v2657 = vmul.bf16 %v2617, %v2449
    %v2658 = vmul.bf16 %v2624, %v2450
    %v2659 = vmul.bf16 %v2631, %v2451
    %v2660 = vmul.bf16 %v2638, %v2452
    %v2661 = vmul.bf16 %v2645, %v2453
    %v2662 = vunpack.c.l.bf16 %v2646
    %v2663 = vunpack.c.l.bf16 %v2647
    %v2664 = vunpack.c.l.bf16 %v2648
    %v2665 = vunpack.c.l.bf16 %v2649
    %v2666 = vunpack.c.l.bf16 %v2650
    %v2667 = vunpack.c.l.bf16 %v2651
    %v2668 = vunpack.c.l.bf16 %v2652
    %v2669 = vunpack.c.l.bf16 %v2653
    %v2670 = vunpack.c.l.bf16 %v2654
    %v2671 = vunpack.c.l.bf16 %v2655
    %v2672 = vunpack.c.l.bf16 %v2656
    %v2673 = vunpack.c.l.bf16 %v2657
    %v2674 = vunpack.c.l.bf16 %v2658
    %v2675 = vunpack.c.l.bf16 %v2659
    %v2676 = vunpack.c.l.bf16 %v2660
    %v2677 = vunpack.c.l.bf16 %v2661
    %v2678 = vadd.f32 %v2662, %v2663
    %v2679 = vadd.f32 %v2678, %v2664
    %v2680 = vadd.f32 %v2679, %v2665
    %v2681 = vadd.f32 %v2680, %v2666
    %v2682 = vadd.f32 %v2681, %v2667
    %v2683 = vadd.f32 %v2682, %v2668
    %v2684 = vadd.f32 %v2683, %v2669
    %v2685 = vadd.f32 %v2684, %v2670
    %v2686 = vadd.f32 %v2685, %v2671
    %v2687 = vadd.f32 %v2686, %v2672
    %v2688 = vadd.f32 %v2687, %v2673
    %v2689 = vadd.f32 %v2688, %v2674
    %v2690 = vadd.f32 %v2689, %v2675
    %v2691 = vadd.f32 %v2690, %v2676
    %v2692 = vadd.f32 %v2691, %v2677
    %2693 = vst [vmem:[#allocation2 + $0x30] sm:$0xff] %v2692
    %s2694 = sld [smem:[#allocation9 + $0x380]]
    %s2695 = sld [smem:[#allocation9 + $0x381]]
    %s2696 = sld [smem:[#allocation9 + $0x382]]
    %v2697 = vstv %s2694
    %v2698 = vmul.f32 %v65, %v2697
    %v2699 = vmul.f32 %v66, %v2697
    %v2700 = vstv %s2695
    %v2701 = vmul.f32 %v68, %v2700
    %v2702 = vmul.f32 %v69, %v2700
    %v2703 = vadd.f32 %v2698, %v2701
    %v2704 = vadd.f32 %v2699, %v2702
    %v2705 = vstv %s2696
    %v2706 = vmul.f32 %v71, %v2705
    %v2707 = vmul.f32 %v72, %v2705
    %v2708 = vadd.f32 %v2703, %v2706
    %v2709 = vadd.f32 %v2704, %v2707
    %v2710 = vmul.f32 %v2708, 2.0
    %v2711 = vmul.f32 %v2709, 2.0
    %v2712 = vsub.f32 %v81, %v2710
    %v2713 = vsub.f32 %v82, %v2711
    %s2714 = smul.f32 %s2694, %s2694
    %s2715 = smul.f32 %s2695, %s2695
    %s2716 = sadd.f32 %s2714, %s2715
    %s2717 = smul.f32 %s2696, %s2696
    %s2718 = sadd.f32 %s2716, %s2717
    %v2719 = vstv %s2718
    %v2720 = vadd.f32 %v2712, %v2719
    %v2721 = vadd.f32 %v2713, %v2719
    %v2722 = vmax.f32 %v2720, 0.0
    %v2723 = vmax.f32 %v2721, 0.0
    %v2724 = vrsqrt.pop %v2722
    %v2725 = vmul.f32 %v2722, %v2724
    %vm2726 = vcmp.eq.f32.partialorder %v2722, inf
    %v2727 = vsel %vm2726, %v2722, %v2725
    %vm2728 = vcmp.eq.f32.partialorder %v2722, 0.0
    %v2729 = vand.u32 %v2722, 2147483648
    %v2730 = vsel %vm2728, %v2729, %v2727
    %v2731 = vrsqrt.pop %v2723
    %v2732 = vmul.f32 %v2723, %v2731
    %vm2733 = vcmp.eq.f32.partialorder %v2723, inf
    %v2734 = vsel %vm2733, %v2723, %v2732
    %vm2735 = vcmp.eq.f32.partialorder %v2723, 0.0
    %v2736 = vand.u32 %v2723, 2147483648
    %v2737 = vsel %vm2735, %v2736, %v2734
    %v2738 = vmul.f32 %v2730, 8.333333
    %v2739 = vmul.f32 %v2737, 8.333333
    %v2740 = vsub.f32 1.0, %v2738
    %v2741 = vsub.f32 1.0, %v2739
    %v2742 = vmax.f32 %v2740, 0.0
    %v2743 = vmax.f32 %v2741, 0.0
    %v2744 = vpack.c.bf16 %v2743, %v2742
    %v2746 = vcombine.high %v2744, %v2744
    %v2748 = vunpack.c.l.s4 1966171168
    %v2749 = vunpack.c.0.s8 %v2748
    %v2750 = vlaneseq
    %v2751 = vshrl.u32 %v2750, 7
    %v2752 = vsub.s32 %v2749, %v2751
    %v2753 = vrot.slane %v2744, %v2752
    %v2755 = vunpack.c.l.s4 1966171168
    %v2756 = vunpack.c.0.s8 %v2755
    %v2757 = vlaneseq
    %v2758 = vshrl.u32 %v2757, 7
    %v2759 = vsub.s32 %v2756, %v2758
    %v2760 = vrot.slane %v2746, %v2759
    %v2761 = vcombine.high %v2753, %v2753
    %v2762 = vcombine.high %v2760, %v2760
    %v2764 = vunpack.c.l.s4 1966171168
    %v2765 = vunpack.c.0.s8 %v2764
    %v2766 = vlaneseq
    %v2767 = vshrl.u32 %v2766, 7
    %v2768 = vsub.s32 %v2765, %v2767
    %v2769 = vrot.slane %v2753, %v2768
    %v2771 = vunpack.c.l.s4 1966171168
    %v2772 = vunpack.c.0.s8 %v2771
    %v2773 = vlaneseq
    %v2774 = vshrl.u32 %v2773, 7
    %v2775 = vsub.s32 %v2772, %v2774
    %v2776 = vrot.slane %v2760, %v2775
    %v2778 = vunpack.c.l.s4 1966171168
    %v2779 = vunpack.c.0.s8 %v2778
    %v2780 = vlaneseq
    %v2781 = vshrl.u32 %v2780, 7
    %v2782 = vsub.s32 %v2779, %v2781
    %v2783 = vrot.slane %v2761, %v2782
    %v2785 = vunpack.c.l.s4 1966171168
    %v2786 = vunpack.c.0.s8 %v2785
    %v2787 = vlaneseq
    %v2788 = vshrl.u32 %v2787, 7
    %v2789 = vsub.s32 %v2786, %v2788
    %v2790 = vrot.slane %v2762, %v2789
    %v2791 = vcombine.high %v2769, %v2769
    %v2792 = vcombine.high %v2776, %v2776
    %v2793 = vcombine.high %v2783, %v2783
    %v2794 = vcombine.high %v2790, %v2790
    %v2795 = vunpack.i.l.s16 %v2769
    %v2796 = vunpack.i.h.s16 %v2769
    %v2797 = vunpack.i.l.s16 %v2783
    %v2798 = vunpack.i.h.s16 %v2783
    %v2799 = vunpack.i.l.s16 %v2791
    %v2800 = vunpack.i.h.s16 %v2791
    %v2801 = vunpack.i.l.s16 %v2793
    %v2802 = vunpack.i.h.s16 %v2793
    %v2803 = vunpack.i.l.s16 %v2776
    %v2804 = vunpack.i.h.s16 %v2776
    %v2805 = vunpack.i.l.s16 %v2790
    %v2806 = vunpack.i.h.s16 %v2790
    %v2807 = vunpack.i.l.s16 %v2792
    %v2808 = vunpack.i.h.s16 %v2792
    %v2809 = vunpack.i.l.s16 %v2794
    %v2810 = vunpack.i.h.s16 %v2794
    %v2811 = vld [vmem:[#allocation7] sm:$0xf]
    %v2812 = vld [vmem:[#allocation7 + $0x4] sm:$0xf]
    %v2813 = vld [vmem:[#allocation7 + $0x8] sm:$0xf]
    %v2814 = vld [vmem:[#allocation7 + $0xc] sm:$0xf]
    %v2815 = vld [vmem:[#allocation7 + $0x10] sm:$0xf]
    %v2816 = vld [vmem:[#allocation7 + $0x14] sm:$0xf]
    %v2817 = vld [vmem:[#allocation7 + $0x18] sm:$0xf]
    %v2818 = vld [vmem:[#allocation7 + $0x1c] sm:$0xf]
    %v2819 = vld [vmem:[#allocation7 + $0x20] sm:$0xf]
    %v2820 = vld [vmem:[#allocation7 + $0x24] sm:$0xf]
    %v2821 = vld [vmem:[#allocation7 + $0x28] sm:$0xf]
    %v2822 = vld [vmem:[#allocation7 + $0x2c] sm:$0xf]
    %v2823 = vld [vmem:[#allocation7 + $0x30] sm:$0xf]
    %v2824 = vld [vmem:[#allocation7 + $0x34] sm:$0xf]
    %v2825 = vld [vmem:[#allocation7 + $0x38] sm:$0xf]
    %v2826 = vld [vmem:[#allocation7 + $0x3c] sm:$0xf]
    %v2827 = vpack.i.b16 %v2795, %v2795
    %v2828 = vpack.i.b16 %v2796, %v2796
    %v2829 = vpack.i.b16 %v2797, %v2797
    %v2830 = vpack.i.b16 %v2798, %v2798
    %v2831 = vpack.i.b16 %v2799, %v2799
    %v2832 = vpack.i.b16 %v2800, %v2800
    %v2833 = vpack.i.b16 %v2801, %v2801
    %v2834 = vpack.i.b16 %v2802, %v2802
    %v2835 = vpack.i.b16 %v2803, %v2803
    %v2836 = vpack.i.b16 %v2804, %v2804
    %v2837 = vpack.i.b16 %v2805, %v2805
    %v2838 = vpack.i.b16 %v2806, %v2806
    %v2839 = vpack.i.b16 %v2807, %v2807
    %v2840 = vpack.i.b16 %v2808, %v2808
    %v2841 = vpack.i.b16 %v2809, %v2809
    %v2842 = vpack.i.b16 %v2810, %v2810
    %v2843 = vlaneseq
    %v2844 = vshrl.u32 %v2843, 7
    %v2845 = vsub.s32 0, %v2844
    %v2846 = vrot.slane %v2827, %v2845
    %v2847 = vlaneseq
    %v2848 = vshrl.u32 %v2847, 7
    %v2849 = vsub.s32 0, %v2848
    %v2850 = vrot.slane %v2828, %v2849
    %v2851 = vlaneseq
    %v2852 = vshrl.u32 %v2851, 7
    %v2853 = vsub.s32 0, %v2852
    %v2854 = vrot.slane %v2829, %v2853
    %v2855 = vlaneseq
    %v2856 = vshrl.u32 %v2855, 7
    %v2857 = vsub.s32 0, %v2856
    %v2858 = vrot.slane %v2830, %v2857
    %v2859 = vlaneseq
    %v2860 = vshrl.u32 %v2859, 7
    %v2861 = vsub.s32 0, %v2860
    %v2862 = vrot.slane %v2831, %v2861
    %v2863 = vlaneseq
    %v2864 = vshrl.u32 %v2863, 7
    %v2865 = vsub.s32 0, %v2864
    %v2866 = vrot.slane %v2832, %v2865
    %v2867 = vlaneseq
    %v2868 = vshrl.u32 %v2867, 7
    %v2869 = vsub.s32 0, %v2868
    %v2870 = vrot.slane %v2833, %v2869
    %v2871 = vlaneseq
    %v2872 = vshrl.u32 %v2871, 7
    %v2873 = vsub.s32 0, %v2872
    %v2874 = vrot.slane %v2834, %v2873
    %v2875 = vlaneseq
    %v2876 = vshrl.u32 %v2875, 7
    %v2877 = vsub.s32 0, %v2876
    %v2878 = vrot.slane %v2835, %v2877
    %v2879 = vlaneseq
    %v2880 = vshrl.u32 %v2879, 7
    %v2881 = vsub.s32 0, %v2880
    %v2882 = vrot.slane %v2836, %v2881
    %v2883 = vlaneseq
    %v2884 = vshrl.u32 %v2883, 7
    %v2885 = vsub.s32 0, %v2884
    %v2886 = vrot.slane %v2837, %v2885
    %v2887 = vlaneseq
    %v2888 = vshrl.u32 %v2887, 7
    %v2889 = vsub.s32 0, %v2888
    %v2890 = vrot.slane %v2838, %v2889
    %v2891 = vlaneseq
    %v2892 = vshrl.u32 %v2891, 7
    %v2893 = vsub.s32 0, %v2892
    %v2894 = vrot.slane %v2839, %v2893
    %v2895 = vlaneseq
    %v2896 = vshrl.u32 %v2895, 7
    %v2897 = vsub.s32 0, %v2896
    %v2898 = vrot.slane %v2840, %v2897
    %v2899 = vlaneseq
    %v2900 = vshrl.u32 %v2899, 7
    %v2901 = vsub.s32 0, %v2900
    %v2902 = vrot.slane %v2841, %v2901
    %v2903 = vlaneseq
    %v2904 = vshrl.u32 %v2903, 7
    %v2905 = vsub.s32 0, %v2904
    %v2906 = vrot.slane %v2842, %v2905
    %v2908 = vpack.i.b16 %v2846, %v2846
    %v2910 = vlaneseq
    %v2911 = vshrl.u32 %v2910, 7
    %v2912 = vsub.s32 0, %v2911
    %v2913 = vrot.slane %v2908, %v2912
    %v2915 = vpack.i.b16 %v2850, %v2850
    %v2917 = vlaneseq
    %v2918 = vshrl.u32 %v2917, 7
    %v2919 = vsub.s32 0, %v2918
    %v2920 = vrot.slane %v2915, %v2919
    %v2922 = vpack.i.b16 %v2854, %v2854
    %v2924 = vlaneseq
    %v2925 = vshrl.u32 %v2924, 7
    %v2926 = vsub.s32 0, %v2925
    %v2927 = vrot.slane %v2922, %v2926
    %v2929 = vpack.i.b16 %v2858, %v2858
    %v2931 = vlaneseq
    %v2932 = vshrl.u32 %v2931, 7
    %v2933 = vsub.s32 0, %v2932
    %v2934 = vrot.slane %v2929, %v2933
    %v2936 = vpack.i.b16 %v2862, %v2862
    %v2938 = vlaneseq
    %v2939 = vshrl.u32 %v2938, 7
    %v2940 = vsub.s32 0, %v2939
    %v2941 = vrot.slane %v2936, %v2940
    %v2943 = vpack.i.b16 %v2866, %v2866
    %v2945 = vlaneseq
    %v2946 = vshrl.u32 %v2945, 7
    %v2947 = vsub.s32 0, %v2946
    %v2948 = vrot.slane %v2943, %v2947
    %v2950 = vpack.i.b16 %v2870, %v2870
    %v2952 = vlaneseq
    %v2953 = vshrl.u32 %v2952, 7
    %v2954 = vsub.s32 0, %v2953
    %v2955 = vrot.slane %v2950, %v2954
    %v2957 = vpack.i.b16 %v2874, %v2874
    %v2959 = vlaneseq
    %v2960 = vshrl.u32 %v2959, 7
    %v2961 = vsub.s32 0, %v2960
    %v2962 = vrot.slane %v2957, %v2961
    %v2964 = vpack.i.b16 %v2878, %v2878
    %v2966 = vlaneseq
    %v2967 = vshrl.u32 %v2966, 7
    %v2968 = vsub.s32 0, %v2967
    %v2969 = vrot.slane %v2964, %v2968
    %v2971 = vpack.i.b16 %v2882, %v2882
    %v2973 = vlaneseq
    %v2974 = vshrl.u32 %v2973, 7
    %v2975 = vsub.s32 0, %v2974
    %v2976 = vrot.slane %v2971, %v2975
    %v2978 = vpack.i.b16 %v2886, %v2886
    %v2980 = vlaneseq
    %v2981 = vshrl.u32 %v2980, 7
    %v2982 = vsub.s32 0, %v2981
    %v2983 = vrot.slane %v2978, %v2982
    %v2985 = vpack.i.b16 %v2890, %v2890
    %v2987 = vlaneseq
    %v2988 = vshrl.u32 %v2987, 7
    %v2989 = vsub.s32 0, %v2988
    %v2990 = vrot.slane %v2985, %v2989
    %v2992 = vpack.i.b16 %v2894, %v2894
    %v2994 = vlaneseq
    %v2995 = vshrl.u32 %v2994, 7
    %v2996 = vsub.s32 0, %v2995
    %v2997 = vrot.slane %v2992, %v2996
    %v2999 = vpack.i.b16 %v2898, %v2898
    %v3001 = vlaneseq
    %v3002 = vshrl.u32 %v3001, 7
    %v3003 = vsub.s32 0, %v3002
    %v3004 = vrot.slane %v2999, %v3003
    %v3006 = vpack.i.b16 %v2902, %v2902
    %v3008 = vlaneseq
    %v3009 = vshrl.u32 %v3008, 7
    %v3010 = vsub.s32 0, %v3009
    %v3011 = vrot.slane %v3006, %v3010
    %v3013 = vpack.i.b16 %v2906, %v2906
    %v3015 = vlaneseq
    %v3016 = vshrl.u32 %v3015, 7
    %v3017 = vsub.s32 0, %v3016
    %v3018 = vrot.slane %v3013, %v3017
    %v3019 = vmul.bf16 %v2913, %v2811
    %v3020 = vmul.bf16 %v2920, %v2812
    %v3021 = vmul.bf16 %v2927, %v2813
    %v3022 = vmul.bf16 %v2934, %v2814
    %v3023 = vmul.bf16 %v2941, %v2815
    %v3024 = vmul.bf16 %v2948, %v2816
    %v3025 = vmul.bf16 %v2955, %v2817
    %v3026 = vmul.bf16 %v2962, %v2818
    %v3027 = vmul.bf16 %v2969, %v2819
    %v3028 = vmul.bf16 %v2976, %v2820
    %v3029 = vmul.bf16 %v2983, %v2821
    %v3030 = vmul.bf16 %v2990, %v2822
    %v3031 = vmul.bf16 %v2997, %v2823
    %v3032 = vmul.bf16 %v3004, %v2824
    %v3033 = vmul.bf16 %v3011, %v2825
    %v3034 = vmul.bf16 %v3018, %v2826
    %v3035 = vunpack.c.l.bf16 %v3019
    %v3036 = vunpack.c.l.bf16 %v3020
    %v3037 = vunpack.c.l.bf16 %v3021
    %v3038 = vunpack.c.l.bf16 %v3022
    %v3039 = vunpack.c.l.bf16 %v3023
    %v3040 = vunpack.c.l.bf16 %v3024
    %v3041 = vunpack.c.l.bf16 %v3025
    %v3042 = vunpack.c.l.bf16 %v3026
    %v3043 = vunpack.c.l.bf16 %v3027
    %v3044 = vunpack.c.l.bf16 %v3028
    %v3045 = vunpack.c.l.bf16 %v3029
    %v3046 = vunpack.c.l.bf16 %v3030
    %v3047 = vunpack.c.l.bf16 %v3031
    %v3048 = vunpack.c.l.bf16 %v3032
    %v3049 = vunpack.c.l.bf16 %v3033
    %v3050 = vunpack.c.l.bf16 %v3034
    %v3051 = vadd.f32 %v3035, %v3036
    %v3052 = vadd.f32 %v3051, %v3037
    %v3053 = vadd.f32 %v3052, %v3038
    %v3054 = vadd.f32 %v3053, %v3039
    %v3055 = vadd.f32 %v3054, %v3040
    %v3056 = vadd.f32 %v3055, %v3041
    %v3057 = vadd.f32 %v3056, %v3042
    %v3058 = vadd.f32 %v3057, %v3043
    %v3059 = vadd.f32 %v3058, %v3044
    %v3060 = vadd.f32 %v3059, %v3045
    %v3061 = vadd.f32 %v3060, %v3046
    %v3062 = vadd.f32 %v3061, %v3047
    %v3063 = vadd.f32 %v3062, %v3048
    %v3064 = vadd.f32 %v3063, %v3049
    %v3065 = vadd.f32 %v3064, %v3050
    %3066 = vst [vmem:[#allocation2 + $0x38] sm:$0xff] %v3065
    %s3067 = sld [smem:[#allocation9 + $0x400]]
    %s3068 = sld [smem:[#allocation9 + $0x401]]
    %s3069 = sld [smem:[#allocation9 + $0x402]]
    %v3070 = vstv %s3067
    %v3071 = vmul.f32 %v65, %v3070
    %v3072 = vmul.f32 %v66, %v3070
    %v3073 = vstv %s3068
    %v3074 = vmul.f32 %v68, %v3073
    %v3075 = vmul.f32 %v69, %v3073
    %v3076 = vadd.f32 %v3071, %v3074
    %v3077 = vadd.f32 %v3072, %v3075
    %v3078 = vstv %s3069
    %v3079 = vmul.f32 %v71, %v3078
    %v3080 = vmul.f32 %v72, %v3078
    %v3081 = vadd.f32 %v3076, %v3079
    %v3082 = vadd.f32 %v3077, %v3080
    %v3083 = vmul.f32 %v3081, 2.0
    %v3084 = vmul.f32 %v3082, 2.0
    %v3085 = vsub.f32 %v81, %v3083
    %v3086 = vsub.f32 %v82, %v3084
    %s3087 = smul.f32 %s3067, %s3067
    %s3088 = smul.f32 %s3068, %s3068
    %s3089 = sadd.f32 %s3087, %s3088
    %s3090 = smul.f32 %s3069, %s3069
    %s3091 = sadd.f32 %s3089, %s3090
    %v3092 = vstv %s3091
    %v3093 = vadd.f32 %v3085, %v3092
    %v3094 = vadd.f32 %v3086, %v3092
    %v3095 = vmax.f32 %v3093, 0.0
    %v3096 = vmax.f32 %v3094, 0.0
    %v3097 = vrsqrt.pop %v3095
    %v3098 = vmul.f32 %v3095, %v3097
    %vm3099 = vcmp.eq.f32.partialorder %v3095, inf
    %v3100 = vsel %vm3099, %v3095, %v3098
    %vm3101 = vcmp.eq.f32.partialorder %v3095, 0.0
    %v3102 = vand.u32 %v3095, 2147483648
    %v3103 = vsel %vm3101, %v3102, %v3100
    %v3104 = vrsqrt.pop %v3096
    %v3105 = vmul.f32 %v3096, %v3104
    %vm3106 = vcmp.eq.f32.partialorder %v3096, inf
    %v3107 = vsel %vm3106, %v3096, %v3105
    %vm3108 = vcmp.eq.f32.partialorder %v3096, 0.0
    %v3109 = vand.u32 %v3096, 2147483648
    %v3110 = vsel %vm3108, %v3109, %v3107
    %v3111 = vmul.f32 %v3103, 8.333333
    %v3112 = vmul.f32 %v3110, 8.333333
    %v3113 = vsub.f32 1.0, %v3111
    %v3114 = vsub.f32 1.0, %v3112
    %v3115 = vmax.f32 %v3113, 0.0
    %v3116 = vmax.f32 %v3114, 0.0
    %v3117 = vpack.c.bf16 %v3116, %v3115
    %v3119 = vcombine.high %v3117, %v3117
    %v3121 = vunpack.c.l.s4 1966171168
    %v3122 = vunpack.c.0.s8 %v3121
    %v3123 = vlaneseq
    %v3124 = vshrl.u32 %v3123, 7
    %v3125 = vsub.s32 %v3122, %v3124
    %v3126 = vrot.slane %v3117, %v3125
    %v3128 = vunpack.c.l.s4 1966171168
    %v3129 = vunpack.c.0.s8 %v3128
    %v3130 = vlaneseq
    %v3131 = vshrl.u32 %v3130, 7
    %v3132 = vsub.s32 %v3129, %v3131
    %v3133 = vrot.slane %v3119, %v3132
    %v3134 = vcombine.high %v3126, %v3126
    %v3135 = vcombine.high %v3133, %v3133
    %v3137 = vunpack.c.l.s4 1966171168
    %v3138 = vunpack.c.0.s8 %v3137
    %v3139 = vlaneseq
    %v3140 = vshrl.u32 %v3139, 7
    %v3141 = vsub.s32 %v3138, %v3140
    %v3142 = vrot.slane %v3126, %v3141
    %v3144 = vunpack.c.l.s4 1966171168
    %v3145 = vunpack.c.0.s8 %v3144
    %v3146 = vlaneseq
    %v3147 = vshrl.u32 %v3146, 7
    %v3148 = vsub.s32 %v3145, %v3147
    %v3149 = vrot.slane %v3133, %v3148
    %v3151 = vunpack.c.l.s4 1966171168
    %v3152 = vunpack.c.0.s8 %v3151
    %v3153 = vlaneseq
    %v3154 = vshrl.u32 %v3153, 7
    %v3155 = vsub.s32 %v3152, %v3154
    %v3156 = vrot.slane %v3134, %v3155
    %v3158 = vunpack.c.l.s4 1966171168
    %v3159 = vunpack.c.0.s8 %v3158
    %v3160 = vlaneseq
    %v3161 = vshrl.u32 %v3160, 7
    %v3162 = vsub.s32 %v3159, %v3161
    %v3163 = vrot.slane %v3135, %v3162
    %v3164 = vcombine.high %v3142, %v3142
    %v3165 = vcombine.high %v3149, %v3149
    %v3166 = vcombine.high %v3156, %v3156
    %v3167 = vcombine.high %v3163, %v3163
    %v3168 = vunpack.i.l.s16 %v3142
    %v3169 = vunpack.i.h.s16 %v3142
    %v3170 = vunpack.i.l.s16 %v3156
    %v3171 = vunpack.i.h.s16 %v3156
    %v3172 = vunpack.i.l.s16 %v3164
    %v3173 = vunpack.i.h.s16 %v3164
    %v3174 = vunpack.i.l.s16 %v3166
    %v3175 = vunpack.i.h.s16 %v3166
    %v3176 = vunpack.i.l.s16 %v3149
    %v3177 = vunpack.i.h.s16 %v3149
    %v3178 = vunpack.i.l.s16 %v3163
    %v3179 = vunpack.i.h.s16 %v3163
    %v3180 = vunpack.i.l.s16 %v3165
    %v3181 = vunpack.i.h.s16 %v3165
    %v3182 = vunpack.i.l.s16 %v3167
    %v3183 = vunpack.i.h.s16 %v3167
    %v3184 = vld [vmem:[#allocation7] sm:$0xf]
    %v3185 = vld [vmem:[#allocation7 + $0x4] sm:$0xf]
    %v3186 = vld [vmem:[#allocation7 + $0x8] sm:$0xf]
    %v3187 = vld [vmem:[#allocation7 + $0xc] sm:$0xf]
    %v3188 = vld [vmem:[#allocation7 + $0x10] sm:$0xf]
    %v3189 = vld [vmem:[#allocation7 + $0x14] sm:$0xf]
    %v3190 = vld [vmem:[#allocation7 + $0x18] sm:$0xf]
    %v3191 = vld [vmem:[#allocation7 + $0x1c] sm:$0xf]
    %v3192 = vld [vmem:[#allocation7 + $0x20] sm:$0xf]
    %v3193 = vld [vmem:[#allocation7 + $0x24] sm:$0xf]
    %v3194 = vld [vmem:[#allocation7 + $0x28] sm:$0xf]
    %v3195 = vld [vmem:[#allocation7 + $0x2c] sm:$0xf]
    %v3196 = vld [vmem:[#allocation7 + $0x30] sm:$0xf]
    %v3197 = vld [vmem:[#allocation7 + $0x34] sm:$0xf]
    %v3198 = vld [vmem:[#allocation7 + $0x38] sm:$0xf]
    %v3199 = vld [vmem:[#allocation7 + $0x3c] sm:$0xf]
    %v3200 = vpack.i.b16 %v3168, %v3168
    %v3201 = vpack.i.b16 %v3169, %v3169
    %v3202 = vpack.i.b16 %v3170, %v3170
    %v3203 = vpack.i.b16 %v3171, %v3171
    %v3204 = vpack.i.b16 %v3172, %v3172
    %v3205 = vpack.i.b16 %v3173, %v3173
    %v3206 = vpack.i.b16 %v3174, %v3174
    %v3207 = vpack.i.b16 %v3175, %v3175
    %v3208 = vpack.i.b16 %v3176, %v3176
    %v3209 = vpack.i.b16 %v3177, %v3177
    %v3210 = vpack.i.b16 %v3178, %v3178
    %v3211 = vpack.i.b16 %v3179, %v3179
    %v3212 = vpack.i.b16 %v3180, %v3180
    %v3213 = vpack.i.b16 %v3181, %v3181
    %v3214 = vpack.i.b16 %v3182, %v3182
    %v3215 = vpack.i.b16 %v3183, %v3183
    %v3216 = vlaneseq
    %v3217 = vshrl.u32 %v3216, 7
    %v3218 = vsub.s32 0, %v3217
    %v3219 = vrot.slane %v3200, %v3218
    %v3220 = vlaneseq
    %v3221 = vshrl.u32 %v3220, 7
    %v3222 = vsub.s32 0, %v3221
    %v3223 = vrot.slane %v3201, %v3222
    %v3224 = vlaneseq
    %v3225 = vshrl.u32 %v3224, 7
    %v3226 = vsub.s32 0, %v3225
    %v3227 = vrot.slane %v3202, %v3226
    %v3228 = vlaneseq
    %v3229 = vshrl.u32 %v3228, 7
    %v3230 = vsub.s32 0, %v3229
    %v3231 = vrot.slane %v3203, %v3230
    %v3232 = vlaneseq
    %v3233 = vshrl.u32 %v3232, 7
    %v3234 = vsub.s32 0, %v3233
    %v3235 = vrot.slane %v3204, %v3234
    %v3236 = vlaneseq
    %v3237 = vshrl.u32 %v3236, 7
    %v3238 = vsub.s32 0, %v3237
    %v3239 = vrot.slane %v3205, %v3238
    %v3240 = vlaneseq
    %v3241 = vshrl.u32 %v3240, 7
    %v3242 = vsub.s32 0, %v3241
    %v3243 = vrot.slane %v3206, %v3242
    %v3244 = vlaneseq
    %v3245 = vshrl.u32 %v3244, 7
    %v3246 = vsub.s32 0, %v3245
    %v3247 = vrot.slane %v3207, %v3246
    %v3248 = vlaneseq
    %v3249 = vshrl.u32 %v3248, 7
    %v3250 = vsub.s32 0, %v3249
    %v3251 = vrot.slane %v3208, %v3250
    %v3252 = vlaneseq
    %v3253 = vshrl.u32 %v3252, 7
    %v3254 = vsub.s32 0, %v3253
    %v3255 = vrot.slane %v3209, %v3254
    %v3256 = vlaneseq
    %v3257 = vshrl.u32 %v3256, 7
    %v3258 = vsub.s32 0, %v3257
    %v3259 = vrot.slane %v3210, %v3258
    %v3260 = vlaneseq
    %v3261 = vshrl.u32 %v3260, 7
    %v3262 = vsub.s32 0, %v3261
    %v3263 = vrot.slane %v3211, %v3262
    %v3264 = vlaneseq
    %v3265 = vshrl.u32 %v3264, 7
    %v3266 = vsub.s32 0, %v3265
    %v3267 = vrot.slane %v3212, %v3266
    %v3268 = vlaneseq
    %v3269 = vshrl.u32 %v3268, 7
    %v3270 = vsub.s32 0, %v3269
    %v3271 = vrot.slane %v3213, %v3270
    %v3272 = vlaneseq
    %v3273 = vshrl.u32 %v3272, 7
    %v3274 = vsub.s32 0, %v3273
    %v3275 = vrot.slane %v3214, %v3274
    %v3276 = vlaneseq
    %v3277 = vshrl.u32 %v3276, 7
    %v3278 = vsub.s32 0, %v3277
    %v3279 = vrot.slane %v3215, %v3278
    %v3281 = vpack.i.b16 %v3219, %v3219
    %v3283 = vlaneseq
    %v3284 = vshrl.u32 %v3283, 7
    %v3285 = vsub.s32 0, %v3284
    %v3286 = vrot.slane %v3281, %v3285
    %v3288 = vpack.i.b16 %v3223, %v3223
    %v3290 = vlaneseq
    %v3291 = vshrl.u32 %v3290, 7
    %v3292 = vsub.s32 0, %v3291
    %v3293 = vrot.slane %v3288, %v3292
    %v3295 = vpack.i.b16 %v3227, %v3227
    %v3297 = vlaneseq
    %v3298 = vshrl.u32 %v3297, 7
    %v3299 = vsub.s32 0, %v3298
    %v3300 = vrot.slane %v3295, %v3299
    %v3302 = vpack.i.b16 %v3231, %v3231
    %v3304 = vlaneseq
    %v3305 = vshrl.u32 %v3304, 7
    %v3306 = vsub.s32 0, %v3305
    %v3307 = vrot.slane %v3302, %v3306
    %v3309 = vpack.i.b16 %v3235, %v3235
    %v3311 = vlaneseq
    %v3312 = vshrl.u32 %v3311, 7
    %v3313 = vsub.s32 0, %v3312
    %v3314 = vrot.slane %v3309, %v3313
    %v3316 = vpack.i.b16 %v3239, %v3239
    %v3318 = vlaneseq
    %v3319 = vshrl.u32 %v3318, 7
    %v3320 = vsub.s32 0, %v3319
    %v3321 = vrot.slane %v3316, %v3320
    %v3323 = vpack.i.b16 %v3243, %v3243
    %v3325 = vlaneseq
    %v3326 = vshrl.u32 %v3325, 7
    %v3327 = vsub.s32 0, %v3326
    %v3328 = vrot.slane %v3323, %v3327
    %v3330 = vpack.i.b16 %v3247, %v3247
    %v3332 = vlaneseq
    %v3333 = vshrl.u32 %v3332, 7
    %v3334 = vsub.s32 0, %v3333
    %v3335 = vrot.slane %v3330, %v3334
    %v3337 = vpack.i.b16 %v3251, %v3251
    %v3339 = vlaneseq
    %v3340 = vshrl.u32 %v3339, 7
    %v3341 = vsub.s32 0, %v3340
    %v3342 = vrot.slane %v3337, %v3341
    %v3344 = vpack.i.b16 %v3255, %v3255
    %v3346 = vlaneseq
    %v3347 = vshrl.u32 %v3346, 7
    %v3348 = vsub.s32 0, %v3347
    %v3349 = vrot.slane %v3344, %v3348
    %v3351 = vpack.i.b16 %v3259, %v3259
    %v3353 = vlaneseq
    %v3354 = vshrl.u32 %v3353, 7
    %v3355 = vsub.s32 0, %v3354
    %v3356 = vrot.slane %v3351, %v3355
    %v3358 = vpack.i.b16 %v3263, %v3263
    %v3360 = vlaneseq
    %v3361 = vshrl.u32 %v3360, 7
    %v3362 = vsub.s32 0, %v3361
    %v3363 = vrot.slane %v3358, %v3362
    %v3365 = vpack.i.b16 %v3267, %v3267
    %v3367 = vlaneseq
    %v3368 = vshrl.u32 %v3367, 7
    %v3369 = vsub.s32 0, %v3368
    %v3370 = vrot.slane %v3365, %v3369
    %v3372 = vpack.i.b16 %v3271, %v3271
    %v3374 = vlaneseq
    %v3375 = vshrl.u32 %v3374, 7
    %v3376 = vsub.s32 0, %v3375
    %v3377 = vrot.slane %v3372, %v3376
    %v3379 = vpack.i.b16 %v3275, %v3275
    %v3381 = vlaneseq
    %v3382 = vshrl.u32 %v3381, 7
    %v3383 = vsub.s32 0, %v3382
    %v3384 = vrot.slane %v3379, %v3383
    %v3386 = vpack.i.b16 %v3279, %v3279
    %v3388 = vlaneseq
    %v3389 = vshrl.u32 %v3388, 7
    %v3390 = vsub.s32 0, %v3389
    %v3391 = vrot.slane %v3386, %v3390
    %v3392 = vmul.bf16 %v3286, %v3184
    %v3393 = vmul.bf16 %v3293, %v3185
    %v3394 = vmul.bf16 %v3300, %v3186
    %v3395 = vmul.bf16 %v3307, %v3187
    %v3396 = vmul.bf16 %v3314, %v3188
    %v3397 = vmul.bf16 %v3321, %v3189
    %v3398 = vmul.bf16 %v3328, %v3190
    %v3399 = vmul.bf16 %v3335, %v3191
    %v3400 = vmul.bf16 %v3342, %v3192
    %v3401 = vmul.bf16 %v3349, %v3193
    %v3402 = vmul.bf16 %v3356, %v3194
    %v3403 = vmul.bf16 %v3363, %v3195
    %v3404 = vmul.bf16 %v3370, %v3196
    %v3405 = vmul.bf16 %v3377, %v3197
    %v3406 = vmul.bf16 %v3384, %v3198
    %v3407 = vmul.bf16 %v3391, %v3199
    %v3408 = vunpack.c.l.bf16 %v3392
    %v3409 = vunpack.c.l.bf16 %v3393
    %v3410 = vunpack.c.l.bf16 %v3394
    %v3411 = vunpack.c.l.bf16 %v3395
    %v3412 = vunpack.c.l.bf16 %v3396
    %v3413 = vunpack.c.l.bf16 %v3397
    %v3414 = vunpack.c.l.bf16 %v3398
    %v3415 = vunpack.c.l.bf16 %v3399
    %v3416 = vunpack.c.l.bf16 %v3400
    %v3417 = vunpack.c.l.bf16 %v3401
    %v3418 = vunpack.c.l.bf16 %v3402
    %v3419 = vunpack.c.l.bf16 %v3403
    %v3420 = vunpack.c.l.bf16 %v3404
    %v3421 = vunpack.c.l.bf16 %v3405
    %v3422 = vunpack.c.l.bf16 %v3406
    %v3423 = vunpack.c.l.bf16 %v3407
    %v3424 = vadd.f32 %v3408, %v3409
    %v3425 = vadd.f32 %v3424, %v3410
    %v3426 = vadd.f32 %v3425, %v3411
    %v3427 = vadd.f32 %v3426, %v3412
    %v3428 = vadd.f32 %v3427, %v3413
    %v3429 = vadd.f32 %v3428, %v3414
    %v3430 = vadd.f32 %v3429, %v3415
    %v3431 = vadd.f32 %v3430, %v3416
    %v3432 = vadd.f32 %v3431, %v3417
    %v3433 = vadd.f32 %v3432, %v3418
    %v3434 = vadd.f32 %v3433, %v3419
    %v3435 = vadd.f32 %v3434, %v3420
    %v3436 = vadd.f32 %v3435, %v3421
    %v3437 = vadd.f32 %v3436, %v3422
    %v3438 = vadd.f32 %v3437, %v3423
    %3439 = vst [vmem:[#allocation2 + $0x40] sm:$0xff] %v3438
    %s3440 = sld [smem:[#allocation9 + $0x480]]
    %s3441 = sld [smem:[#allocation9 + $0x481]]
    %s3442 = sld [smem:[#allocation9 + $0x482]]
    %v3443 = vstv %s3440
    %v3444 = vmul.f32 %v65, %v3443
    %v3445 = vmul.f32 %v66, %v3443
    %v3446 = vstv %s3441
    %v3447 = vmul.f32 %v68, %v3446
    %v3448 = vmul.f32 %v69, %v3446
    %v3449 = vadd.f32 %v3444, %v3447
    %v3450 = vadd.f32 %v3445, %v3448
    %v3451 = vstv %s3442
    %v3452 = vmul.f32 %v71, %v3451
    %v3453 = vmul.f32 %v72, %v3451
    %v3454 = vadd.f32 %v3449, %v3452
    %v3455 = vadd.f32 %v3450, %v3453
    %v3456 = vmul.f32 %v3454, 2.0
    %v3457 = vmul.f32 %v3455, 2.0
    %v3458 = vsub.f32 %v81, %v3456
    %v3459 = vsub.f32 %v82, %v3457
    %s3460 = smul.f32 %s3440, %s3440
    %s3461 = smul.f32 %s3441, %s3441
    %s3462 = sadd.f32 %s3460, %s3461
    %s3463 = smul.f32 %s3442, %s3442
    %s3464 = sadd.f32 %s3462, %s3463
    %v3465 = vstv %s3464
    %v3466 = vadd.f32 %v3458, %v3465
    %v3467 = vadd.f32 %v3459, %v3465
    %v3468 = vmax.f32 %v3466, 0.0
    %v3469 = vmax.f32 %v3467, 0.0
    %v3470 = vrsqrt.pop %v3468
    %v3471 = vmul.f32 %v3468, %v3470
    %vm3472 = vcmp.eq.f32.partialorder %v3468, inf
    %v3473 = vsel %vm3472, %v3468, %v3471
    %vm3474 = vcmp.eq.f32.partialorder %v3468, 0.0
    %v3475 = vand.u32 %v3468, 2147483648
    %v3476 = vsel %vm3474, %v3475, %v3473
    %v3477 = vrsqrt.pop %v3469
    %v3478 = vmul.f32 %v3469, %v3477
    %vm3479 = vcmp.eq.f32.partialorder %v3469, inf
    %v3480 = vsel %vm3479, %v3469, %v3478
    %vm3481 = vcmp.eq.f32.partialorder %v3469, 0.0
    %v3482 = vand.u32 %v3469, 2147483648
    %v3483 = vsel %vm3481, %v3482, %v3480
    %v3484 = vmul.f32 %v3476, 8.333333
    %v3485 = vmul.f32 %v3483, 8.333333
    %v3486 = vsub.f32 1.0, %v3484
    %v3487 = vsub.f32 1.0, %v3485
    %v3488 = vmax.f32 %v3486, 0.0
    %v3489 = vmax.f32 %v3487, 0.0
    %v3490 = vpack.c.bf16 %v3489, %v3488
    %v3492 = vcombine.high %v3490, %v3490
    %v3494 = vunpack.c.l.s4 1966171168
    %v3495 = vunpack.c.0.s8 %v3494
    %v3496 = vlaneseq
    %v3497 = vshrl.u32 %v3496, 7
    %v3498 = vsub.s32 %v3495, %v3497
    %v3499 = vrot.slane %v3490, %v3498
    %v3501 = vunpack.c.l.s4 1966171168
    %v3502 = vunpack.c.0.s8 %v3501
    %v3503 = vlaneseq
    %v3504 = vshrl.u32 %v3503, 7
    %v3505 = vsub.s32 %v3502, %v3504
    %v3506 = vrot.slane %v3492, %v3505
    %v3507 = vcombine.high %v3499, %v3499
    %v3508 = vcombine.high %v3506, %v3506
    %v3510 = vunpack.c.l.s4 1966171168
    %v3511 = vunpack.c.0.s8 %v3510
    %v3512 = vlaneseq
    %v3513 = vshrl.u32 %v3512, 7
    %v3514 = vsub.s32 %v3511, %v3513
    %v3515 = vrot.slane %v3499, %v3514
    %v3517 = vunpack.c.l.s4 1966171168
    %v3518 = vunpack.c.0.s8 %v3517
    %v3519 = vlaneseq
    %v3520 = vshrl.u32 %v3519, 7
    %v3521 = vsub.s32 %v3518, %v3520
    %v3522 = vrot.slane %v3506, %v3521
    %v3524 = vunpack.c.l.s4 1966171168
    %v3525 = vunpack.c.0.s8 %v3524
    %v3526 = vlaneseq
    %v3527 = vshrl.u32 %v3526, 7
    %v3528 = vsub.s32 %v3525, %v3527
    %v3529 = vrot.slane %v3507, %v3528
    %v3531 = vunpack.c.l.s4 1966171168
    %v3532 = vunpack.c.0.s8 %v3531
    %v3533 = vlaneseq
    %v3534 = vshrl.u32 %v3533, 7
    %v3535 = vsub.s32 %v3532, %v3534
    %v3536 = vrot.slane %v3508, %v3535
    %v3537 = vcombine.high %v3515, %v3515
    %v3538 = vcombine.high %v3522, %v3522
    %v3539 = vcombine.high %v3529, %v3529
    %v3540 = vcombine.high %v3536, %v3536
    %v3541 = vunpack.i.l.s16 %v3515
    %v3542 = vunpack.i.h.s16 %v3515
    %v3543 = vunpack.i.l.s16 %v3529
    %v3544 = vunpack.i.h.s16 %v3529
    %v3545 = vunpack.i.l.s16 %v3537
    %v3546 = vunpack.i.h.s16 %v3537
    %v3547 = vunpack.i.l.s16 %v3539
    %v3548 = vunpack.i.h.s16 %v3539
    %v3549 = vunpack.i.l.s16 %v3522
    %v3550 = vunpack.i.h.s16 %v3522
    %v3551 = vunpack.i.l.s16 %v3536
    %v3552 = vunpack.i.h.s16 %v3536
    %v3553 = vunpack.i.l.s16 %v3538
    %v3554 = vunpack.i.h.s16 %v3538
    %v3555 = vunpack.i.l.s16 %v3540
    %v3556 = vunpack.i.h.s16 %v3540
    %v3557 = vld [vmem:[#allocation7] sm:$0xf]
    %v3558 = vld [vmem:[#allocation7 + $0x4] sm:$0xf]
    %v3559 = vld [vmem:[#allocation7 + $0x8] sm:$0xf]
    %v3560 = vld [vmem:[#allocation7 + $0xc] sm:$0xf]
    %v3561 = vld [vmem:[#allocation7 + $0x10] sm:$0xf]
    %v3562 = vld [vmem:[#allocation7 + $0x14] sm:$0xf]
    %v3563 = vld [vmem:[#allocation7 + $0x18] sm:$0xf]
    %v3564 = vld [vmem:[#allocation7 + $0x1c] sm:$0xf]
    %v3565 = vld [vmem:[#allocation7 + $0x20] sm:$0xf]
    %v3566 = vld [vmem:[#allocation7 + $0x24] sm:$0xf]
    %v3567 = vld [vmem:[#allocation7 + $0x28] sm:$0xf]
    %v3568 = vld [vmem:[#allocation7 + $0x2c] sm:$0xf]
    %v3569 = vld [vmem:[#allocation7 + $0x30] sm:$0xf]
    %v3570 = vld [vmem:[#allocation7 + $0x34] sm:$0xf]
    %v3571 = vld [vmem:[#allocation7 + $0x38] sm:$0xf]
    %v3572 = vld [vmem:[#allocation7 + $0x3c] sm:$0xf]
    %v3573 = vpack.i.b16 %v3541, %v3541
    %v3574 = vpack.i.b16 %v3542, %v3542
    %v3575 = vpack.i.b16 %v3543, %v3543
    %v3576 = vpack.i.b16 %v3544, %v3544
    %v3577 = vpack.i.b16 %v3545, %v3545
    %v3578 = vpack.i.b16 %v3546, %v3546
    %v3579 = vpack.i.b16 %v3547, %v3547
    %v3580 = vpack.i.b16 %v3548, %v3548
    %v3581 = vpack.i.b16 %v3549, %v3549
    %v3582 = vpack.i.b16 %v3550, %v3550
    %v3583 = vpack.i.b16 %v3551, %v3551
    %v3584 = vpack.i.b16 %v3552, %v3552
    %v3585 = vpack.i.b16 %v3553, %v3553
    %v3586 = vpack.i.b16 %v3554, %v3554
    %v3587 = vpack.i.b16 %v3555, %v3555
    %v3588 = vpack.i.b16 %v3556, %v3556
    %v3589 = vlaneseq
    %v3590 = vshrl.u32 %v3589, 7
    %v3591 = vsub.s32 0, %v3590
    %v3592 = vrot.slane %v3573, %v3591
    %v3593 = vlaneseq
    %v3594 = vshrl.u32 %v3593, 7
    %v3595 = vsub.s32 0, %v3594
    %v3596 = vrot.slane %v3574, %v3595
    %v3597 = vlaneseq
    %v3598 = vshrl.u32 %v3597, 7
    %v3599 = vsub.s32 0, %v3598
    %v3600 = vrot.slane %v3575, %v3599
    %v3601 = vlaneseq
    %v3602 = vshrl.u32 %v3601, 7
    %v3603 = vsub.s32 0, %v3602
    %v3604 = vrot.slane %v3576, %v3603
    %v3605 = vlaneseq
    %v3606 = vshrl.u32 %v3605, 7
    %v3607 = vsub.s32 0, %v3606
    %v3608 = vrot.slane %v3577, %v3607
    %v3609 = vlaneseq
    %v3610 = vshrl.u32 %v3609, 7
    %v3611 = vsub.s32 0, %v3610
    %v3612 = vrot.slane %v3578, %v3611
    %v3613 = vlaneseq
    %v3614 = vshrl.u32 %v3613, 7
    %v3615 = vsub.s32 0, %v3614
    %v3616 = vrot.slane %v3579, %v3615
    %v3617 = vlaneseq
    %v3618 = vshrl.u32 %v3617, 7
    %v3619 = vsub.s32 0, %v3618
    %v3620 = vrot.slane %v3580, %v3619
    %v3621 = vlaneseq
    %v3622 = vshrl.u32 %v3621, 7
    %v3623 = vsub.s32 0, %v3622
    %v3624 = vrot.slane %v3581, %v3623
    %v3625 = vlaneseq
    %v3626 = vshrl.u32 %v3625, 7
    %v3627 = vsub.s32 0, %v3626
    %v3628 = vrot.slane %v3582, %v3627
    %v3629 = vlaneseq
    %v3630 = vshrl.u32 %v3629, 7
    %v3631 = vsub.s32 0, %v3630
    %v3632 = vrot.slane %v3583, %v3631
    %v3633 = vlaneseq
    %v3634 = vshrl.u32 %v3633, 7
    %v3635 = vsub.s32 0, %v3634
    %v3636 = vrot.slane %v3584, %v3635
    %v3637 = vlaneseq
    %v3638 = vshrl.u32 %v3637, 7
    %v3639 = vsub.s32 0, %v3638
    %v3640 = vrot.slane %v3585, %v3639
    %v3641 = vlaneseq
    %v3642 = vshrl.u32 %v3641, 7
    %v3643 = vsub.s32 0, %v3642
    %v3644 = vrot.slane %v3586, %v3643
    %v3645 = vlaneseq
    %v3646 = vshrl.u32 %v3645, 7
    %v3647 = vsub.s32 0, %v3646
    %v3648 = vrot.slane %v3587, %v3647
    %v3649 = vlaneseq
    %v3650 = vshrl.u32 %v3649, 7
    %v3651 = vsub.s32 0, %v3650
    %v3652 = vrot.slane %v3588, %v3651
    %v3654 = vpack.i.b16 %v3592, %v3592
    %v3656 = vlaneseq
    %v3657 = vshrl.u32 %v3656, 7
    %v3658 = vsub.s32 0, %v3657
    %v3659 = vrot.slane %v3654, %v3658
    %v3661 = vpack.i.b16 %v3596, %v3596
    %v3663 = vlaneseq
    %v3664 = vshrl.u32 %v3663, 7
    %v3665 = vsub.s32 0, %v3664
    %v3666 = vrot.slane %v3661, %v3665
    %v3668 = vpack.i.b16 %v3600, %v3600
    %v3670 = vlaneseq
    %v3671 = vshrl.u32 %v3670, 7
    %v3672 = vsub.s32 0, %v3671
    %v3673 = vrot.slane %v3668, %v3672
    %v3675 = vpack.i.b16 %v3604, %v3604
    %v3677 = vlaneseq
    %v3678 = vshrl.u32 %v3677, 7
    %v3679 = vsub.s32 0, %v3678
    %v3680 = vrot.slane %v3675, %v3679
    %v3682 = vpack.i.b16 %v3608, %v3608
    %v3684 = vlaneseq
    %v3685 = vshrl.u32 %v3684, 7
    %v3686 = vsub.s32 0, %v3685
    %v3687 = vrot.slane %v3682, %v3686
    %v3689 = vpack.i.b16 %v3612, %v3612
    %v3691 = vlaneseq
    %v3692 = vshrl.u32 %v3691, 7
    %v3693 = vsub.s32 0, %v3692
    %v3694 = vrot.slane %v3689, %v3693
    %v3696 = vpack.i.b16 %v3616, %v3616
    %v3698 = vlaneseq
    %v3699 = vshrl.u32 %v3698, 7
    %v3700 = vsub.s32 0, %v3699
    %v3701 = vrot.slane %v3696, %v3700
    %v3703 = vpack.i.b16 %v3620, %v3620
    %v3705 = vlaneseq
    %v3706 = vshrl.u32 %v3705, 7
    %v3707 = vsub.s32 0, %v3706
    %v3708 = vrot.slane %v3703, %v3707
    %v3710 = vpack.i.b16 %v3624, %v3624
    %v3712 = vlaneseq
    %v3713 = vshrl.u32 %v3712, 7
    %v3714 = vsub.s32 0, %v3713
    %v3715 = vrot.slane %v3710, %v3714
    %v3717 = vpack.i.b16 %v3628, %v3628
    %v3719 = vlaneseq
    %v3720 = vshrl.u32 %v3719, 7
    %v3721 = vsub.s32 0, %v3720
    %v3722 = vrot.slane %v3717, %v3721
    %v3724 = vpack.i.b16 %v3632, %v3632
    %v3726 = vlaneseq
    %v3727 = vshrl.u32 %v3726, 7
    %v3728 = vsub.s32 0, %v3727
    %v3729 = vrot.slane %v3724, %v3728
    %v3731 = vpack.i.b16 %v3636, %v3636
    %v3733 = vlaneseq
    %v3734 = vshrl.u32 %v3733, 7
    %v3735 = vsub.s32 0, %v3734
    %v3736 = vrot.slane %v3731, %v3735
    %v3738 = vpack.i.b16 %v3640, %v3640
    %v3740 = vlaneseq
    %v3741 = vshrl.u32 %v3740, 7
    %v3742 = vsub.s32 0, %v3741
    %v3743 = vrot.slane %v3738, %v3742
    %v3745 = vpack.i.b16 %v3644, %v3644
    %v3747 = vlaneseq
    %v3748 = vshrl.u32 %v3747, 7
    %v3749 = vsub.s32 0, %v3748
    %v3750 = vrot.slane %v3745, %v3749
    %v3752 = vpack.i.b16 %v3648, %v3648
    %v3754 = vlaneseq
    %v3755 = vshrl.u32 %v3754, 7
    %v3756 = vsub.s32 0, %v3755
    %v3757 = vrot.slane %v3752, %v3756
    %v3759 = vpack.i.b16 %v3652, %v3652
    %v3761 = vlaneseq
    %v3762 = vshrl.u32 %v3761, 7
    %v3763 = vsub.s32 0, %v3762
    %v3764 = vrot.slane %v3759, %v3763
    %v3765 = vmul.bf16 %v3659, %v3557
    %v3766 = vmul.bf16 %v3666, %v3558
    %v3767 = vmul.bf16 %v3673, %v3559
    %v3768 = vmul.bf16 %v3680, %v3560
    %v3769 = vmul.bf16 %v3687, %v3561
    %v3770 = vmul.bf16 %v3694, %v3562
    %v3771 = vmul.bf16 %v3701, %v3563
    %v3772 = vmul.bf16 %v3708, %v3564
    %v3773 = vmul.bf16 %v3715, %v3565
    %v3774 = vmul.bf16 %v3722, %v3566
    %v3775 = vmul.bf16 %v3729, %v3567
    %v3776 = vmul.bf16 %v3736, %v3568
    %v3777 = vmul.bf16 %v3743, %v3569
    %v3778 = vmul.bf16 %v3750, %v3570
    %v3779 = vmul.bf16 %v3757, %v3571
    %v3780 = vmul.bf16 %v3764, %v3572
    %v3781 = vunpack.c.l.bf16 %v3765
    %v3782 = vunpack.c.l.bf16 %v3766
    %v3783 = vunpack.c.l.bf16 %v3767
    %v3784 = vunpack.c.l.bf16 %v3768
    %v3785 = vunpack.c.l.bf16 %v3769
    %v3786 = vunpack.c.l.bf16 %v3770
    %v3787 = vunpack.c.l.bf16 %v3771
    %v3788 = vunpack.c.l.bf16 %v3772
    %v3789 = vunpack.c.l.bf16 %v3773
    %v3790 = vunpack.c.l.bf16 %v3774
    %v3791 = vunpack.c.l.bf16 %v3775
    %v3792 = vunpack.c.l.bf16 %v3776
    %v3793 = vunpack.c.l.bf16 %v3777
    %v3794 = vunpack.c.l.bf16 %v3778
    %v3795 = vunpack.c.l.bf16 %v3779
    %v3796 = vunpack.c.l.bf16 %v3780
    %v3797 = vadd.f32 %v3781, %v3782
    %v3798 = vadd.f32 %v3797, %v3783
    %v3799 = vadd.f32 %v3798, %v3784
    %v3800 = vadd.f32 %v3799, %v3785
    %v3801 = vadd.f32 %v3800, %v3786
    %v3802 = vadd.f32 %v3801, %v3787
    %v3803 = vadd.f32 %v3802, %v3788
    %v3804 = vadd.f32 %v3803, %v3789
    %v3805 = vadd.f32 %v3804, %v3790
    %v3806 = vadd.f32 %v3805, %v3791
    %v3807 = vadd.f32 %v3806, %v3792
    %v3808 = vadd.f32 %v3807, %v3793
    %v3809 = vadd.f32 %v3808, %v3794
    %v3810 = vadd.f32 %v3809, %v3795
    %v3811 = vadd.f32 %v3810, %v3796
    %3812 = vst [vmem:[#allocation2 + $0x48] sm:$0xff] %v3811
    %s3813 = sld [smem:[#allocation9 + $0x500]]
    %s3814 = sld [smem:[#allocation9 + $0x501]]
    %s3815 = sld [smem:[#allocation9 + $0x502]]
    %v3816 = vstv %s3813
    %v3817 = vmul.f32 %v65, %v3816
    %v3818 = vmul.f32 %v66, %v3816
    %v3819 = vstv %s3814
    %v3820 = vmul.f32 %v68, %v3819
    %v3821 = vmul.f32 %v69, %v3819
    %v3822 = vadd.f32 %v3817, %v3820
    %v3823 = vadd.f32 %v3818, %v3821
    %v3824 = vstv %s3815
    %v3825 = vmul.f32 %v71, %v3824
    %v3826 = vmul.f32 %v72, %v3824
    %v3827 = vadd.f32 %v3822, %v3825
    %v3828 = vadd.f32 %v3823, %v3826
    %v3829 = vmul.f32 %v3827, 2.0
    %v3830 = vmul.f32 %v3828, 2.0
    %v3831 = vsub.f32 %v81, %v3829
    %v3832 = vsub.f32 %v82, %v3830
    %s3833 = smul.f32 %s3813, %s3813
    %s3834 = smul.f32 %s3814, %s3814
    %s3835 = sadd.f32 %s3833, %s3834
    %s3836 = smul.f32 %s3815, %s3815
    %s3837 = sadd.f32 %s3835, %s3836
    %v3838 = vstv %s3837
    %v3839 = vadd.f32 %v3831, %v3838
    %v3840 = vadd.f32 %v3832, %v3838
    %v3841 = vmax.f32 %v3839, 0.0
    %v3842 = vmax.f32 %v3840, 0.0
    %v3843 = vrsqrt.pop %v3841
    %v3844 = vmul.f32 %v3841, %v3843
    %vm3845 = vcmp.eq.f32.partialorder %v3841, inf
    %v3846 = vsel %vm3845, %v3841, %v3844
    %vm3847 = vcmp.eq.f32.partialorder %v3841, 0.0
    %v3848 = vand.u32 %v3841, 2147483648
    %v3849 = vsel %vm3847, %v3848, %v3846
    %v3850 = vrsqrt.pop %v3842
    %v3851 = vmul.f32 %v3842, %v3850
    %vm3852 = vcmp.eq.f32.partialorder %v3842, inf
    %v3853 = vsel %vm3852, %v3842, %v3851
    %vm3854 = vcmp.eq.f32.partialorder %v3842, 0.0
    %v3855 = vand.u32 %v3842, 2147483648
    %v3856 = vsel %vm3854, %v3855, %v3853
    %v3857 = vmul.f32 %v3849, 8.333333
    %v3858 = vmul.f32 %v3856, 8.333333
    %v3859 = vsub.f32 1.0, %v3857
    %v3860 = vsub.f32 1.0, %v3858
    %v3861 = vmax.f32 %v3859, 0.0
    %v3862 = vmax.f32 %v3860, 0.0
    %v3863 = vpack.c.bf16 %v3862, %v3861
    %v3865 = vcombine.high %v3863, %v3863
    %v3867 = vunpack.c.l.s4 1966171168
    %v3868 = vunpack.c.0.s8 %v3867
    %v3869 = vlaneseq
    %v3870 = vshrl.u32 %v3869, 7
    %v3871 = vsub.s32 %v3868, %v3870
    %v3872 = vrot.slane %v3863, %v3871
    %v3874 = vunpack.c.l.s4 1966171168
    %v3875 = vunpack.c.0.s8 %v3874
    %v3876 = vlaneseq
    %v3877 = vshrl.u32 %v3876, 7
    %v3878 = vsub.s32 %v3875, %v3877
    %v3879 = vrot.slane %v3865, %v3878
    %v3880 = vcombine.high %v3872, %v3872
    %v3881 = vcombine.high %v3879, %v3879
    %v3883 = vunpack.c.l.s4 1966171168
    %v3884 = vunpack.c.0.s8 %v3883
    %v3885 = vlaneseq
    %v3886 = vshrl.u32 %v3885, 7
    %v3887 = vsub.s32 %v3884, %v3886
    %v3888 = vrot.slane %v3872, %v3887
    %v3890 = vunpack.c.l.s4 1966171168
    %v3891 = vunpack.c.0.s8 %v3890
    %v3892 = vlaneseq
    %v3893 = vshrl.u32 %v3892, 7
    %v3894 = vsub.s32 %v3891, %v3893
    %v3895 = vrot.slane %v3879, %v3894
    %v3897 = vunpack.c.l.s4 1966171168
    %v3898 = vunpack.c.0.s8 %v3897
    %v3899 = vlaneseq
    %v3900 = vshrl.u32 %v3899, 7
    %v3901 = vsub.s32 %v3898, %v3900
    %v3902 = vrot.slane %v3880, %v3901
    %v3904 = vunpack.c.l.s4 1966171168
    %v3905 = vunpack.c.0.s8 %v3904
    %v3906 = vlaneseq
    %v3907 = vshrl.u32 %v3906, 7
    %v3908 = vsub.s32 %v3905, %v3907
    %v3909 = vrot.slane %v3881, %v3908
    %v3910 = vcombine.high %v3888, %v3888
    %v3911 = vcombine.high %v3895, %v3895
    %v3912 = vcombine.high %v3902, %v3902
    %v3913 = vcombine.high %v3909, %v3909
    %v3914 = vunpack.i.l.s16 %v3888
    %v3915 = vunpack.i.h.s16 %v3888
    %v3916 = vunpack.i.l.s16 %v3902
    %v3917 = vunpack.i.h.s16 %v3902
    %v3918 = vunpack.i.l.s16 %v3910
    %v3919 = vunpack.i.h.s16 %v3910
    %v3920 = vunpack.i.l.s16 %v3912
    %v3921 = vunpack.i.h.s16 %v3912
    %v3922 = vunpack.i.l.s16 %v3895
    %v3923 = vunpack.i.h.s16 %v3895
    %v3924 = vunpack.i.l.s16 %v3909
    %v3925 = vunpack.i.h.s16 %v3909
    %v3926 = vunpack.i.l.s16 %v3911
    %v3927 = vunpack.i.h.s16 %v3911
    %v3928 = vunpack.i.l.s16 %v3913
    %v3929 = vunpack.i.h.s16 %v3913
    %v3930 = vld [vmem:[#allocation7] sm:$0xf]
    %v3931 = vld [vmem:[#allocation7 + $0x4] sm:$0xf]
    %v3932 = vld [vmem:[#allocation7 + $0x8] sm:$0xf]
    %v3933 = vld [vmem:[#allocation7 + $0xc] sm:$0xf]
    %v3934 = vld [vmem:[#allocation7 + $0x10] sm:$0xf]
    %v3935 = vld [vmem:[#allocation7 + $0x14] sm:$0xf]
    %v3936 = vld [vmem:[#allocation7 + $0x18] sm:$0xf]
    %v3937 = vld [vmem:[#allocation7 + $0x1c] sm:$0xf]
    %v3938 = vld [vmem:[#allocation7 + $0x20] sm:$0xf]
    %v3939 = vld [vmem:[#allocation7 + $0x24] sm:$0xf]
    %v3940 = vld [vmem:[#allocation7 + $0x28] sm:$0xf]
    %v3941 = vld [vmem:[#allocation7 + $0x2c] sm:$0xf]
    %v3942 = vld [vmem:[#allocation7 + $0x30] sm:$0xf]
    %v3943 = vld [vmem:[#allocation7 + $0x34] sm:$0xf]
    %v3944 = vld [vmem:[#allocation7 + $0x38] sm:$0xf]
    %v3945 = vld [vmem:[#allocation7 + $0x3c] sm:$0xf]
    %v3946 = vpack.i.b16 %v3914, %v3914
    %v3947 = vpack.i.b16 %v3915, %v3915
    %v3948 = vpack.i.b16 %v3916, %v3916
    %v3949 = vpack.i.b16 %v3917, %v3917
    %v3950 = vpack.i.b16 %v3918, %v3918
    %v3951 = vpack.i.b16 %v3919, %v3919
    %v3952 = vpack.i.b16 %v3920, %v3920
    %v3953 = vpack.i.b16 %v3921, %v3921
    %v3954 = vpack.i.b16 %v3922, %v3922
    %v3955 = vpack.i.b16 %v3923, %v3923
    %v3956 = vpack.i.b16 %v3924, %v3924
    %v3957 = vpack.i.b16 %v3925, %v3925
    %v3958 = vpack.i.b16 %v3926, %v3926
    %v3959 = vpack.i.b16 %v3927, %v3927
    %v3960 = vpack.i.b16 %v3928, %v3928
    %v3961 = vpack.i.b16 %v3929, %v3929
    %v3962 = vlaneseq
    %v3963 = vshrl.u32 %v3962, 7
    %v3964 = vsub.s32 0, %v3963
    %v3965 = vrot.slane %v3946, %v3964
    %v3966 = vlaneseq
    %v3967 = vshrl.u32 %v3966, 7
    %v3968 = vsub.s32 0, %v3967
    %v3969 = vrot.slane %v3947, %v3968
    %v3970 = vlaneseq
    %v3971 = vshrl.u32 %v3970, 7
    %v3972 = vsub.s32 0, %v3971
    %v3973 = vrot.slane %v3948, %v3972
    %v3974 = vlaneseq
    %v3975 = vshrl.u32 %v3974, 7
    %v3976 = vsub.s32 0, %v3975
    %v3977 = vrot.slane %v3949, %v3976
    %v3978 = vlaneseq
    %v3979 = vshrl.u32 %v3978, 7
    %v3980 = vsub.s32 0, %v3979
    %v3981 = vrot.slane %v3950, %v3980
    %v3982 = vlaneseq
    %v3983 = vshrl.u32 %v3982, 7
    %v3984 = vsub.s32 0, %v3983
    %v3985 = vrot.slane %v3951, %v3984
    %v3986 = vlaneseq
    %v3987 = vshrl.u32 %v3986, 7
    %v3988 = vsub.s32 0, %v3987
    %v3989 = vrot.slane %v3952, %v3988
    %v3990 = vlaneseq
    %v3991 = vshrl.u32 %v3990, 7
    %v3992 = vsub.s32 0, %v3991
    %v3993 = vrot.slane %v3953, %v3992
    %v3994 = vlaneseq
    %v3995 = vshrl.u32 %v3994, 7
    %v3996 = vsub.s32 0, %v3995
    %v3997 = vrot.slane %v3954, %v3996
    %v3998 = vlaneseq
    %v3999 = vshrl.u32 %v3998, 7
    %v4000 = vsub.s32 0, %v3999
    %v4001 = vrot.slane %v3955, %v4000
    %v4002 = vlaneseq
    %v4003 = vshrl.u32 %v4002, 7
    %v4004 = vsub.s32 0, %v4003
    %v4005 = vrot.slane %v3956, %v4004
    %v4006 = vlaneseq
    %v4007 = vshrl.u32 %v4006, 7
    %v4008 = vsub.s32 0, %v4007
    %v4009 = vrot.slane %v3957, %v4008
    %v4010 = vlaneseq
    %v4011 = vshrl.u32 %v4010, 7
    %v4012 = vsub.s32 0, %v4011
    %v4013 = vrot.slane %v3958, %v4012
    %v4014 = vlaneseq
    %v4015 = vshrl.u32 %v4014, 7
    %v4016 = vsub.s32 0, %v4015
    %v4017 = vrot.slane %v3959, %v4016
    %v4018 = vlaneseq
    %v4019 = vshrl.u32 %v4018, 7
    %v4020 = vsub.s32 0, %v4019
    %v4021 = vrot.slane %v3960, %v4020
    %v4022 = vlaneseq
    %v4023 = vshrl.u32 %v4022, 7
    %v4024 = vsub.s32 0, %v4023
    %v4025 = vrot.slane %v3961, %v4024
    %v4027 = vpack.i.b16 %v3965, %v3965
    %v4029 = vlaneseq
    %v4030 = vshrl.u32 %v4029, 7
    %v4031 = vsub.s32 0, %v4030
    %v4032 = vrot.slane %v4027, %v4031
    %v4034 = vpack.i.b16 %v3969, %v3969
    %v4036 = vlaneseq
    %v4037 = vshrl.u32 %v4036, 7
    %v4038 = vsub.s32 0, %v4037
    %v4039 = vrot.slane %v4034, %v4038
    %v4041 = vpack.i.b16 %v3973, %v3973
    %v4043 = vlaneseq
    %v4044 = vshrl.u32 %v4043, 7
    %v4045 = vsub.s32 0, %v4044
    %v4046 = vrot.slane %v4041, %v4045
    %v4048 = vpack.i.b16 %v3977, %v3977
    %v4050 = vlaneseq
    %v4051 = vshrl.u32 %v4050, 7
    %v4052 = vsub.s32 0, %v4051
    %v4053 = vrot.slane %v4048, %v4052
    %v4055 = vpack.i.b16 %v3981, %v3981
    %v4057 = vlaneseq
    %v4058 = vshrl.u32 %v4057, 7
    %v4059 = vsub.s32 0, %v4058
    %v4060 = vrot.slane %v4055, %v4059
    %v4062 = vpack.i.b16 %v3985, %v3985
    %v4064 = vlaneseq
    %v4065 = vshrl.u32 %v4064, 7
    %v4066 = vsub.s32 0, %v4065
    %v4067 = vrot.slane %v4062, %v4066
    %v4069 = vpack.i.b16 %v3989, %v3989
    %v4071 = vlaneseq
    %v4072 = vshrl.u32 %v4071, 7
    %v4073 = vsub.s32 0, %v4072
    %v4074 = vrot.slane %v4069, %v4073
    %v4076 = vpack.i.b16 %v3993, %v3993
    %v4078 = vlaneseq
    %v4079 = vshrl.u32 %v4078, 7
    %v4080 = vsub.s32 0, %v4079
    %v4081 = vrot.slane %v4076, %v4080
    %v4083 = vpack.i.b16 %v3997, %v3997
    %v4085 = vlaneseq
    %v4086 = vshrl.u32 %v4085, 7
    %v4087 = vsub.s32 0, %v4086
    %v4088 = vrot.slane %v4083, %v4087
    %v4090 = vpack.i.b16 %v4001, %v4001
    %v4092 = vlaneseq
    %v4093 = vshrl.u32 %v4092, 7
    %v4094 = vsub.s32 0, %v4093
    %v4095 = vrot.slane %v4090, %v4094
    %v4097 = vpack.i.b16 %v4005, %v4005
    %v4099 = vlaneseq
    %v4100 = vshrl.u32 %v4099, 7
    %v4101 = vsub.s32 0, %v4100
    %v4102 = vrot.slane %v4097, %v4101
    %v4104 = vpack.i.b16 %v4009, %v4009
    %v4106 = vlaneseq
    %v4107 = vshrl.u32 %v4106, 7
    %v4108 = vsub.s32 0, %v4107
    %v4109 = vrot.slane %v4104, %v4108
    %v4111 = vpack.i.b16 %v4013, %v4013
    %v4113 = vlaneseq
    %v4114 = vshrl.u32 %v4113, 7
    %v4115 = vsub.s32 0, %v4114
    %v4116 = vrot.slane %v4111, %v4115
    %v4118 = vpack.i.b16 %v4017, %v4017
    %v4120 = vlaneseq
    %v4121 = vshrl.u32 %v4120, 7
    %v4122 = vsub.s32 0, %v4121
    %v4123 = vrot.slane %v4118, %v4122
    %v4125 = vpack.i.b16 %v4021, %v4021
    %v4127 = vlaneseq
    %v4128 = vshrl.u32 %v4127, 7
    %v4129 = vsub.s32 0, %v4128
    %v4130 = vrot.slane %v4125, %v4129
    %v4132 = vpack.i.b16 %v4025, %v4025
    %v4134 = vlaneseq
    %v4135 = vshrl.u32 %v4134, 7
    %v4136 = vsub.s32 0, %v4135
    %v4137 = vrot.slane %v4132, %v4136
    %v4138 = vmul.bf16 %v4032, %v3930
    %v4139 = vmul.bf16 %v4039, %v3931
    %v4140 = vmul.bf16 %v4046, %v3932
    %v4141 = vmul.bf16 %v4053, %v3933
    %v4142 = vmul.bf16 %v4060, %v3934
    %v4143 = vmul.bf16 %v4067, %v3935
    %v4144 = vmul.bf16 %v4074, %v3936
    %v4145 = vmul.bf16 %v4081, %v3937
    %v4146 = vmul.bf16 %v4088, %v3938
    %v4147 = vmul.bf16 %v4095, %v3939
    %v4148 = vmul.bf16 %v4102, %v3940
    %v4149 = vmul.bf16 %v4109, %v3941
    %v4150 = vmul.bf16 %v4116, %v3942
    %v4151 = vmul.bf16 %v4123, %v3943
    %v4152 = vmul.bf16 %v4130, %v3944
    %v4153 = vmul.bf16 %v4137, %v3945
    %v4154 = vunpack.c.l.bf16 %v4138
    %v4155 = vunpack.c.l.bf16 %v4139
    %v4156 = vunpack.c.l.bf16 %v4140
    %v4157 = vunpack.c.l.bf16 %v4141
    %v4158 = vunpack.c.l.bf16 %v4142
    %v4159 = vunpack.c.l.bf16 %v4143
    %v4160 = vunpack.c.l.bf16 %v4144
    %v4161 = vunpack.c.l.bf16 %v4145
    %v4162 = vunpack.c.l.bf16 %v4146
    %v4163 = vunpack.c.l.bf16 %v4147
    %v4164 = vunpack.c.l.bf16 %v4148
    %v4165 = vunpack.c.l.bf16 %v4149
    %v4166 = vunpack.c.l.bf16 %v4150
    %v4167 = vunpack.c.l.bf16 %v4151
    %v4168 = vunpack.c.l.bf16 %v4152
    %v4169 = vunpack.c.l.bf16 %v4153
    %v4170 = vadd.f32 %v4154, %v4155
    %v4171 = vadd.f32 %v4170, %v4156
    %v4172 = vadd.f32 %v4171, %v4157
    %v4173 = vadd.f32 %v4172, %v4158
    %v4174 = vadd.f32 %v4173, %v4159
    %v4175 = vadd.f32 %v4174, %v4160
    %v4176 = vadd.f32 %v4175, %v4161
    %v4177 = vadd.f32 %v4176, %v4162
    %v4178 = vadd.f32 %v4177, %v4163
    %v4179 = vadd.f32 %v4178, %v4164
    %v4180 = vadd.f32 %v4179, %v4165
    %v4181 = vadd.f32 %v4180, %v4166
    %v4182 = vadd.f32 %v4181, %v4167
    %v4183 = vadd.f32 %v4182, %v4168
    %v4184 = vadd.f32 %v4183, %v4169
    %4185 = vst [vmem:[#allocation2 + $0x50] sm:$0xff] %v4184
    %s4186 = sld [smem:[#allocation9 + $0x580]]
    %s4187 = sld [smem:[#allocation9 + $0x581]]
    %s4188 = sld [smem:[#allocation9 + $0x582]]
    %v4189 = vstv %s4186
    %v4190 = vmul.f32 %v65, %v4189
    %v4191 = vmul.f32 %v66, %v4189
    %v4192 = vstv %s4187
    %v4193 = vmul.f32 %v68, %v4192
    %v4194 = vmul.f32 %v69, %v4192
    %v4195 = vadd.f32 %v4190, %v4193
    %v4196 = vadd.f32 %v4191, %v4194
    %v4197 = vstv %s4188
    %v4198 = vmul.f32 %v71, %v4197
    %v4199 = vmul.f32 %v72, %v4197
    %v4200 = vadd.f32 %v4195, %v4198
    %v4201 = vadd.f32 %v4196, %v4199
    %v4202 = vmul.f32 %v4200, 2.0
    %v4203 = vmul.f32 %v4201, 2.0
    %v4204 = vsub.f32 %v81, %v4202
    %v4205 = vsub.f32 %v82, %v4203
    %s4206 = smul.f32 %s4186, %s4186
    %s4207 = smul.f32 %s4187, %s4187
    %s4208 = sadd.f32 %s4206, %s4207
    %s4209 = smul.f32 %s4188, %s4188
    %s4210 = sadd.f32 %s4208, %s4209
    %v4211 = vstv %s4210
    %v4212 = vadd.f32 %v4204, %v4211
    %v4213 = vadd.f32 %v4205, %v4211
    %v4214 = vmax.f32 %v4212, 0.0
    %v4215 = vmax.f32 %v4213, 0.0
    %v4216 = vrsqrt.pop %v4214
    %v4217 = vmul.f32 %v4214, %v4216
    %vm4218 = vcmp.eq.f32.partialorder %v4214, inf
    %v4219 = vsel %vm4218, %v4214, %v4217
    %vm4220 = vcmp.eq.f32.partialorder %v4214, 0.0
    %v4221 = vand.u32 %v4214, 2147483648
    %v4222 = vsel %vm4220, %v4221, %v4219
    %v4223 = vrsqrt.pop %v4215
    %v4224 = vmul.f32 %v4215, %v4223
    %vm4225 = vcmp.eq.f32.partialorder %v4215, inf
    %v4226 = vsel %vm4225, %v4215, %v4224
    %vm4227 = vcmp.eq.f32.partialorder %v4215, 0.0
    %v4228 = vand.u32 %v4215, 2147483648
    %v4229 = vsel %vm4227, %v4228, %v4226
    %v4230 = vmul.f32 %v4222, 8.333333
    %v4231 = vmul.f32 %v4229, 8.333333
    %v4232 = vsub.f32 1.0, %v4230
    %v4233 = vsub.f32 1.0, %v4231
    %v4234 = vmax.f32 %v4232, 0.0
    %v4235 = vmax.f32 %v4233, 0.0
    %v4236 = vpack.c.bf16 %v4235, %v4234
    %v4238 = vcombine.high %v4236, %v4236
    %v4240 = vunpack.c.l.s4 1966171168
    %v4241 = vunpack.c.0.s8 %v4240
    %v4242 = vlaneseq
    %v4243 = vshrl.u32 %v4242, 7
    %v4244 = vsub.s32 %v4241, %v4243
    %v4245 = vrot.slane %v4236, %v4244
    %v4247 = vunpack.c.l.s4 1966171168
    %v4248 = vunpack.c.0.s8 %v4247
    %v4249 = vlaneseq
    %v4250 = vshrl.u32 %v4249, 7
    %v4251 = vsub.s32 %v4248, %v4250
    %v4252 = vrot.slane %v4238, %v4251
    %v4253 = vcombine.high %v4245, %v4245
    %v4254 = vcombine.high %v4252, %v4252
    %v4256 = vunpack.c.l.s4 1966171168
    %v4257 = vunpack.c.0.s8 %v4256
    %v4258 = vlaneseq
    %v4259 = vshrl.u32 %v4258, 7
    %v4260 = vsub.s32 %v4257, %v4259
    %v4261 = vrot.slane %v4245, %v4260
    %v4263 = vunpack.c.l.s4 1966171168
    %v4264 = vunpack.c.0.s8 %v4263
    %v4265 = vlaneseq
    %v4266 = vshrl.u32 %v4265, 7
    %v4267 = vsub.s32 %v4264, %v4266
    %v4268 = vrot.slane %v4252, %v4267
    %v4270 = vunpack.c.l.s4 1966171168
    %v4271 = vunpack.c.0.s8 %v4270
    %v4272 = vlaneseq
    %v4273 = vshrl.u32 %v4272, 7
    %v4274 = vsub.s32 %v4271, %v4273
    %v4275 = vrot.slane %v4253, %v4274
    %v4277 = vunpack.c.l.s4 1966171168
    %v4278 = vunpack.c.0.s8 %v4277
    %v4279 = vlaneseq
    %v4280 = vshrl.u32 %v4279, 7
    %v4281 = vsub.s32 %v4278, %v4280
    %v4282 = vrot.slane %v4254, %v4281
    %v4283 = vcombine.high %v4261, %v4261
    %v4284 = vcombine.high %v4268, %v4268
    %v4285 = vcombine.high %v4275, %v4275
    %v4286 = vcombine.high %v4282, %v4282
    %v4287 = vunpack.i.l.s16 %v4261
    %v4288 = vunpack.i.h.s16 %v4261
    %v4289 = vunpack.i.l.s16 %v4275
    %v4290 = vunpack.i.h.s16 %v4275
    %v4291 = vunpack.i.l.s16 %v4283
    %v4292 = vunpack.i.h.s16 %v4283
    %v4293 = vunpack.i.l.s16 %v4285
    %v4294 = vunpack.i.h.s16 %v4285
    %v4295 = vunpack.i.l.s16 %v4268
    %v4296 = vunpack.i.h.s16 %v4268
    %v4297 = vunpack.i.l.s16 %v4282
    %v4298 = vunpack.i.h.s16 %v4282
    %v4299 = vunpack.i.l.s16 %v4284
    %v4300 = vunpack.i.h.s16 %v4284
    %v4301 = vunpack.i.l.s16 %v4286
    %v4302 = vunpack.i.h.s16 %v4286
    %v4303 = vld [vmem:[#allocation7] sm:$0xf]
    %v4304 = vld [vmem:[#allocation7 + $0x4] sm:$0xf]
    %v4305 = vld [vmem:[#allocation7 + $0x8] sm:$0xf]
    %v4306 = vld [vmem:[#allocation7 + $0xc] sm:$0xf]
    %v4307 = vld [vmem:[#allocation7 + $0x10] sm:$0xf]
    %v4308 = vld [vmem:[#allocation7 + $0x14] sm:$0xf]
    %v4309 = vld [vmem:[#allocation7 + $0x18] sm:$0xf]
    %v4310 = vld [vmem:[#allocation7 + $0x1c] sm:$0xf]
    %v4311 = vld [vmem:[#allocation7 + $0x20] sm:$0xf]
    %v4312 = vld [vmem:[#allocation7 + $0x24] sm:$0xf]
    %v4313 = vld [vmem:[#allocation7 + $0x28] sm:$0xf]
    %v4314 = vld [vmem:[#allocation7 + $0x2c] sm:$0xf]
    %v4315 = vld [vmem:[#allocation7 + $0x30] sm:$0xf]
    %v4316 = vld [vmem:[#allocation7 + $0x34] sm:$0xf]
    %v4317 = vld [vmem:[#allocation7 + $0x38] sm:$0xf]
    %v4318 = vld [vmem:[#allocation7 + $0x3c] sm:$0xf]
    %v4319 = vpack.i.b16 %v4287, %v4287
    %v4320 = vpack.i.b16 %v4288, %v4288
    %v4321 = vpack.i.b16 %v4289, %v4289
    %v4322 = vpack.i.b16 %v4290, %v4290
    %v4323 = vpack.i.b16 %v4291, %v4291
    %v4324 = vpack.i.b16 %v4292, %v4292
    %v4325 = vpack.i.b16 %v4293, %v4293
    %v4326 = vpack.i.b16 %v4294, %v4294
    %v4327 = vpack.i.b16 %v4295, %v4295
    %v4328 = vpack.i.b16 %v4296, %v4296
    %v4329 = vpack.i.b16 %v4297, %v4297
    %v4330 = vpack.i.b16 %v4298, %v4298
    %v4331 = vpack.i.b16 %v4299, %v4299
    %v4332 = vpack.i.b16 %v4300, %v4300
    %v4333 = vpack.i.b16 %v4301, %v4301
    %v4334 = vpack.i.b16 %v4302, %v4302
    %v4335 = vlaneseq
    %v4336 = vshrl.u32 %v4335, 7
    %v4337 = vsub.s32 0, %v4336
    %v4338 = vrot.slane %v4319, %v4337
    %v4339 = vlaneseq
    %v4340 = vshrl.u32 %v4339, 7
    %v4341 = vsub.s32 0, %v4340
    %v4342 = vrot.slane %v4320, %v4341
    %v4343 = vlaneseq
    %v4344 = vshrl.u32 %v4343, 7
    %v4345 = vsub.s32 0, %v4344
    %v4346 = vrot.slane %v4321, %v4345
    %v4347 = vlaneseq
    %v4348 = vshrl.u32 %v4347, 7
    %v4349 = vsub.s32 0, %v4348
    %v4350 = vrot.slane %v4322, %v4349
    %v4351 = vlaneseq
    %v4352 = vshrl.u32 %v4351, 7
    %v4353 = vsub.s32 0, %v4352
    %v4354 = vrot.slane %v4323, %v4353
    %v4355 = vlaneseq
    %v4356 = vshrl.u32 %v4355, 7
    %v4357 = vsub.s32 0, %v4356
    %v4358 = vrot.slane %v4324, %v4357
    %v4359 = vlaneseq
    %v4360 = vshrl.u32 %v4359, 7
    %v4361 = vsub.s32 0, %v4360
    %v4362 = vrot.slane %v4325, %v4361
    %v4363 = vlaneseq
    %v4364 = vshrl.u32 %v4363, 7
    %v4365 = vsub.s32 0, %v4364
    %v4366 = vrot.slane %v4326, %v4365
    %v4367 = vlaneseq
    %v4368 = vshrl.u32 %v4367, 7
    %v4369 = vsub.s32 0, %v4368
    %v4370 = vrot.slane %v4327, %v4369
    %v4371 = vlaneseq
    %v4372 = vshrl.u32 %v4371, 7
    %v4373 = vsub.s32 0, %v4372
    %v4374 = vrot.slane %v4328, %v4373
    %v4375 = vlaneseq
    %v4376 = vshrl.u32 %v4375, 7
    %v4377 = vsub.s32 0, %v4376
    %v4378 = vrot.slane %v4329, %v4377
    %v4379 = vlaneseq
    %v4380 = vshrl.u32 %v4379, 7
    %v4381 = vsub.s32 0, %v4380
    %v4382 = vrot.slane %v4330, %v4381
    %v4383 = vlaneseq
    %v4384 = vshrl.u32 %v4383, 7
    %v4385 = vsub.s32 0, %v4384
    %v4386 = vrot.slane %v4331, %v4385
    %v4387 = vlaneseq
    %v4388 = vshrl.u32 %v4387, 7
    %v4389 = vsub.s32 0, %v4388
    %v4390 = vrot.slane %v4332, %v4389
    %v4391 = vlaneseq
    %v4392 = vshrl.u32 %v4391, 7
    %v4393 = vsub.s32 0, %v4392
    %v4394 = vrot.slane %v4333, %v4393
    %v4395 = vlaneseq
    %v4396 = vshrl.u32 %v4395, 7
    %v4397 = vsub.s32 0, %v4396
    %v4398 = vrot.slane %v4334, %v4397
    %v4400 = vpack.i.b16 %v4338, %v4338
    %v4402 = vlaneseq
    %v4403 = vshrl.u32 %v4402, 7
    %v4404 = vsub.s32 0, %v4403
    %v4405 = vrot.slane %v4400, %v4404
    %v4407 = vpack.i.b16 %v4342, %v4342
    %v4409 = vlaneseq
    %v4410 = vshrl.u32 %v4409, 7
    %v4411 = vsub.s32 0, %v4410
    %v4412 = vrot.slane %v4407, %v4411
    %v4414 = vpack.i.b16 %v4346, %v4346
    %v4416 = vlaneseq
    %v4417 = vshrl.u32 %v4416, 7
    %v4418 = vsub.s32 0, %v4417
    %v4419 = vrot.slane %v4414, %v4418
    %v4421 = vpack.i.b16 %v4350, %v4350
    %v4423 = vlaneseq
    %v4424 = vshrl.u32 %v4423, 7
    %v4425 = vsub.s32 0, %v4424
    %v4426 = vrot.slane %v4421, %v4425
    %v4428 = vpack.i.b16 %v4354, %v4354
    %v4430 = vlaneseq
    %v4431 = vshrl.u32 %v4430, 7
    %v4432 = vsub.s32 0, %v4431
    %v4433 = vrot.slane %v4428, %v4432
    %v4435 = vpack.i.b16 %v4358, %v4358
    %v4437 = vlaneseq
    %v4438 = vshrl.u32 %v4437, 7
    %v4439 = vsub.s32 0, %v4438
    %v4440 = vrot.slane %v4435, %v4439
    %v4442 = vpack.i.b16 %v4362, %v4362
    %v4444 = vlaneseq
    %v4445 = vshrl.u32 %v4444, 7
    %v4446 = vsub.s32 0, %v4445
    %v4447 = vrot.slane %v4442, %v4446
    %v4449 = vpack.i.b16 %v4366, %v4366
    %v4451 = vlaneseq
    %v4452 = vshrl.u32 %v4451, 7
    %v4453 = vsub.s32 0, %v4452
    %v4454 = vrot.slane %v4449, %v4453
    %v4456 = vpack.i.b16 %v4370, %v4370
    %v4458 = vlaneseq
    %v4459 = vshrl.u32 %v4458, 7
    %v4460 = vsub.s32 0, %v4459
    %v4461 = vrot.slane %v4456, %v4460
    %v4463 = vpack.i.b16 %v4374, %v4374
    %v4465 = vlaneseq
    %v4466 = vshrl.u32 %v4465, 7
    %v4467 = vsub.s32 0, %v4466
    %v4468 = vrot.slane %v4463, %v4467
    %v4470 = vpack.i.b16 %v4378, %v4378
    %v4472 = vlaneseq
    %v4473 = vshrl.u32 %v4472, 7
    %v4474 = vsub.s32 0, %v4473
    %v4475 = vrot.slane %v4470, %v4474
    %v4477 = vpack.i.b16 %v4382, %v4382
    %v4479 = vlaneseq
    %v4480 = vshrl.u32 %v4479, 7
    %v4481 = vsub.s32 0, %v4480
    %v4482 = vrot.slane %v4477, %v4481
    %v4484 = vpack.i.b16 %v4386, %v4386
    %v4486 = vlaneseq
    %v4487 = vshrl.u32 %v4486, 7
    %v4488 = vsub.s32 0, %v4487
    %v4489 = vrot.slane %v4484, %v4488
    %v4491 = vpack.i.b16 %v4390, %v4390
    %v4493 = vlaneseq
    %v4494 = vshrl.u32 %v4493, 7
    %v4495 = vsub.s32 0, %v4494
    %v4496 = vrot.slane %v4491, %v4495
    %v4498 = vpack.i.b16 %v4394, %v4394
    %v4500 = vlaneseq
    %v4501 = vshrl.u32 %v4500, 7
    %v4502 = vsub.s32 0, %v4501
    %v4503 = vrot.slane %v4498, %v4502
    %v4505 = vpack.i.b16 %v4398, %v4398
    %v4507 = vlaneseq
    %v4508 = vshrl.u32 %v4507, 7
    %v4509 = vsub.s32 0, %v4508
    %v4510 = vrot.slane %v4505, %v4509
    %v4511 = vmul.bf16 %v4405, %v4303
    %v4512 = vmul.bf16 %v4412, %v4304
    %v4513 = vmul.bf16 %v4419, %v4305
    %v4514 = vmul.bf16 %v4426, %v4306
    %v4515 = vmul.bf16 %v4433, %v4307
    %v4516 = vmul.bf16 %v4440, %v4308
    %v4517 = vmul.bf16 %v4447, %v4309
    %v4518 = vmul.bf16 %v4454, %v4310
    %v4519 = vmul.bf16 %v4461, %v4311
    %v4520 = vmul.bf16 %v4468, %v4312
    %v4521 = vmul.bf16 %v4475, %v4313
    %v4522 = vmul.bf16 %v4482, %v4314
    %v4523 = vmul.bf16 %v4489, %v4315
    %v4524 = vmul.bf16 %v4496, %v4316
    %v4525 = vmul.bf16 %v4503, %v4317
    %v4526 = vmul.bf16 %v4510, %v4318
    %v4527 = vunpack.c.l.bf16 %v4511
    %v4528 = vunpack.c.l.bf16 %v4512
    %v4529 = vunpack.c.l.bf16 %v4513
    %v4530 = vunpack.c.l.bf16 %v4514
    %v4531 = vunpack.c.l.bf16 %v4515
    %v4532 = vunpack.c.l.bf16 %v4516
    %v4533 = vunpack.c.l.bf16 %v4517
    %v4534 = vunpack.c.l.bf16 %v4518
    %v4535 = vunpack.c.l.bf16 %v4519
    %v4536 = vunpack.c.l.bf16 %v4520
    %v4537 = vunpack.c.l.bf16 %v4521
    %v4538 = vunpack.c.l.bf16 %v4522
    %v4539 = vunpack.c.l.bf16 %v4523
    %v4540 = vunpack.c.l.bf16 %v4524
    %v4541 = vunpack.c.l.bf16 %v4525
    %v4542 = vunpack.c.l.bf16 %v4526
    %v4543 = vadd.f32 %v4527, %v4528
    %v4544 = vadd.f32 %v4543, %v4529
    %v4545 = vadd.f32 %v4544, %v4530
    %v4546 = vadd.f32 %v4545, %v4531
    %v4547 = vadd.f32 %v4546, %v4532
    %v4548 = vadd.f32 %v4547, %v4533
    %v4549 = vadd.f32 %v4548, %v4534
    %v4550 = vadd.f32 %v4549, %v4535
    %v4551 = vadd.f32 %v4550, %v4536
    %v4552 = vadd.f32 %v4551, %v4537
    %v4553 = vadd.f32 %v4552, %v4538
    %v4554 = vadd.f32 %v4553, %v4539
    %v4555 = vadd.f32 %v4554, %v4540
    %v4556 = vadd.f32 %v4555, %v4541
    %v4557 = vadd.f32 %v4556, %v4542
    %4558 = vst [vmem:[#allocation2 + $0x58] sm:$0xff] %v4557
    %s4559 = sld [smem:[#allocation9 + $0x600]]
    %s4560 = sld [smem:[#allocation9 + $0x601]]
    %s4561 = sld [smem:[#allocation9 + $0x602]]
    %v4562 = vstv %s4559
    %v4563 = vmul.f32 %v65, %v4562
    %v4564 = vmul.f32 %v66, %v4562
    %v4565 = vstv %s4560
    %v4566 = vmul.f32 %v68, %v4565
    %v4567 = vmul.f32 %v69, %v4565
    %v4568 = vadd.f32 %v4563, %v4566
    %v4569 = vadd.f32 %v4564, %v4567
    %v4570 = vstv %s4561
    %v4571 = vmul.f32 %v71, %v4570
    %v4572 = vmul.f32 %v72, %v4570
    %v4573 = vadd.f32 %v4568, %v4571
    %v4574 = vadd.f32 %v4569, %v4572
    %v4575 = vmul.f32 %v4573, 2.0
    %v4576 = vmul.f32 %v4574, 2.0
    %v4577 = vsub.f32 %v81, %v4575
    %v4578 = vsub.f32 %v82, %v4576
    %s4579 = smul.f32 %s4559, %s4559
    %s4580 = smul.f32 %s4560, %s4560
    %s4581 = sadd.f32 %s4579, %s4580
    %s4582 = smul.f32 %s4561, %s4561
    %s4583 = sadd.f32 %s4581, %s4582
    %v4584 = vstv %s4583
    %v4585 = vadd.f32 %v4577, %v4584
    %v4586 = vadd.f32 %v4578, %v4584
    %v4587 = vmax.f32 %v4585, 0.0
    %v4588 = vmax.f32 %v4586, 0.0
    %v4589 = vrsqrt.pop %v4587
    %v4590 = vmul.f32 %v4587, %v4589
    %vm4591 = vcmp.eq.f32.partialorder %v4587, inf
    %v4592 = vsel %vm4591, %v4587, %v4590
    %vm4593 = vcmp.eq.f32.partialorder %v4587, 0.0
    %v4594 = vand.u32 %v4587, 2147483648
    %v4595 = vsel %vm4593, %v4594, %v4592
    %v4596 = vrsqrt.pop %v4588
    %v4597 = vmul.f32 %v4588, %v4596
    %vm4598 = vcmp.eq.f32.partialorder %v4588, inf
    %v4599 = vsel %vm4598, %v4588, %v4597
    %vm4600 = vcmp.eq.f32.partialorder %v4588, 0.0
    %v4601 = vand.u32 %v4588, 2147483648
    %v4602 = vsel %vm4600, %v4601, %v4599
    %v4603 = vmul.f32 %v4595, 8.333333
    %v4604 = vmul.f32 %v4602, 8.333333
    %v4605 = vsub.f32 1.0, %v4603
    %v4606 = vsub.f32 1.0, %v4604
    %v4607 = vmax.f32 %v4605, 0.0
    %v4608 = vmax.f32 %v4606, 0.0
    %v4609 = vpack.c.bf16 %v4608, %v4607
    %v4611 = vcombine.high %v4609, %v4609
    %v4613 = vunpack.c.l.s4 1966171168
    %v4614 = vunpack.c.0.s8 %v4613
    %v4615 = vlaneseq
    %v4616 = vshrl.u32 %v4615, 7
    %v4617 = vsub.s32 %v4614, %v4616
    %v4618 = vrot.slane %v4609, %v4617
    %v4620 = vunpack.c.l.s4 1966171168
    %v4621 = vunpack.c.0.s8 %v4620
    %v4622 = vlaneseq
    %v4623 = vshrl.u32 %v4622, 7
    %v4624 = vsub.s32 %v4621, %v4623
    %v4625 = vrot.slane %v4611, %v4624
    %v4626 = vcombine.high %v4618, %v4618
    %v4627 = vcombine.high %v4625, %v4625
    %v4629 = vunpack.c.l.s4 1966171168
    %v4630 = vunpack.c.0.s8 %v4629
    %v4631 = vlaneseq
    %v4632 = vshrl.u32 %v4631, 7
    %v4633 = vsub.s32 %v4630, %v4632
    %v4634 = vrot.slane %v4618, %v4633
    %v4636 = vunpack.c.l.s4 1966171168
    %v4637 = vunpack.c.0.s8 %v4636
    %v4638 = vlaneseq
    %v4639 = vshrl.u32 %v4638, 7
    %v4640 = vsub.s32 %v4637, %v4639
    %v4641 = vrot.slane %v4625, %v4640
    %v4643 = vunpack.c.l.s4 1966171168
    %v4644 = vunpack.c.0.s8 %v4643
    %v4645 = vlaneseq
    %v4646 = vshrl.u32 %v4645, 7
    %v4647 = vsub.s32 %v4644, %v4646
    %v4648 = vrot.slane %v4626, %v4647
    %v4650 = vunpack.c.l.s4 1966171168
    %v4651 = vunpack.c.0.s8 %v4650
    %v4652 = vlaneseq
    %v4653 = vshrl.u32 %v4652, 7
    %v4654 = vsub.s32 %v4651, %v4653
    %v4655 = vrot.slane %v4627, %v4654
    %v4656 = vcombine.high %v4634, %v4634
    %v4657 = vcombine.high %v4641, %v4641
    %v4658 = vcombine.high %v4648, %v4648
    %v4659 = vcombine.high %v4655, %v4655
    %v4660 = vunpack.i.l.s16 %v4634
    %v4661 = vunpack.i.h.s16 %v4634
    %v4662 = vunpack.i.l.s16 %v4648
    %v4663 = vunpack.i.h.s16 %v4648
    %v4664 = vunpack.i.l.s16 %v4656
    %v4665 = vunpack.i.h.s16 %v4656
    %v4666 = vunpack.i.l.s16 %v4658
    %v4667 = vunpack.i.h.s16 %v4658
    %v4668 = vunpack.i.l.s16 %v4641
    %v4669 = vunpack.i.h.s16 %v4641
    %v4670 = vunpack.i.l.s16 %v4655
    %v4671 = vunpack.i.h.s16 %v4655
    %v4672 = vunpack.i.l.s16 %v4657
    %v4673 = vunpack.i.h.s16 %v4657
    %v4674 = vunpack.i.l.s16 %v4659
    %v4675 = vunpack.i.h.s16 %v4659
    %v4676 = vld [vmem:[#allocation7] sm:$0xf]
    %v4677 = vld [vmem:[#allocation7 + $0x4] sm:$0xf]
    %v4678 = vld [vmem:[#allocation7 + $0x8] sm:$0xf]
    %v4679 = vld [vmem:[#allocation7 + $0xc] sm:$0xf]
    %v4680 = vld [vmem:[#allocation7 + $0x10] sm:$0xf]
    %v4681 = vld [vmem:[#allocation7 + $0x14] sm:$0xf]
    %v4682 = vld [vmem:[#allocation7 + $0x18] sm:$0xf]
    %v4683 = vld [vmem:[#allocation7 + $0x1c] sm:$0xf]
    %v4684 = vld [vmem:[#allocation7 + $0x20] sm:$0xf]
    %v4685 = vld [vmem:[#allocation7 + $0x24] sm:$0xf]
    %v4686 = vld [vmem:[#allocation7 + $0x28] sm:$0xf]
    %v4687 = vld [vmem:[#allocation7 + $0x2c] sm:$0xf]
    %v4688 = vld [vmem:[#allocation7 + $0x30] sm:$0xf]
    %v4689 = vld [vmem:[#allocation7 + $0x34] sm:$0xf]
    %v4690 = vld [vmem:[#allocation7 + $0x38] sm:$0xf]
    %v4691 = vld [vmem:[#allocation7 + $0x3c] sm:$0xf]
    %v4692 = vpack.i.b16 %v4660, %v4660
    %v4693 = vpack.i.b16 %v4661, %v4661
    %v4694 = vpack.i.b16 %v4662, %v4662
    %v4695 = vpack.i.b16 %v4663, %v4663
    %v4696 = vpack.i.b16 %v4664, %v4664
    %v4697 = vpack.i.b16 %v4665, %v4665
    %v4698 = vpack.i.b16 %v4666, %v4666
    %v4699 = vpack.i.b16 %v4667, %v4667
    %v4700 = vpack.i.b16 %v4668, %v4668
    %v4701 = vpack.i.b16 %v4669, %v4669
    %v4702 = vpack.i.b16 %v4670, %v4670
    %v4703 = vpack.i.b16 %v4671, %v4671
    %v4704 = vpack.i.b16 %v4672, %v4672
    %v4705 = vpack.i.b16 %v4673, %v4673
    %v4706 = vpack.i.b16 %v4674, %v4674
    %v4707 = vpack.i.b16 %v4675, %v4675
    %v4708 = vlaneseq
    %v4709 = vshrl.u32 %v4708, 7
    %v4710 = vsub.s32 0, %v4709
    %v4711 = vrot.slane %v4692, %v4710
    %v4712 = vlaneseq
    %v4713 = vshrl.u32 %v4712, 7
    %v4714 = vsub.s32 0, %v4713
    %v4715 = vrot.slane %v4693, %v4714
    %v4716 = vlaneseq
    %v4717 = vshrl.u32 %v4716, 7
    %v4718 = vsub.s32 0, %v4717
    %v4719 = vrot.slane %v4694, %v4718
    %v4720 = vlaneseq
    %v4721 = vshrl.u32 %v4720, 7
    %v4722 = vsub.s32 0, %v4721
    %v4723 = vrot.slane %v4695, %v4722
    %v4724 = vlaneseq
    %v4725 = vshrl.u32 %v4724, 7
    %v4726 = vsub.s32 0, %v4725
    %v4727 = vrot.slane %v4696, %v4726
    %v4728 = vlaneseq
    %v4729 = vshrl.u32 %v4728, 7
    %v4730 = vsub.s32 0, %v4729
    %v4731 = vrot.slane %v4697, %v4730
    %v4732 = vlaneseq
    %v4733 = vshrl.u32 %v4732, 7
    %v4734 = vsub.s32 0, %v4733
    %v4735 = vrot.slane %v4698, %v4734
    %v4736 = vlaneseq
    %v4737 = vshrl.u32 %v4736, 7
    %v4738 = vsub.s32 0, %v4737
    %v4739 = vrot.slane %v4699, %v4738
    %v4740 = vlaneseq
    %v4741 = vshrl.u32 %v4740, 7
    %v4742 = vsub.s32 0, %v4741
    %v4743 = vrot.slane %v4700, %v4742
    %v4744 = vlaneseq
    %v4745 = vshrl.u32 %v4744, 7
    %v4746 = vsub.s32 0, %v4745
    %v4747 = vrot.slane %v4701, %v4746
    %v4748 = vlaneseq
    %v4749 = vshrl.u32 %v4748, 7
    %v4750 = vsub.s32 0, %v4749
    %v4751 = vrot.slane %v4702, %v4750
    %v4752 = vlaneseq
    %v4753 = vshrl.u32 %v4752, 7
    %v4754 = vsub.s32 0, %v4753
    %v4755 = vrot.slane %v4703, %v4754
    %v4756 = vlaneseq
    %v4757 = vshrl.u32 %v4756, 7
    %v4758 = vsub.s32 0, %v4757
    %v4759 = vrot.slane %v4704, %v4758
    %v4760 = vlaneseq
    %v4761 = vshrl.u32 %v4760, 7
    %v4762 = vsub.s32 0, %v4761
    %v4763 = vrot.slane %v4705, %v4762
    %v4764 = vlaneseq
    %v4765 = vshrl.u32 %v4764, 7
    %v4766 = vsub.s32 0, %v4765
    %v4767 = vrot.slane %v4706, %v4766
    %v4768 = vlaneseq
    %v4769 = vshrl.u32 %v4768, 7
    %v4770 = vsub.s32 0, %v4769
    %v4771 = vrot.slane %v4707, %v4770
    %v4773 = vpack.i.b16 %v4711, %v4711
    %v4775 = vlaneseq
    %v4776 = vshrl.u32 %v4775, 7
    %v4777 = vsub.s32 0, %v4776
    %v4778 = vrot.slane %v4773, %v4777
    %v4780 = vpack.i.b16 %v4715, %v4715
    %v4782 = vlaneseq
    %v4783 = vshrl.u32 %v4782, 7
    %v4784 = vsub.s32 0, %v4783
    %v4785 = vrot.slane %v4780, %v4784
    %v4787 = vpack.i.b16 %v4719, %v4719
    %v4789 = vlaneseq
    %v4790 = vshrl.u32 %v4789, 7
    %v4791 = vsub.s32 0, %v4790
    %v4792 = vrot.slane %v4787, %v4791
    %v4794 = vpack.i.b16 %v4723, %v4723
    %v4796 = vlaneseq
    %v4797 = vshrl.u32 %v4796, 7
    %v4798 = vsub.s32 0, %v4797
    %v4799 = vrot.slane %v4794, %v4798
    %v4801 = vpack.i.b16 %v4727, %v4727
    %v4803 = vlaneseq
    %v4804 = vshrl.u32 %v4803, 7
    %v4805 = vsub.s32 0, %v4804
    %v4806 = vrot.slane %v4801, %v4805
    %v4808 = vpack.i.b16 %v4731, %v4731
    %v4810 = vlaneseq
    %v4811 = vshrl.u32 %v4810, 7
    %v4812 = vsub.s32 0, %v4811
    %v4813 = vrot.slane %v4808, %v4812
    %v4815 = vpack.i.b16 %v4735, %v4735
    %v4817 = vlaneseq
    %v4818 = vshrl.u32 %v4817, 7
    %v4819 = vsub.s32 0, %v4818
    %v4820 = vrot.slane %v4815, %v4819
    %v4822 = vpack.i.b16 %v4739, %v4739
    %v4824 = vlaneseq
    %v4825 = vshrl.u32 %v4824, 7
    %v4826 = vsub.s32 0, %v4825
    %v4827 = vrot.slane %v4822, %v4826
    %v4829 = vpack.i.b16 %v4743, %v4743
    %v4831 = vlaneseq
    %v4832 = vshrl.u32 %v4831, 7
    %v4833 = vsub.s32 0, %v4832
    %v4834 = vrot.slane %v4829, %v4833
    %v4836 = vpack.i.b16 %v4747, %v4747
    %v4838 = vlaneseq
    %v4839 = vshrl.u32 %v4838, 7
    %v4840 = vsub.s32 0, %v4839
    %v4841 = vrot.slane %v4836, %v4840
    %v4843 = vpack.i.b16 %v4751, %v4751
    %v4845 = vlaneseq
    %v4846 = vshrl.u32 %v4845, 7
    %v4847 = vsub.s32 0, %v4846
    %v4848 = vrot.slane %v4843, %v4847
    %v4850 = vpack.i.b16 %v4755, %v4755
    %v4852 = vlaneseq
    %v4853 = vshrl.u32 %v4852, 7
    %v4854 = vsub.s32 0, %v4853
    %v4855 = vrot.slane %v4850, %v4854
    %v4857 = vpack.i.b16 %v4759, %v4759
    %v4859 = vlaneseq
    %v4860 = vshrl.u32 %v4859, 7
    %v4861 = vsub.s32 0, %v4860
    %v4862 = vrot.slane %v4857, %v4861
    %v4864 = vpack.i.b16 %v4763, %v4763
    %v4866 = vlaneseq
    %v4867 = vshrl.u32 %v4866, 7
    %v4868 = vsub.s32 0, %v4867
    %v4869 = vrot.slane %v4864, %v4868
    %v4871 = vpack.i.b16 %v4767, %v4767
    %v4873 = vlaneseq
    %v4874 = vshrl.u32 %v4873, 7
    %v4875 = vsub.s32 0, %v4874
    %v4876 = vrot.slane %v4871, %v4875
    %v4878 = vpack.i.b16 %v4771, %v4771
    %v4880 = vlaneseq
    %v4881 = vshrl.u32 %v4880, 7
    %v4882 = vsub.s32 0, %v4881
    %v4883 = vrot.slane %v4878, %v4882
    %v4884 = vmul.bf16 %v4778, %v4676
    %v4885 = vmul.bf16 %v4785, %v4677
    %v4886 = vmul.bf16 %v4792, %v4678
    %v4887 = vmul.bf16 %v4799, %v4679
    %v4888 = vmul.bf16 %v4806, %v4680
    %v4889 = vmul.bf16 %v4813, %v4681
    %v4890 = vmul.bf16 %v4820, %v4682
    %v4891 = vmul.bf16 %v4827, %v4683
    %v4892 = vmul.bf16 %v4834, %v4684
    %v4893 = vmul.bf16 %v4841, %v4685
    %v4894 = vmul.bf16 %v4848, %v4686
    %v4895 = vmul.bf16 %v4855, %v4687
    %v4896 = vmul.bf16 %v4862, %v4688
    %v4897 = vmul.bf16 %v4869, %v4689
    %v4898 = vmul.bf16 %v4876, %v4690
    %v4899 = vmul.bf16 %v4883, %v4691
    %v4900 = vunpack.c.l.bf16 %v4884
    %v4901 = vunpack.c.l.bf16 %v4885
    %v4902 = vunpack.c.l.bf16 %v4886
    %v4903 = vunpack.c.l.bf16 %v4887
    %v4904 = vunpack.c.l.bf16 %v4888
    %v4905 = vunpack.c.l.bf16 %v4889
    %v4906 = vunpack.c.l.bf16 %v4890
    %v4907 = vunpack.c.l.bf16 %v4891
    %v4908 = vunpack.c.l.bf16 %v4892
    %v4909 = vunpack.c.l.bf16 %v4893
    %v4910 = vunpack.c.l.bf16 %v4894
    %v4911 = vunpack.c.l.bf16 %v4895
    %v4912 = vunpack.c.l.bf16 %v4896
    %v4913 = vunpack.c.l.bf16 %v4897
    %v4914 = vunpack.c.l.bf16 %v4898
    %v4915 = vunpack.c.l.bf16 %v4899
    %v4916 = vadd.f32 %v4900, %v4901
    %v4917 = vadd.f32 %v4916, %v4902
    %v4918 = vadd.f32 %v4917, %v4903
    %v4919 = vadd.f32 %v4918, %v4904
    %v4920 = vadd.f32 %v4919, %v4905
    %v4921 = vadd.f32 %v4920, %v4906
    %v4922 = vadd.f32 %v4921, %v4907
    %v4923 = vadd.f32 %v4922, %v4908
    %v4924 = vadd.f32 %v4923, %v4909
    %v4925 = vadd.f32 %v4924, %v4910
    %v4926 = vadd.f32 %v4925, %v4911
    %v4927 = vadd.f32 %v4926, %v4912
    %v4928 = vadd.f32 %v4927, %v4913
    %v4929 = vadd.f32 %v4928, %v4914
    %v4930 = vadd.f32 %v4929, %v4915
    %4931 = vst [vmem:[#allocation2 + $0x60] sm:$0xff] %v4930
    %s4932 = sld [smem:[#allocation9 + $0x680]]
    %s4933 = sld [smem:[#allocation9 + $0x681]]
    %s4934 = sld [smem:[#allocation9 + $0x682]]
    %v4935 = vstv %s4932
    %v4936 = vmul.f32 %v65, %v4935
    %v4937 = vmul.f32 %v66, %v4935
    %v4938 = vstv %s4933
    %v4939 = vmul.f32 %v68, %v4938
    %v4940 = vmul.f32 %v69, %v4938
    %v4941 = vadd.f32 %v4936, %v4939
    %v4942 = vadd.f32 %v4937, %v4940
    %v4943 = vstv %s4934
    %v4944 = vmul.f32 %v71, %v4943
    %v4945 = vmul.f32 %v72, %v4943
    %v4946 = vadd.f32 %v4941, %v4944
    %v4947 = vadd.f32 %v4942, %v4945
    %v4948 = vmul.f32 %v4946, 2.0
    %v4949 = vmul.f32 %v4947, 2.0
    %v4950 = vsub.f32 %v81, %v4948
    %v4951 = vsub.f32 %v82, %v4949
    %s4952 = smul.f32 %s4932, %s4932
    %s4953 = smul.f32 %s4933, %s4933
    %s4954 = sadd.f32 %s4952, %s4953
    %s4955 = smul.f32 %s4934, %s4934
    %s4956 = sadd.f32 %s4954, %s4955
    %v4957 = vstv %s4956
    %v4958 = vadd.f32 %v4950, %v4957
    %v4959 = vadd.f32 %v4951, %v4957
    %v4960 = vmax.f32 %v4958, 0.0
    %v4961 = vmax.f32 %v4959, 0.0
    %v4962 = vrsqrt.pop %v4960
    %v4963 = vmul.f32 %v4960, %v4962
    %vm4964 = vcmp.eq.f32.partialorder %v4960, inf
    %v4965 = vsel %vm4964, %v4960, %v4963
    %vm4966 = vcmp.eq.f32.partialorder %v4960, 0.0
    %v4967 = vand.u32 %v4960, 2147483648
    %v4968 = vsel %vm4966, %v4967, %v4965
    %v4969 = vrsqrt.pop %v4961
    %v4970 = vmul.f32 %v4961, %v4969
    %vm4971 = vcmp.eq.f32.partialorder %v4961, inf
    %v4972 = vsel %vm4971, %v4961, %v4970
    %vm4973 = vcmp.eq.f32.partialorder %v4961, 0.0
    %v4974 = vand.u32 %v4961, 2147483648
    %v4975 = vsel %vm4973, %v4974, %v4972
    %v4976 = vmul.f32 %v4968, 8.333333
    %v4977 = vmul.f32 %v4975, 8.333333
    %v4978 = vsub.f32 1.0, %v4976
    %v4979 = vsub.f32 1.0, %v4977
    %v4980 = vmax.f32 %v4978, 0.0
    %v4981 = vmax.f32 %v4979, 0.0
    %v4982 = vpack.c.bf16 %v4981, %v4980
    %v4984 = vcombine.high %v4982, %v4982
    %v4986 = vunpack.c.l.s4 1966171168
    %v4987 = vunpack.c.0.s8 %v4986
    %v4988 = vlaneseq
    %v4989 = vshrl.u32 %v4988, 7
    %v4990 = vsub.s32 %v4987, %v4989
    %v4991 = vrot.slane %v4982, %v4990
    %v4993 = vunpack.c.l.s4 1966171168
    %v4994 = vunpack.c.0.s8 %v4993
    %v4995 = vlaneseq
    %v4996 = vshrl.u32 %v4995, 7
    %v4997 = vsub.s32 %v4994, %v4996
    %v4998 = vrot.slane %v4984, %v4997
    %v4999 = vcombine.high %v4991, %v4991
    %v5000 = vcombine.high %v4998, %v4998
    %v5002 = vunpack.c.l.s4 1966171168
    %v5003 = vunpack.c.0.s8 %v5002
    %v5004 = vlaneseq
    %v5005 = vshrl.u32 %v5004, 7
    %v5006 = vsub.s32 %v5003, %v5005
    %v5007 = vrot.slane %v4991, %v5006
    %v5009 = vunpack.c.l.s4 1966171168
    %v5010 = vunpack.c.0.s8 %v5009
    %v5011 = vlaneseq
    %v5012 = vshrl.u32 %v5011, 7
    %v5013 = vsub.s32 %v5010, %v5012
    %v5014 = vrot.slane %v4998, %v5013
    %v5016 = vunpack.c.l.s4 1966171168
    %v5017 = vunpack.c.0.s8 %v5016
    %v5018 = vlaneseq
    %v5019 = vshrl.u32 %v5018, 7
    %v5020 = vsub.s32 %v5017, %v5019
    %v5021 = vrot.slane %v4999, %v5020
    %v5023 = vunpack.c.l.s4 1966171168
    %v5024 = vunpack.c.0.s8 %v5023
    %v5025 = vlaneseq
    %v5026 = vshrl.u32 %v5025, 7
    %v5027 = vsub.s32 %v5024, %v5026
    %v5028 = vrot.slane %v5000, %v5027
    %v5029 = vcombine.high %v5007, %v5007
    %v5030 = vcombine.high %v5014, %v5014
    %v5031 = vcombine.high %v5021, %v5021
    %v5032 = vcombine.high %v5028, %v5028
    %v5033 = vunpack.i.l.s16 %v5007
    %v5034 = vunpack.i.h.s16 %v5007
    %v5035 = vunpack.i.l.s16 %v5021
    %v5036 = vunpack.i.h.s16 %v5021
    %v5037 = vunpack.i.l.s16 %v5029
    %v5038 = vunpack.i.h.s16 %v5029
    %v5039 = vunpack.i.l.s16 %v5031
    %v5040 = vunpack.i.h.s16 %v5031
    %v5041 = vunpack.i.l.s16 %v5014
    %v5042 = vunpack.i.h.s16 %v5014
    %v5043 = vunpack.i.l.s16 %v5028
    %v5044 = vunpack.i.h.s16 %v5028
    %v5045 = vunpack.i.l.s16 %v5030
    %v5046 = vunpack.i.h.s16 %v5030
    %v5047 = vunpack.i.l.s16 %v5032
    %v5048 = vunpack.i.h.s16 %v5032
    %v5049 = vld [vmem:[#allocation7] sm:$0xf]
    %v5050 = vld [vmem:[#allocation7 + $0x4] sm:$0xf]
    %v5051 = vld [vmem:[#allocation7 + $0x8] sm:$0xf]
    %v5052 = vld [vmem:[#allocation7 + $0xc] sm:$0xf]
    %v5053 = vld [vmem:[#allocation7 + $0x10] sm:$0xf]
    %v5054 = vld [vmem:[#allocation7 + $0x14] sm:$0xf]
    %v5055 = vld [vmem:[#allocation7 + $0x18] sm:$0xf]
    %v5056 = vld [vmem:[#allocation7 + $0x1c] sm:$0xf]
    %v5057 = vld [vmem:[#allocation7 + $0x20] sm:$0xf]
    %v5058 = vld [vmem:[#allocation7 + $0x24] sm:$0xf]
    %v5059 = vld [vmem:[#allocation7 + $0x28] sm:$0xf]
    %v5060 = vld [vmem:[#allocation7 + $0x2c] sm:$0xf]
    %v5061 = vld [vmem:[#allocation7 + $0x30] sm:$0xf]
    %v5062 = vld [vmem:[#allocation7 + $0x34] sm:$0xf]
    %v5063 = vld [vmem:[#allocation7 + $0x38] sm:$0xf]
    %v5064 = vld [vmem:[#allocation7 + $0x3c] sm:$0xf]
    %v5065 = vpack.i.b16 %v5033, %v5033
    %v5066 = vpack.i.b16 %v5034, %v5034
    %v5067 = vpack.i.b16 %v5035, %v5035
    %v5068 = vpack.i.b16 %v5036, %v5036
    %v5069 = vpack.i.b16 %v5037, %v5037
    %v5070 = vpack.i.b16 %v5038, %v5038
    %v5071 = vpack.i.b16 %v5039, %v5039
    %v5072 = vpack.i.b16 %v5040, %v5040
    %v5073 = vpack.i.b16 %v5041, %v5041
    %v5074 = vpack.i.b16 %v5042, %v5042
    %v5075 = vpack.i.b16 %v5043, %v5043
    %v5076 = vpack.i.b16 %v5044, %v5044
    %v5077 = vpack.i.b16 %v5045, %v5045
    %v5078 = vpack.i.b16 %v5046, %v5046
    %v5079 = vpack.i.b16 %v5047, %v5047
    %v5080 = vpack.i.b16 %v5048, %v5048
    %v5081 = vlaneseq
    %v5082 = vshrl.u32 %v5081, 7
    %v5083 = vsub.s32 0, %v5082
    %v5084 = vrot.slane %v5065, %v5083
    %v5085 = vlaneseq
    %v5086 = vshrl.u32 %v5085, 7
    %v5087 = vsub.s32 0, %v5086
    %v5088 = vrot.slane %v5066, %v5087
    %v5089 = vlaneseq
    %v5090 = vshrl.u32 %v5089, 7
    %v5091 = vsub.s32 0, %v5090
    %v5092 = vrot.slane %v5067, %v5091
    %v5093 = vlaneseq
    %v5094 = vshrl.u32 %v5093, 7
    %v5095 = vsub.s32 0, %v5094
    %v5096 = vrot.slane %v5068, %v5095
    %v5097 = vlaneseq
    %v5098 = vshrl.u32 %v5097, 7
    %v5099 = vsub.s32 0, %v5098
    %v5100 = vrot.slane %v5069, %v5099
    %v5101 = vlaneseq
    %v5102 = vshrl.u32 %v5101, 7
    %v5103 = vsub.s32 0, %v5102
    %v5104 = vrot.slane %v5070, %v5103
    %v5105 = vlaneseq
    %v5106 = vshrl.u32 %v5105, 7
    %v5107 = vsub.s32 0, %v5106
    %v5108 = vrot.slane %v5071, %v5107
    %v5109 = vlaneseq
    %v5110 = vshrl.u32 %v5109, 7
    %v5111 = vsub.s32 0, %v5110
    %v5112 = vrot.slane %v5072, %v5111
    %v5113 = vlaneseq
    %v5114 = vshrl.u32 %v5113, 7
    %v5115 = vsub.s32 0, %v5114
    %v5116 = vrot.slane %v5073, %v5115
    %v5117 = vlaneseq
    %v5118 = vshrl.u32 %v5117, 7
    %v5119 = vsub.s32 0, %v5118
    %v5120 = vrot.slane %v5074, %v5119
    %v5121 = vlaneseq
    %v5122 = vshrl.u32 %v5121, 7
    %v5123 = vsub.s32 0, %v5122
    %v5124 = vrot.slane %v5075, %v5123
    %v5125 = vlaneseq
    %v5126 = vshrl.u32 %v5125, 7
    %v5127 = vsub.s32 0, %v5126
    %v5128 = vrot.slane %v5076, %v5127
    %v5129 = vlaneseq
    %v5130 = vshrl.u32 %v5129, 7
    %v5131 = vsub.s32 0, %v5130
    %v5132 = vrot.slane %v5077, %v5131
    %v5133 = vlaneseq
    %v5134 = vshrl.u32 %v5133, 7
    %v5135 = vsub.s32 0, %v5134
    %v5136 = vrot.slane %v5078, %v5135
    %v5137 = vlaneseq
    %v5138 = vshrl.u32 %v5137, 7
    %v5139 = vsub.s32 0, %v5138
    %v5140 = vrot.slane %v5079, %v5139
    %v5141 = vlaneseq
    %v5142 = vshrl.u32 %v5141, 7
    %v5143 = vsub.s32 0, %v5142
    %v5144 = vrot.slane %v5080, %v5143
    %v5146 = vpack.i.b16 %v5084, %v5084
    %v5148 = vlaneseq
    %v5149 = vshrl.u32 %v5148, 7
    %v5150 = vsub.s32 0, %v5149
    %v5151 = vrot.slane %v5146, %v5150
    %v5153 = vpack.i.b16 %v5088, %v5088
    %v5155 = vlaneseq
    %v5156 = vshrl.u32 %v5155, 7
    %v5157 = vsub.s32 0, %v5156
    %v5158 = vrot.slane %v5153, %v5157
    %v5160 = vpack.i.b16 %v5092, %v5092
    %v5162 = vlaneseq
    %v5163 = vshrl.u32 %v5162, 7
    %v5164 = vsub.s32 0, %v5163
    %v5165 = vrot.slane %v5160, %v5164
    %v5167 = vpack.i.b16 %v5096, %v5096
    %v5169 = vlaneseq
    %v5170 = vshrl.u32 %v5169, 7
    %v5171 = vsub.s32 0, %v5170
    %v5172 = vrot.slane %v5167, %v5171
    %v5174 = vpack.i.b16 %v5100, %v5100
    %v5176 = vlaneseq
    %v5177 = vshrl.u32 %v5176, 7
    %v5178 = vsub.s32 0, %v5177
    %v5179 = vrot.slane %v5174, %v5178
    %v5181 = vpack.i.b16 %v5104, %v5104
    %v5183 = vlaneseq
    %v5184 = vshrl.u32 %v5183, 7
    %v5185 = vsub.s32 0, %v5184
    %v5186 = vrot.slane %v5181, %v5185
    %v5188 = vpack.i.b16 %v5108, %v5108
    %v5190 = vlaneseq
    %v5191 = vshrl.u32 %v5190, 7
    %v5192 = vsub.s32 0, %v5191
    %v5193 = vrot.slane %v5188, %v5192
    %v5195 = vpack.i.b16 %v5112, %v5112
    %v5197 = vlaneseq
    %v5198 = vshrl.u32 %v5197, 7
    %v5199 = vsub.s32 0, %v5198
    %v5200 = vrot.slane %v5195, %v5199
    %v5202 = vpack.i.b16 %v5116, %v5116
    %v5204 = vlaneseq
    %v5205 = vshrl.u32 %v5204, 7
    %v5206 = vsub.s32 0, %v5205
    %v5207 = vrot.slane %v5202, %v5206
    %v5209 = vpack.i.b16 %v5120, %v5120
    %v5211 = vlaneseq
    %v5212 = vshrl.u32 %v5211, 7
    %v5213 = vsub.s32 0, %v5212
    %v5214 = vrot.slane %v5209, %v5213
    %v5216 = vpack.i.b16 %v5124, %v5124
    %v5218 = vlaneseq
    %v5219 = vshrl.u32 %v5218, 7
    %v5220 = vsub.s32 0, %v5219
    %v5221 = vrot.slane %v5216, %v5220
    %v5223 = vpack.i.b16 %v5128, %v5128
    %v5225 = vlaneseq
    %v5226 = vshrl.u32 %v5225, 7
    %v5227 = vsub.s32 0, %v5226
    %v5228 = vrot.slane %v5223, %v5227
    %v5230 = vpack.i.b16 %v5132, %v5132
    %v5232 = vlaneseq
    %v5233 = vshrl.u32 %v5232, 7
    %v5234 = vsub.s32 0, %v5233
    %v5235 = vrot.slane %v5230, %v5234
    %v5237 = vpack.i.b16 %v5136, %v5136
    %v5239 = vlaneseq
    %v5240 = vshrl.u32 %v5239, 7
    %v5241 = vsub.s32 0, %v5240
    %v5242 = vrot.slane %v5237, %v5241
    %v5244 = vpack.i.b16 %v5140, %v5140
    %v5246 = vlaneseq
    %v5247 = vshrl.u32 %v5246, 7
    %v5248 = vsub.s32 0, %v5247
    %v5249 = vrot.slane %v5244, %v5248
    %v5251 = vpack.i.b16 %v5144, %v5144
    %v5253 = vlaneseq
    %v5254 = vshrl.u32 %v5253, 7
    %v5255 = vsub.s32 0, %v5254
    %v5256 = vrot.slane %v5251, %v5255
    %v5257 = vmul.bf16 %v5151, %v5049
    %v5258 = vmul.bf16 %v5158, %v5050
    %v5259 = vmul.bf16 %v5165, %v5051
    %v5260 = vmul.bf16 %v5172, %v5052
    %v5261 = vmul.bf16 %v5179, %v5053
    %v5262 = vmul.bf16 %v5186, %v5054
    %v5263 = vmul.bf16 %v5193, %v5055
    %v5264 = vmul.bf16 %v5200, %v5056
    %v5265 = vmul.bf16 %v5207, %v5057
    %v5266 = vmul.bf16 %v5214, %v5058
    %v5267 = vmul.bf16 %v5221, %v5059
    %v5268 = vmul.bf16 %v5228, %v5060
    %v5269 = vmul.bf16 %v5235, %v5061
    %v5270 = vmul.bf16 %v5242, %v5062
    %v5271 = vmul.bf16 %v5249, %v5063
    %v5272 = vmul.bf16 %v5256, %v5064
    %v5273 = vunpack.c.l.bf16 %v5257
    %v5274 = vunpack.c.l.bf16 %v5258
    %v5275 = vunpack.c.l.bf16 %v5259
    %v5276 = vunpack.c.l.bf16 %v5260
    %v5277 = vunpack.c.l.bf16 %v5261
    %v5278 = vunpack.c.l.bf16 %v5262
    %v5279 = vunpack.c.l.bf16 %v5263
    %v5280 = vunpack.c.l.bf16 %v5264
    %v5281 = vunpack.c.l.bf16 %v5265
    %v5282 = vunpack.c.l.bf16 %v5266
    %v5283 = vunpack.c.l.bf16 %v5267
    %v5284 = vunpack.c.l.bf16 %v5268
    %v5285 = vunpack.c.l.bf16 %v5269
    %v5286 = vunpack.c.l.bf16 %v5270
    %v5287 = vunpack.c.l.bf16 %v5271
    %v5288 = vunpack.c.l.bf16 %v5272
    %v5289 = vadd.f32 %v5273, %v5274
    %v5290 = vadd.f32 %v5289, %v5275
    %v5291 = vadd.f32 %v5290, %v5276
    %v5292 = vadd.f32 %v5291, %v5277
    %v5293 = vadd.f32 %v5292, %v5278
    %v5294 = vadd.f32 %v5293, %v5279
    %v5295 = vadd.f32 %v5294, %v5280
    %v5296 = vadd.f32 %v5295, %v5281
    %v5297 = vadd.f32 %v5296, %v5282
    %v5298 = vadd.f32 %v5297, %v5283
    %v5299 = vadd.f32 %v5298, %v5284
    %v5300 = vadd.f32 %v5299, %v5285
    %v5301 = vadd.f32 %v5300, %v5286
    %v5302 = vadd.f32 %v5301, %v5287
    %v5303 = vadd.f32 %v5302, %v5288
    %5304 = vst [vmem:[#allocation2 + $0x68] sm:$0xff] %v5303
    %s5305 = sld [smem:[#allocation9 + $0x700]]
    %s5306 = sld [smem:[#allocation9 + $0x701]]
    %s5307 = sld [smem:[#allocation9 + $0x702]]
    %v5308 = vstv %s5305
    %v5309 = vmul.f32 %v65, %v5308
    %v5310 = vmul.f32 %v66, %v5308
    %v5311 = vstv %s5306
    %v5312 = vmul.f32 %v68, %v5311
    %v5313 = vmul.f32 %v69, %v5311
    %v5314 = vadd.f32 %v5309, %v5312
    %v5315 = vadd.f32 %v5310, %v5313
    %v5316 = vstv %s5307
    %v5317 = vmul.f32 %v71, %v5316
    %v5318 = vmul.f32 %v72, %v5316
    %v5319 = vadd.f32 %v5314, %v5317
    %v5320 = vadd.f32 %v5315, %v5318
    %v5321 = vmul.f32 %v5319, 2.0
    %v5322 = vmul.f32 %v5320, 2.0
    %v5323 = vsub.f32 %v81, %v5321
    %v5324 = vsub.f32 %v82, %v5322
    %s5325 = smul.f32 %s5305, %s5305
    %s5326 = smul.f32 %s5306, %s5306
    %s5327 = sadd.f32 %s5325, %s5326
    %s5328 = smul.f32 %s5307, %s5307
    %s5329 = sadd.f32 %s5327, %s5328
    %v5330 = vstv %s5329
    %v5331 = vadd.f32 %v5323, %v5330
    %v5332 = vadd.f32 %v5324, %v5330
    %v5333 = vmax.f32 %v5331, 0.0
    %v5334 = vmax.f32 %v5332, 0.0
    %v5335 = vrsqrt.pop %v5333
    %v5336 = vmul.f32 %v5333, %v5335
    %vm5337 = vcmp.eq.f32.partialorder %v5333, inf
    %v5338 = vsel %vm5337, %v5333, %v5336
    %vm5339 = vcmp.eq.f32.partialorder %v5333, 0.0
    %v5340 = vand.u32 %v5333, 2147483648
    %v5341 = vsel %vm5339, %v5340, %v5338
    %v5342 = vrsqrt.pop %v5334
    %v5343 = vmul.f32 %v5334, %v5342
    %vm5344 = vcmp.eq.f32.partialorder %v5334, inf
    %v5345 = vsel %vm5344, %v5334, %v5343
    %vm5346 = vcmp.eq.f32.partialorder %v5334, 0.0
    %v5347 = vand.u32 %v5334, 2147483648
    %v5348 = vsel %vm5346, %v5347, %v5345
    %v5349 = vmul.f32 %v5341, 8.333333
    %v5350 = vmul.f32 %v5348, 8.333333
    %v5351 = vsub.f32 1.0, %v5349
    %v5352 = vsub.f32 1.0, %v5350
    %v5353 = vmax.f32 %v5351, 0.0
    %v5354 = vmax.f32 %v5352, 0.0
    %v5355 = vpack.c.bf16 %v5354, %v5353
    %v5357 = vcombine.high %v5355, %v5355
    %v5359 = vunpack.c.l.s4 1966171168
    %v5360 = vunpack.c.0.s8 %v5359
    %v5361 = vlaneseq
    %v5362 = vshrl.u32 %v5361, 7
    %v5363 = vsub.s32 %v5360, %v5362
    %v5364 = vrot.slane %v5355, %v5363
    %v5366 = vunpack.c.l.s4 1966171168
    %v5367 = vunpack.c.0.s8 %v5366
    %v5368 = vlaneseq
    %v5369 = vshrl.u32 %v5368, 7
    %v5370 = vsub.s32 %v5367, %v5369
    %v5371 = vrot.slane %v5357, %v5370
    %v5372 = vcombine.high %v5364, %v5364
    %v5373 = vcombine.high %v5371, %v5371
    %v5375 = vunpack.c.l.s4 1966171168
    %v5376 = vunpack.c.0.s8 %v5375
    %v5377 = vlaneseq
    %v5378 = vshrl.u32 %v5377, 7
    %v5379 = vsub.s32 %v5376, %v5378
    %v5380 = vrot.slane %v5364, %v5379
    %v5382 = vunpack.c.l.s4 1966171168
    %v5383 = vunpack.c.0.s8 %v5382
    %v5384 = vlaneseq
    %v5385 = vshrl.u32 %v5384, 7
    %v5386 = vsub.s32 %v5383, %v5385
    %v5387 = vrot.slane %v5371, %v5386
    %v5389 = vunpack.c.l.s4 1966171168
    %v5390 = vunpack.c.0.s8 %v5389
    %v5391 = vlaneseq
    %v5392 = vshrl.u32 %v5391, 7
    %v5393 = vsub.s32 %v5390, %v5392
    %v5394 = vrot.slane %v5372, %v5393
    %v5396 = vunpack.c.l.s4 1966171168
    %v5397 = vunpack.c.0.s8 %v5396
    %v5398 = vlaneseq
    %v5399 = vshrl.u32 %v5398, 7
    %v5400 = vsub.s32 %v5397, %v5399
    %v5401 = vrot.slane %v5373, %v5400
    %v5402 = vcombine.high %v5380, %v5380
    %v5403 = vcombine.high %v5387, %v5387
    %v5404 = vcombine.high %v5394, %v5394
    %v5405 = vcombine.high %v5401, %v5401
    %v5406 = vunpack.i.l.s16 %v5380
    %v5407 = vunpack.i.h.s16 %v5380
    %v5408 = vunpack.i.l.s16 %v5394
    %v5409 = vunpack.i.h.s16 %v5394
    %v5410 = vunpack.i.l.s16 %v5402
    %v5411 = vunpack.i.h.s16 %v5402
    %v5412 = vunpack.i.l.s16 %v5404
    %v5413 = vunpack.i.h.s16 %v5404
    %v5414 = vunpack.i.l.s16 %v5387
    %v5415 = vunpack.i.h.s16 %v5387
    %v5416 = vunpack.i.l.s16 %v5401
    %v5417 = vunpack.i.h.s16 %v5401
    %v5418 = vunpack.i.l.s16 %v5403
    %v5419 = vunpack.i.h.s16 %v5403
    %v5420 = vunpack.i.l.s16 %v5405
    %v5421 = vunpack.i.h.s16 %v5405
    %v5422 = vld [vmem:[#allocation7] sm:$0xf]
    %v5423 = vld [vmem:[#allocation7 + $0x4] sm:$0xf]
    %v5424 = vld [vmem:[#allocation7 + $0x8] sm:$0xf]
    %v5425 = vld [vmem:[#allocation7 + $0xc] sm:$0xf]
    %v5426 = vld [vmem:[#allocation7 + $0x10] sm:$0xf]
    %v5427 = vld [vmem:[#allocation7 + $0x14] sm:$0xf]
    %v5428 = vld [vmem:[#allocation7 + $0x18] sm:$0xf]
    %v5429 = vld [vmem:[#allocation7 + $0x1c] sm:$0xf]
    %v5430 = vld [vmem:[#allocation7 + $0x20] sm:$0xf]
    %v5431 = vld [vmem:[#allocation7 + $0x24] sm:$0xf]
    %v5432 = vld [vmem:[#allocation7 + $0x28] sm:$0xf]
    %v5433 = vld [vmem:[#allocation7 + $0x2c] sm:$0xf]
    %v5434 = vld [vmem:[#allocation7 + $0x30] sm:$0xf]
    %v5435 = vld [vmem:[#allocation7 + $0x34] sm:$0xf]
    %v5436 = vld [vmem:[#allocation7 + $0x38] sm:$0xf]
    %v5437 = vld [vmem:[#allocation7 + $0x3c] sm:$0xf]
    %v5438 = vpack.i.b16 %v5406, %v5406
    %v5439 = vpack.i.b16 %v5407, %v5407
    %v5440 = vpack.i.b16 %v5408, %v5408
    %v5441 = vpack.i.b16 %v5409, %v5409
    %v5442 = vpack.i.b16 %v5410, %v5410
    %v5443 = vpack.i.b16 %v5411, %v5411
    %v5444 = vpack.i.b16 %v5412, %v5412
    %v5445 = vpack.i.b16 %v5413, %v5413
    %v5446 = vpack.i.b16 %v5414, %v5414
    %v5447 = vpack.i.b16 %v5415, %v5415
    %v5448 = vpack.i.b16 %v5416, %v5416
    %v5449 = vpack.i.b16 %v5417, %v5417
    %v5450 = vpack.i.b16 %v5418, %v5418
    %v5451 = vpack.i.b16 %v5419, %v5419
    %v5452 = vpack.i.b16 %v5420, %v5420
    %v5453 = vpack.i.b16 %v5421, %v5421
    %v5454 = vlaneseq
    %v5455 = vshrl.u32 %v5454, 7
    %v5456 = vsub.s32 0, %v5455
    %v5457 = vrot.slane %v5438, %v5456
    %v5458 = vlaneseq
    %v5459 = vshrl.u32 %v5458, 7
    %v5460 = vsub.s32 0, %v5459
    %v5461 = vrot.slane %v5439, %v5460
    %v5462 = vlaneseq
    %v5463 = vshrl.u32 %v5462, 7
    %v5464 = vsub.s32 0, %v5463
    %v5465 = vrot.slane %v5440, %v5464
    %v5466 = vlaneseq
    %v5467 = vshrl.u32 %v5466, 7
    %v5468 = vsub.s32 0, %v5467
    %v5469 = vrot.slane %v5441, %v5468
    %v5470 = vlaneseq
    %v5471 = vshrl.u32 %v5470, 7
    %v5472 = vsub.s32 0, %v5471
    %v5473 = vrot.slane %v5442, %v5472
    %v5474 = vlaneseq
    %v5475 = vshrl.u32 %v5474, 7
    %v5476 = vsub.s32 0, %v5475
    %v5477 = vrot.slane %v5443, %v5476
    %v5478 = vlaneseq
    %v5479 = vshrl.u32 %v5478, 7
    %v5480 = vsub.s32 0, %v5479
    %v5481 = vrot.slane %v5444, %v5480
    %v5482 = vlaneseq
    %v5483 = vshrl.u32 %v5482, 7
    %v5484 = vsub.s32 0, %v5483
    %v5485 = vrot.slane %v5445, %v5484
    %v5486 = vlaneseq
    %v5487 = vshrl.u32 %v5486, 7
    %v5488 = vsub.s32 0, %v5487
    %v5489 = vrot.slane %v5446, %v5488
    %v5490 = vlaneseq
    %v5491 = vshrl.u32 %v5490, 7
    %v5492 = vsub.s32 0, %v5491
    %v5493 = vrot.slane %v5447, %v5492
    %v5494 = vlaneseq
    %v5495 = vshrl.u32 %v5494, 7
    %v5496 = vsub.s32 0, %v5495
    %v5497 = vrot.slane %v5448, %v5496
    %v5498 = vlaneseq
    %v5499 = vshrl.u32 %v5498, 7
    %v5500 = vsub.s32 0, %v5499
    %v5501 = vrot.slane %v5449, %v5500
    %v5502 = vlaneseq
    %v5503 = vshrl.u32 %v5502, 7
    %v5504 = vsub.s32 0, %v5503
    %v5505 = vrot.slane %v5450, %v5504
    %v5506 = vlaneseq
    %v5507 = vshrl.u32 %v5506, 7
    %v5508 = vsub.s32 0, %v5507
    %v5509 = vrot.slane %v5451, %v5508
    %v5510 = vlaneseq
    %v5511 = vshrl.u32 %v5510, 7
    %v5512 = vsub.s32 0, %v5511
    %v5513 = vrot.slane %v5452, %v5512
    %v5514 = vlaneseq
    %v5515 = vshrl.u32 %v5514, 7
    %v5516 = vsub.s32 0, %v5515
    %v5517 = vrot.slane %v5453, %v5516
    %v5519 = vpack.i.b16 %v5457, %v5457
    %v5521 = vlaneseq
    %v5522 = vshrl.u32 %v5521, 7
    %v5523 = vsub.s32 0, %v5522
    %v5524 = vrot.slane %v5519, %v5523
    %v5526 = vpack.i.b16 %v5461, %v5461
    %v5528 = vlaneseq
    %v5529 = vshrl.u32 %v5528, 7
    %v5530 = vsub.s32 0, %v5529
    %v5531 = vrot.slane %v5526, %v5530
    %v5533 = vpack.i.b16 %v5465, %v5465
    %v5535 = vlaneseq
    %v5536 = vshrl.u32 %v5535, 7
    %v5537 = vsub.s32 0, %v5536
    %v5538 = vrot.slane %v5533, %v5537
    %v5540 = vpack.i.b16 %v5469, %v5469
    %v5542 = vlaneseq
    %v5543 = vshrl.u32 %v5542, 7
    %v5544 = vsub.s32 0, %v5543
    %v5545 = vrot.slane %v5540, %v5544
    %v5547 = vpack.i.b16 %v5473, %v5473
    %v5549 = vlaneseq
    %v5550 = vshrl.u32 %v5549, 7
    %v5551 = vsub.s32 0, %v5550
    %v5552 = vrot.slane %v5547, %v5551
    %v5554 = vpack.i.b16 %v5477, %v5477
    %v5556 = vlaneseq
    %v5557 = vshrl.u32 %v5556, 7
    %v5558 = vsub.s32 0, %v5557
    %v5559 = vrot.slane %v5554, %v5558
    %v5561 = vpack.i.b16 %v5481, %v5481
    %v5563 = vlaneseq
    %v5564 = vshrl.u32 %v5563, 7
    %v5565 = vsub.s32 0, %v5564
    %v5566 = vrot.slane %v5561, %v5565
    %v5568 = vpack.i.b16 %v5485, %v5485
    %v5570 = vlaneseq
    %v5571 = vshrl.u32 %v5570, 7
    %v5572 = vsub.s32 0, %v5571
    %v5573 = vrot.slane %v5568, %v5572
    %v5575 = vpack.i.b16 %v5489, %v5489
    %v5577 = vlaneseq
    %v5578 = vshrl.u32 %v5577, 7
    %v5579 = vsub.s32 0, %v5578
    %v5580 = vrot.slane %v5575, %v5579
    %v5582 = vpack.i.b16 %v5493, %v5493
    %v5584 = vlaneseq
    %v5585 = vshrl.u32 %v5584, 7
    %v5586 = vsub.s32 0, %v5585
    %v5587 = vrot.slane %v5582, %v5586
    %v5589 = vpack.i.b16 %v5497, %v5497
    %v5591 = vlaneseq
    %v5592 = vshrl.u32 %v5591, 7
    %v5593 = vsub.s32 0, %v5592
    %v5594 = vrot.slane %v5589, %v5593
    %v5596 = vpack.i.b16 %v5501, %v5501
    %v5598 = vlaneseq
    %v5599 = vshrl.u32 %v5598, 7
    %v5600 = vsub.s32 0, %v5599
    %v5601 = vrot.slane %v5596, %v5600
    %v5603 = vpack.i.b16 %v5505, %v5505
    %v5605 = vlaneseq
    %v5606 = vshrl.u32 %v5605, 7
    %v5607 = vsub.s32 0, %v5606
    %v5608 = vrot.slane %v5603, %v5607
    %v5610 = vpack.i.b16 %v5509, %v5509
    %v5612 = vlaneseq
    %v5613 = vshrl.u32 %v5612, 7
    %v5614 = vsub.s32 0, %v5613
    %v5615 = vrot.slane %v5610, %v5614
    %v5617 = vpack.i.b16 %v5513, %v5513
    %v5619 = vlaneseq
    %v5620 = vshrl.u32 %v5619, 7
    %v5621 = vsub.s32 0, %v5620
    %v5622 = vrot.slane %v5617, %v5621
    %v5624 = vpack.i.b16 %v5517, %v5517
    %v5626 = vlaneseq
    %v5627 = vshrl.u32 %v5626, 7
    %v5628 = vsub.s32 0, %v5627
    %v5629 = vrot.slane %v5624, %v5628
    %v5630 = vmul.bf16 %v5524, %v5422
    %v5631 = vmul.bf16 %v5531, %v5423
    %v5632 = vmul.bf16 %v5538, %v5424
    %v5633 = vmul.bf16 %v5545, %v5425
    %v5634 = vmul.bf16 %v5552, %v5426
    %v5635 = vmul.bf16 %v5559, %v5427
    %v5636 = vmul.bf16 %v5566, %v5428
    %v5637 = vmul.bf16 %v5573, %v5429
    %v5638 = vmul.bf16 %v5580, %v5430
    %v5639 = vmul.bf16 %v5587, %v5431
    %v5640 = vmul.bf16 %v5594, %v5432
    %v5641 = vmul.bf16 %v5601, %v5433
    %v5642 = vmul.bf16 %v5608, %v5434
    %v5643 = vmul.bf16 %v5615, %v5435
    %v5644 = vmul.bf16 %v5622, %v5436
    %v5645 = vmul.bf16 %v5629, %v5437
    %v5646 = vunpack.c.l.bf16 %v5630
    %v5647 = vunpack.c.l.bf16 %v5631
    %v5648 = vunpack.c.l.bf16 %v5632
    %v5649 = vunpack.c.l.bf16 %v5633
    %v5650 = vunpack.c.l.bf16 %v5634
    %v5651 = vunpack.c.l.bf16 %v5635
    %v5652 = vunpack.c.l.bf16 %v5636
    %v5653 = vunpack.c.l.bf16 %v5637
    %v5654 = vunpack.c.l.bf16 %v5638
    %v5655 = vunpack.c.l.bf16 %v5639
    %v5656 = vunpack.c.l.bf16 %v5640
    %v5657 = vunpack.c.l.bf16 %v5641
    %v5658 = vunpack.c.l.bf16 %v5642
    %v5659 = vunpack.c.l.bf16 %v5643
    %v5660 = vunpack.c.l.bf16 %v5644
    %v5661 = vunpack.c.l.bf16 %v5645
    %v5662 = vadd.f32 %v5646, %v5647
    %v5663 = vadd.f32 %v5662, %v5648
    %v5664 = vadd.f32 %v5663, %v5649
    %v5665 = vadd.f32 %v5664, %v5650
    %v5666 = vadd.f32 %v5665, %v5651
    %v5667 = vadd.f32 %v5666, %v5652
    %v5668 = vadd.f32 %v5667, %v5653
    %v5669 = vadd.f32 %v5668, %v5654
    %v5670 = vadd.f32 %v5669, %v5655
    %v5671 = vadd.f32 %v5670, %v5656
    %v5672 = vadd.f32 %v5671, %v5657
    %v5673 = vadd.f32 %v5672, %v5658
    %v5674 = vadd.f32 %v5673, %v5659
    %v5675 = vadd.f32 %v5674, %v5660
    %v5676 = vadd.f32 %v5675, %v5661
    %5677 = vst [vmem:[#allocation2 + $0x70] sm:$0xff] %v5676
    %v5678 = vld [vmem:[%s3] sm:$0xf]
    %v5679 = vld [vmem:[#allocation2] sm:$0xff]
    %v5680 = vld [vmem:[#allocation2 + $0x8] sm:$0xff]
    %v5681 = vld [vmem:[#allocation2 + $0x10] sm:$0xff]
    %v5682 = vld [vmem:[#allocation2 + $0x18] sm:$0xff]
    %v5683 = vld [vmem:[#allocation2 + $0x20] sm:$0xff]
    %v5684 = vld [vmem:[#allocation2 + $0x28] sm:$0xff]
    %v5685 = vld [vmem:[#allocation2 + $0x30] sm:$0xff]
    %v5686 = vld [vmem:[#allocation2 + $0x38] sm:$0xff]
    %v5687 = vld [vmem:[#allocation2 + $0x40] sm:$0xff]
    %v5688 = vld [vmem:[#allocation2 + $0x48] sm:$0xff]
    %v5689 = vld [vmem:[#allocation2 + $0x50] sm:$0xff]
    %v5690 = vld [vmem:[#allocation2 + $0x58] sm:$0xff]
    %v5691 = vld [vmem:[#allocation2 + $0x60] sm:$0xff]
    %v5692 = vld [vmem:[#allocation2 + $0x68] sm:$0xff]
    %v5693 = vld [vmem:[#allocation2 + $0x70] sm:$0xff]
    %v5694 = vpack.c.bf16 %v5680, %v5679
    %v5695 = vpack.c.bf16 %v5682, %v5681
    %v5696 = vpack.c.bf16 %v5684, %v5683
    %v5697 = vpack.c.bf16 %v5686, %v5685
    %v5698 = vpack.c.bf16 %v5688, %v5687
    %v5699 = vpack.c.bf16 %v5690, %v5689
    %v5700 = vpack.c.bf16 %v5692, %v5691
    %v5701 = vpack.c.bf16 %v5693, %v5693
    %v5702 = vld [vmem:[%s4] sm:$0xff]
    %5704 = vset.pattern.permute.xlu0 0
    %5705 = vperm.xlu0 %5704, %v5702
    %v5706 = vpop.permute.xlu0 %5705
    %vm5708 = vcmask 982016
    %v5710 = vsel %vm5708, %v5678, 0
    %vm5712 = vcmask 1043456
    %v5714 = vsel %vm5712, %v5701, 0
    %5716 = vmatprep.subr.bf16.mxu0 0
    %5717 = vmatpush1.bf16.msra.mxu0 %v5694
    %5718 = vmatprep.subr.bf16.mxu0 0
    %5719 = vmatpush1.bf16.msra.mxu0 %v5695
    %5720 = vmatprep.subr.bf16.mxu0 0
    %5721 = vmatpush1.bf16.msra.mxu0 %v5696
    %5722 = vmatprep.subr.bf16.mxu0 0
    %5723 = vmatpush1.bf16.msra.mxu0 %v5697
    %5724 = vmatprep.subr.bf16.mxu0 0
    %5725 = vmatpush1.bf16.msra.mxu0 %v5698
    %5726 = vmatprep.subr.bf16.mxu0 0
    %5727 = vmatpush1.bf16.msra.mxu0 %v5699
    %5728 = vmatprep.subr.bf16.mxu0 0
    %5729 = vmatpush1.bf16.msra.mxu0 %v5700
    %5730 = vmatprep.subr.bf16.mxu0 0
    %5731 = vmatpush1.bf16.msra.mxu0 %v5714
    %5732 = vmatprep.subr.bf16.mxu0 0
    %5733 = vmatpush1.bf16.msra.mxu0 0
    %5734 = vmatprep.subr.bf16.mxu0 0
    %5735 = vmatpush1.bf16.msra.mxu0 0
    %5736 = vmatprep.subr.bf16.mxu0 0
    %5737 = vmatpush1.bf16.msra.mxu0 0
    %5738 = vmatprep.subr.bf16.mxu0 0
    %5739 = vmatpush1.bf16.msra.mxu0 0
    %5740 = vmatprep.subr.bf16.mxu0 0
    %5741 = vmatpush1.bf16.msra.mxu0 0
    %5742 = vmatprep.subr.bf16.mxu0 0
    %5743 = vmatpush1.bf16.msra.mxu0 0
    %5744 = vmatprep.subr.bf16.mxu0 0
    %5745 = vmatpush1.bf16.msra.mxu0 0
    %5746 = vmatprep.subr.bf16.mxu0 0
    %5747 = vmatpush1.bf16.msra.mxu0 0
    %5748 = vmatprep.mubr.bf16.mxu0 0
    %5749 = vmatmul.mubr.bf16.gmra.mrb[0].mxu0 %v5710
    %v5750 = vpop.f32.mrb[0].mxu0
    %v5751 = vadd.f32 %v5706, %v5750
    %v5752 = vpop.f32.mrb[0].mxu0
    %v5753 = vpop.f32.mrb[0].mxu0
    %v5754 = vpop.f32.mrb[0].mxu0
    %5755 = vdwg.mxu0
    %vm5756 = vcmp.gt.f32.partialorder %v5751, 0.0
    %v5757 = vmul.f32 %v5751, 0.1
    %v5758 = vsel %vm5756, %v5751, %v5757
    %5759 = vst [vmem:[#allocation10] sm:$0xff] %v5758
    // Predicated region
    $region34: #{tpu_custom_call.1} parent=1 // pred_check
      _
    $region35: #{tpu_custom_call.1} parent=1 // pred_check_branch
      %5761 = sbr.rel (0) target = $region37
    $region36: #{tpu_custom_call.1} parent=1 // pred_region
      %s5763 = ssub.s32 128, 128
      %5764 = vsyncadd [#allocation5], %s5763
      %s5766 = sshll.u32 [#allocation10], 4
      %s5767 = int_to_ptr.vmem [resolvable:$true] %s5766
      %5769 = dma.vmem_to_hbm [thread:$0]  %s5767, 128, %s5, [#allocation5]
    $region37: #{tpu_custom_call.1} parent=1 // pred_fallthru
      _
    // Predicated region
    $region38: #{tpu_custom_call.1} parent=1 // pred_check
      _
    $region39: #{tpu_custom_call.1} parent=1 // pred_check_branch
      %5771 = sbr.rel (0) target = $region41
    $region40: #{tpu_custom_call.1} parent=1 // pred_region
      %5772 = dma.done [#allocation5], 128
    $region41: #{tpu_custom_call.1} parent=1 // pred_fallthru
      _
    %5773 = vsyncpa [#allocation4], 1
    %5774 = vsyncpa [#allocation8], 1
    %5775 = vsyncpa [#allocation5], 1
    %5776 = vsyncpa [#allocation6], 1

</llo_original>
